<compile_context>
chip_gen: v5e
topology: v5e:2x2
jax: 0.10.0
libtpu: 0.0.40
codegen_flags: <defaults>
</compile_context>

<pallas_src>
import functools

import jax
import jax.numpy as jnp
from jax.experimental import pallas as pl
from jax.experimental.pallas import tpu as pltpu

VOCAB_SIZE = 15000
EMBED_DIM = 64
CONV_CH = 64
HIDDEN = 128
NUM_CLASS = 2
KERNEL = 15
STRIDE = 7
OUT_PAD = 128            # logits padded to a full 128-lane store


def _conv_out_len(n):
    return (n - KERNEL) // STRIDE + 1


def gcnn_kernel(xu_ref, wc1_ref, bc1_ref, wc2_ref, bc2_ref,
                w1_ref, b1_ref, w2_ref, b2_ref, out_ref, h1_ref,
                *, bt, l2, c):
    """One batch tile (bt elements) per grid step.

    xu_ref : (l1*bt, K*D)   bf16  im2col'd conv-1 input, position-major (row = pos*bt + b)
    wc1    : (K*D, 2C)      bf16  fused [A|B] conv-1 weight
    wc2    : (K*C, 2C)      bf16  fused [A|B] conv-2 weight
    bc*    : (1, 2C)        f32   fused conv biases
    w1, b1 : (C, H) bf16, (1, H) f32   linear 1
    w2, b2 : (H, 128) bf16, (1, 128) f32   linear 2, zero-padded to 128 out lanes
    out    : (bt, 128)      f32   padded logits
    h1_ref : (l1*bt, C)     bf16  VMEM scratch, gated conv-1 output, position-major
    """
    # ---- gated conv 1: single fused MXU matmul over the unfolded input ----
    ab1 = jnp.dot(xu_ref[...], wc1_ref[...],
                  preferred_element_type=jnp.float32) + bc1_ref[...]     # (l1*bt, 2C)
    h1_ref[...] = (ab1[:, :c] * jax.nn.sigmoid(ab1[:, c:])).astype(jnp.bfloat16)

    # ---- gated conv 2: contiguous window slices (position-major scratch), all L2
    #      output positions stacked along M -> one 960-deep MXU matmul ----
    wins = []
    for t in range(l2):
        win = jnp.concatenate(
            [h1_ref[pl.ds((t * STRIDE + k) * bt, bt), :] for k in range(KERNEL)],
            axis=-1)                                                     # (bt, K*C) bf16
        wins.append(win)
    lhs2 = jnp.concatenate(wins, axis=0)                                 # (l2*bt, K*C)
    ab2 = jnp.dot(lhs2, wc2_ref[...],
                  preferred_element_type=jnp.float32) + bc2_ref[...]     # (l2*bt, 2C)
    h2 = ab2[:, :c] * jax.nn.sigmoid(ab2[:, c:])                         # (l2*bt, C)
    pooled = jnp.sum(h2.reshape(l2, bt, c), axis=0) * (1.0 / l2)         # (bt, C) mean pool

    # ---- MLP head: bf16 operands, f32 accumulation, lane-dense 128-wide output ----
    z1 = jnp.dot(pooled.astype(jnp.bfloat16), w1_ref[...],
                 preferred_element_type=jnp.float32) + b1_ref[...]
    logits = jnp.dot(z1.astype(jnp.bfloat16), w2_ref[...],
                     preferred_element_type=jnp.float32) + b2_ref[...]
    out_ref[...] = logits.astype(out_ref.dtype)


def gcnn_forward(word_index, params, block_b=8):
    """Glue: embedding gather, position-major im2col, weight fusion, one pallas_call."""
    B, L = word_index.shape
    D = params["emb"].shape[1]
    C = params["wA1"].shape[0]
    H = params["w1"].shape[0]
    K = KERNEL
    L1 = _conv_out_len(L)
    L2 = _conv_out_len(L1)
    assert L2 >= 1, "sequence too short for two stride-7 convs"
    # conv-2 windows stay inside the conv-1 output by construction of L2
    assert (L2 - 1) * STRIDE + K <= L1

    Bt = min(block_b, B)
    Bt = max(8, (Bt // 8) * 8)          # multiple of 8 -> sublane-aligned row counts
    # v7x: keep Bp//Bt >= 2 so the "parallel" axis spans both TensorCores.
    # v5e/v6e: a larger block_b (32-64) amortizes per-step overhead / feeds the MXU.
    Bp = pl.cdiv(B, Bt) * Bt
    n_tiles = Bp // Bt

    # Embedding lookup + im2col stay in plain JAX glue (bf16 before im2col so the
    # XLA-side gather/unfold traffic is already halved).
    # TODO(synk): fuse the embedding gather into the kernel (scalar-prefetch word
    # indices + DMA-gather rows from the HBM table) to remove the ~2.1x im2col
    # inflation of activation HBM traffic (largest relative win on v5e).
    x = jnp.take(params["emb"], word_index, axis=0).astype(jnp.bfloat16)   # (B, L, D)
    gather = jnp.arange(L1)[:, None] * STRIDE + jnp.arange(K)[None, :]     # (L1, K)
    xu = x[:, gather, :].reshape(B, L1, K * D)                             # (B, L1, K*D)
    xu = jnp.pad(xu, ((0, Bp - B), (0, 0), (0, 0)))
    # Position-major per batch tile: row = pos*Bt + b, so conv-2 window reads in the
    # kernel are contiguous Bt-row slices.
    xu = xu.reshape(n_tiles, Bt, L1, K * D).transpose(0, 2, 1, 3)
    xu = xu.reshape(n_tiles * L1 * Bt, K * D)

    def conv_flat(w):    # (C_out, C_in, K) -> (K*C_in, C_out), matches im2col order
        return jnp.transpose(w, (2, 1, 0)).reshape(-1, w.shape[0])

    wc1 = jnp.concatenate([conv_flat(params["wA1"]), conv_flat(params["wB1"])],
                          axis=1).astype(jnp.bfloat16)                     # (K*D, 2C)
    bc1 = jnp.concatenate([params["bA1"], params["bB1"]]).reshape(1, -1).astype(jnp.float32)
    wc2 = jnp.concatenate([conv_flat(params["wA2"]), conv_flat(params["wB2"])],
                          axis=1).astype(jnp.bfloat16)                     # (K*C, 2C)
    bc2 = jnp.concatenate([params["bA2"], params["bB2"]]).reshape(1, -1).astype(jnp.float32)

    w1t = params["w1"].T.astype(jnp.bfloat16)                              # (C, H)
    b1 = params["b1"].reshape(1, -1).astype(jnp.float32)                   # (1, H)
    w2t = jnp.zeros((H, OUT_PAD), jnp.float32).at[:, :NUM_CLASS].set(
        params["w2"].T).astype(jnp.bfloat16)                               # (H, 128)
    b2 = jnp.zeros((1, OUT_PAD), jnp.float32).at[0, :NUM_CLASS].set(params["b2"])

    def full(arr):       # whole array resident every grid step
        return pl.BlockSpec(arr.shape, lambda i: (0,) * arr.ndim)

    kern = functools.partial(gcnn_kernel, bt=Bt, l2=L2, c=C)
    out = pl.pallas_call(
        kern,
        out_shape=jax.ShapeDtypeStruct((Bp, OUT_PAD), jnp.float32),
        grid=(n_tiles,),
        in_specs=[
            pl.BlockSpec((L1 * Bt, K * D), lambda i: (i, 0)),              # xu batch tile
            full(wc1), full(bc1), full(wc2), full(bc2),
            full(w1t), full(b1), full(w2t), full(b2),
        ],
        out_specs=pl.BlockSpec((Bt, OUT_PAD), lambda i: (i, 0)),
        scratch_shapes=[pltpu.VMEM((L1 * Bt, C), jnp.bfloat16)],
        compiler_params=pltpu.CompilerParams(dimension_semantics=("parallel",)),
    )(xu, wc1, bc1, wc2, bc2, w1t, b1, w2t, b2)
    return out[:B, :NUM_CLASS]


def reference_forward(word_index, p):
    """Pure-JAX reference mirroring the PyTorch forward (NCL conv layout, f32)."""
    x = jnp.take(p["emb"], word_index, axis=0)          # (B, L, D)
    x = jnp.transpose(x, (0, 2, 1))                     # (B, D, L) == NCL

    def conv1d(inp, w, b):
        y = jax.lax.conv_general_dilated(
            inp, w, window_strides=(STRIDE,), padding="VALID",
            dimension_numbers=("NCH", "OIH", "NCH"))
        return y + b[None, :, None]

    A = conv1d(x, p["wA1"], p["bA1"])
    Bv = conv1d(x, p["wB1"], p["bB1"])
    Hh = A * jax.nn.sigmoid(Bv)
    A = conv1d(Hh, p["wA2"], p["bA2"])
    Bv = conv1d(Hh, p["wB2"], p["bB2"])
    Hh = A * jax.nn.sigmoid(Bv)
    pooled = jnp.mean(Hh, axis=-1)
    z1 = pooled @ p["w1"].T + p["b1"]
    return z1 @ p["w2"].T + p["b2"]


def init_params(key):
    """Deterministic synthetic init mimicking the PyTorch module's shapes."""
    ks = jax.random.split(key, 13)

    def uni(k, shape, limit):
        return jax.random.uniform(k, shape, jnp.float32, -limit, limit)

    emb_lim = (6.0 / (VOCAB_SIZE + EMBED_DIM)) ** 0.5        # xavier_uniform
    c1_lim = 1.0 / (EMBED_DIM * KERNEL) ** 0.5
    c2_lim = 1.0 / (CONV_CH * KERNEL) ** 0.5
    l1_lim = 1.0 / CONV_CH ** 0.5
    l2_lim = 1.0 / HIDDEN ** 0.5
    return dict(
        emb=uni(ks[0], (VOCAB_SIZE, EMBED_DIM), emb_lim),
        wA1=uni(ks[1], (CONV_CH, EMBED_DIM, KERNEL), c1_lim),
        bA1=uni(ks[2], (CONV_CH,), c1_lim),
        wB1=uni(ks[3], (CONV_CH, EMBED_DIM, KERNEL), c1_lim),
        bB1=uni(ks[4], (CONV_CH,), c1_lim),
        wA2=uni(ks[5], (CONV_CH, CONV_CH, KERNEL), c2_lim),
        bA2=uni(ks[6], (CONV_CH,), c2_lim),
        wB2=uni(ks[7], (CONV_CH, CONV_CH, KERNEL), c2_lim),
        bB2=uni(ks[8], (CONV_CH,), c2_lim),
        w1=uni(ks[9], (HIDDEN, CONV_CH), l1_lim),
        b1=uni(ks[10], (HIDDEN,), l1_lim),
        w2=uni(ks[11], (NUM_CLASS, HIDDEN), l2_lim),
        b2=uni(ks[12], (NUM_CLASS,), l2_lim),
    )


if __name__ == "__main__":
    key = jax.random.PRNGKey(0)
    pkey, dkey = jax.random.split(key)
    params = init_params(pkey)

    # Small shapes: batch=16 (two batch tiles of 8 -> 2 grid steps), seq_len=230
    # -> conv1 length 31 -> conv2 length 3.
    B, L = 16, 230
    word_index = jax.random.randint(dkey, (B, L), 0, VOCAB_SIZE, dtype=jnp.int32)

    logits = gcnn_forward(word_index, params)
    logits = jax.block_until_ready(logits)

    ref = reference_forward(word_index, params)
    assert logits.shape == (B, NUM_CLASS), logits.shape
    assert jnp.all(jnp.isfinite(logits))
    # bf16 matmul inputs / bf16 h1 scratch (f32 accumulation) -> slightly looser
    # tolerance than pure f32.
    assert jnp.allclose(logits, ref, atol=2e-3, rtol=2e-2), (logits, ref)
    print("KERNEL_OK")
</pallas_src>

<mosaic_0001>
module attributes {stable_mosaic.version = 11 : i64} {
  func.func @gcnn_kernel(%arg0: i32, %arg1: memref<248x960xbf16, #tpu.memory_space<vmem>>, %arg2: memref<960x128xbf16, #tpu.memory_space<vmem>>, %arg3: memref<1x128xf32, #tpu.memory_space<vmem>>, %arg4: memref<960x128xbf16, #tpu.memory_space<vmem>>, %arg5: memref<1x128xf32, #tpu.memory_space<vmem>>, %arg6: memref<64x128xbf16, #tpu.memory_space<vmem>>, %arg7: memref<1x128xf32, #tpu.memory_space<vmem>>, %arg8: memref<128x128xbf16, #tpu.memory_space<vmem>>, %arg9: memref<1x128xf32, #tpu.memory_space<vmem>>, %arg10: memref<8x128xf32, #tpu.memory_space<vmem>>, %arg11: memref<248x64xbf16, #tpu.memory_space<vmem>>) attributes {dimension_semantics = [#tpu.dimension_semantics<parallel>], iteration_bounds = array<i64: 2>, scalar_prefetch = 0 : i64, scratch_operands = 1 : i64, tpu.core_type = #tpu.core_type<tc>, window_params = [{transform_indices = @transform_0, window_bounds = array<i64: 248, 960>}, {pipeline_mode = #tpu.pipeline_mode<synchronous>, transform_indices = @transform_1, window_bounds = array<i64: 960, 128>}, {pipeline_mode = #tpu.pipeline_mode<synchronous>, transform_indices = @transform_2, window_bounds = array<i64: 1, 128>}, {pipeline_mode = #tpu.pipeline_mode<synchronous>, transform_indices = @transform_3, window_bounds = array<i64: 960, 128>}, {pipeline_mode = #tpu.pipeline_mode<synchronous>, transform_indices = @transform_4, window_bounds = array<i64: 1, 128>}, {pipeline_mode = #tpu.pipeline_mode<synchronous>, transform_indices = @transform_5, window_bounds = array<i64: 64, 128>}, {pipeline_mode = #tpu.pipeline_mode<synchronous>, transform_indices = @transform_6, window_bounds = array<i64: 1, 128>}, {pipeline_mode = #tpu.pipeline_mode<synchronous>, transform_indices = @transform_7, window_bounds = array<i64: 128, 128>}, {pipeline_mode = #tpu.pipeline_mode<synchronous>, transform_indices = @transform_8, window_bounds = array<i64: 1, 128>}, {transform_indices = @transform_9, window_bounds = array<i64: 8, 128>}]} {
    %c0 = arith.constant 0 : index
    %c0_0 = arith.constant 0 : index
    %0 = vector.load %arg1[%c0, %c0_0] : memref<248x960xbf16, #tpu.memory_space<vmem>>, vector<248x960xbf16>
    %c0_1 = arith.constant 0 : index
    %c0_2 = arith.constant 0 : index
    %1 = vector.load %arg2[%c0_1, %c0_2] : memref<960x128xbf16, #tpu.memory_space<vmem>>, vector<960x128xbf16>
    %cst = arith.constant dense<0.000000e+00> : vector<248x128xf32>
    %2 = tpu.matmul %0, %1, %cst {dimension_numbers = #tpu.dot_dimension_numbers<[1], [0], [0], [1], [0, 0, 1, 1], [], []>} : vector<248x960xbf16>, vector<960x128xbf16>, vector<248x128xf32> -> vector<248x128xf32>
    %c0_3 = arith.constant 0 : index
    %c0_4 = arith.constant 0 : index
    %3 = vector.load %arg3[%c0_3, %c0_4] : memref<1x128xf32, #tpu.memory_space<vmem>>, vector<1x128xf32>
    %4 = vector.broadcast %3 : vector<1x128xf32> to vector<248x128xf32>
    %5 = arith.addf %2, %4 : vector<248x128xf32>
    %6 = vector.extract_strided_slice %5 {offsets = [0, 0], sizes = [248, 64], strides = [1, 1]} : vector<248x128xf32> to vector<248x64xf32>
    %7 = vector.extract_strided_slice %5 {offsets = [0, 64], sizes = [248, 64], strides = [1, 1]} : vector<248x128xf32> to vector<248x64xf32>
    %8 = arith.negf %7 : vector<248x64xf32>
    %9 = math.exp %8 : vector<248x64xf32>
    %cst_5 = arith.constant 1.000000e+00 : f32
    %10 = vector.broadcast %cst_5 : f32 to vector<248x64xf32>
    %11 = arith.addf %10, %9 : vector<248x64xf32>
    %12 = arith.divf %10, %11 : vector<248x64xf32>
    %13 = arith.mulf %6, %12 : vector<248x64xf32>
    %14 = arith.truncf %13 : vector<248x64xf32> to vector<248x64xbf16>
    %c0_6 = arith.constant 0 : index
    %c0_7 = arith.constant 0 : index
    %15 = vector.load %arg11[%c0_6, %c0_7] : memref<248x64xbf16, #tpu.memory_space<vmem>>, vector<248x64xbf16>
    tpu.vector_store %arg11[%c0_6, %c0_7], %14 {strides = array<i32>} : memref<248x64xbf16, #tpu.memory_space<vmem>>, vector<248x64xbf16>,
    %c0_8 = arith.constant 0 : index
    %c0_9 = arith.constant 0 : index
    %16 = vector.load %arg11[%c0_8, %c0_9] : memref<248x64xbf16, #tpu.memory_space<vmem>>, vector<8x64xbf16>
    %c8 = arith.constant 8 : index
    %c0_10 = arith.constant 0 : index
    %17 = vector.load %arg11[%c8, %c0_10] : memref<248x64xbf16, #tpu.memory_space<vmem>>, vector<8x64xbf16>
    %c16 = arith.constant 16 : index
    %c0_11 = arith.constant 0 : index
    %18 = vector.load %arg11[%c16, %c0_11] : memref<248x64xbf16, #tpu.memory_space<vmem>>, vector<8x64xbf16>
    %c24 = arith.constant 24 : index
    %c0_12 = arith.constant 0 : index
    %19 = vector.load %arg11[%c24, %c0_12] : memref<248x64xbf16, #tpu.memory_space<vmem>>, vector<8x64xbf16>
    %c32 = arith.constant 32 : index
    %c0_13 = arith.constant 0 : index
    %20 = vector.load %arg11[%c32, %c0_13] : memref<248x64xbf16, #tpu.memory_space<vmem>>, vector<8x64xbf16>
    %c40 = arith.constant 40 : index
    %c0_14 = arith.constant 0 : index
    %21 = vector.load %arg11[%c40, %c0_14] : memref<248x64xbf16, #tpu.memory_space<vmem>>, vector<8x64xbf16>
    %c48 = arith.constant 48 : index
    %c0_15 = arith.constant 0 : index
    %22 = vector.load %arg11[%c48, %c0_15] : memref<248x64xbf16, #tpu.memory_space<vmem>>, vector<8x64xbf16>
    %c56 = arith.constant 56 : index
    %c0_16 = arith.constant 0 : index
    %23 = vector.load %arg11[%c56, %c0_16] : memref<248x64xbf16, #tpu.memory_space<vmem>>, vector<8x64xbf16>
    %c64 = arith.constant 64 : index
    %c0_17 = arith.constant 0 : index
    %24 = vector.load %arg11[%c64, %c0_17] : memref<248x64xbf16, #tpu.memory_space<vmem>>, vector<8x64xbf16>
    %c72 = arith.constant 72 : index
    %c0_18 = arith.constant 0 : index
    %25 = vector.load %arg11[%c72, %c0_18] : memref<248x64xbf16, #tpu.memory_space<vmem>>, vector<8x64xbf16>
    %c80 = arith.constant 80 : index
    %c0_19 = arith.constant 0 : index
    %26 = vector.load %arg11[%c80, %c0_19] : memref<248x64xbf16, #tpu.memory_space<vmem>>, vector<8x64xbf16>
    %c88 = arith.constant 88 : index
    %c0_20 = arith.constant 0 : index
    %27 = vector.load %arg11[%c88, %c0_20] : memref<248x64xbf16, #tpu.memory_space<vmem>>, vector<8x64xbf16>
    %c96 = arith.constant 96 : index
    %c0_21 = arith.constant 0 : index
    %28 = vector.load %arg11[%c96, %c0_21] : memref<248x64xbf16, #tpu.memory_space<vmem>>, vector<8x64xbf16>
    %c104 = arith.constant 104 : index
    %c0_22 = arith.constant 0 : index
    %29 = vector.load %arg11[%c104, %c0_22] : memref<248x64xbf16, #tpu.memory_space<vmem>>, vector<8x64xbf16>
    %c112 = arith.constant 112 : index
    %c0_23 = arith.constant 0 : index
    %30 = vector.load %arg11[%c112, %c0_23] : memref<248x64xbf16, #tpu.memory_space<vmem>>, vector<8x64xbf16>
    %31 = tpu.concatenate %16, %17, %18, %19, %20, %21, %22, %23, %24, %25, %26, %27, %28, %29, %30 in 1 : vector<8x64xbf16>, vector<8x64xbf16>, vector<8x64xbf16>, vector<8x64xbf16>, vector<8x64xbf16>, vector<8x64xbf16>, vector<8x64xbf16>, vector<8x64xbf16>, vector<8x64xbf16>, vector<8x64xbf16>, vector<8x64xbf16>, vector<8x64xbf16>, vector<8x64xbf16>, vector<8x64xbf16>, vector<8x64xbf16> -> vector<8x960xbf16>
    %c56_24 = arith.constant 56 : index
    %c0_25 = arith.constant 0 : index
    %32 = vector.load %arg11[%c56_24, %c0_25] : memref<248x64xbf16, #tpu.memory_space<vmem>>, vector<8x64xbf16>
    %c64_26 = arith.constant 64 : index
    %c0_27 = arith.constant 0 : index
    %33 = vector.load %arg11[%c64_26, %c0_27] : memref<248x64xbf16, #tpu.memory_space<vmem>>, vector<8x64xbf16>
    %c72_28 = arith.constant 72 : index
    %c0_29 = arith.constant 0 : index
    %34 = vector.load %arg11[%c72_28, %c0_29] : memref<248x64xbf16, #tpu.memory_space<vmem>>, vector<8x64xbf16>
    %c80_30 = arith.constant 80 : index
    %c0_31 = arith.constant 0 : index
    %35 = vector.load %arg11[%c80_30, %c0_31] : memref<248x64xbf16, #tpu.memory_space<vmem>>, vector<8x64xbf16>
    %c88_32 = arith.constant 88 : index
    %c0_33 = arith.constant 0 : index
    %36 = vector.load %arg11[%c88_32, %c0_33] : memref<248x64xbf16, #tpu.memory_space<vmem>>, vector<8x64xbf16>
    %c96_34 = arith.constant 96 : index
    %c0_35 = arith.constant 0 : index
    %37 = vector.load %arg11[%c96_34, %c0_35] : memref<248x64xbf16, #tpu.memory_space<vmem>>, vector<8x64xbf16>
    %c104_36 = arith.constant 104 : index
    %c0_37 = arith.constant 0 : index
    %38 = vector.load %arg11[%c104_36, %c0_37] : memref<248x64xbf16, #tpu.memory_space<vmem>>, vector<8x64xbf16>
    %c112_38 = arith.constant 112 : index
    %c0_39 = arith.constant 0 : index
    %39 = vector.load %arg11[%c112_38, %c0_39] : memref<248x64xbf16, #tpu.memory_space<vmem>>, vector<8x64xbf16>
    %c120 = arith.constant 120 : index
    %c0_40 = arith.constant 0 : index
    %40 = vector.load %arg11[%c120, %c0_40] : memref<248x64xbf16, #tpu.memory_space<vmem>>, vector<8x64xbf16>
    %c128 = arith.constant 128 : index
    %c0_41 = arith.constant 0 : index
    %41 = vector.load %arg11[%c128, %c0_41] : memref<248x64xbf16, #tpu.memory_space<vmem>>, vector<8x64xbf16>
    %c136 = arith.constant 136 : index
    %c0_42 = arith.constant 0 : index
    %42 = vector.load %arg11[%c136, %c0_42] : memref<248x64xbf16, #tpu.memory_space<vmem>>, vector<8x64xbf16>
    %c144 = arith.constant 144 : index
    %c0_43 = arith.constant 0 : index
    %43 = vector.load %arg11[%c144, %c0_43] : memref<248x64xbf16, #tpu.memory_space<vmem>>, vector<8x64xbf16>
    %c152 = arith.constant 152 : index
    %c0_44 = arith.constant 0 : index
    %44 = vector.load %arg11[%c152, %c0_44] : memref<248x64xbf16, #tpu.memory_space<vmem>>, vector<8x64xbf16>
    %c160 = arith.constant 160 : index
    %c0_45 = arith.constant 0 : index
    %45 = vector.load %arg11[%c160, %c0_45] : memref<248x64xbf16, #tpu.memory_space<vmem>>, vector<8x64xbf16>
    %c168 = arith.constant 168 : index
    %c0_46 = arith.constant 0 : index
    %46 = vector.load %arg11[%c168, %c0_46] : memref<248x64xbf16, #tpu.memory_space<vmem>>, vector<8x64xbf16>
    %47 = tpu.concatenate %32, %33, %34, %35, %36, %37, %38, %39, %40, %41, %42, %43, %44, %45, %46 in 1 : vector<8x64xbf16>, vector<8x64xbf16>, vector<8x64xbf16>, vector<8x64xbf16>, vector<8x64xbf16>, vector<8x64xbf16>, vector<8x64xbf16>, vector<8x64xbf16>, vector<8x64xbf16>, vector<8x64xbf16>, vector<8x64xbf16>, vector<8x64xbf16>, vector<8x64xbf16>, vector<8x64xbf16>, vector<8x64xbf16> -> vector<8x960xbf16>
    %c112_47 = arith.constant 112 : index
    %c0_48 = arith.constant 0 : index
    %48 = vector.load %arg11[%c112_47, %c0_48] : memref<248x64xbf16, #tpu.memory_space<vmem>>, vector<8x64xbf16>
    %c120_49 = arith.constant 120 : index
    %c0_50 = arith.constant 0 : index
    %49 = vector.load %arg11[%c120_49, %c0_50] : memref<248x64xbf16, #tpu.memory_space<vmem>>, vector<8x64xbf16>
    %c128_51 = arith.constant 128 : index
    %c0_52 = arith.constant 0 : index
    %50 = vector.load %arg11[%c128_51, %c0_52] : memref<248x64xbf16, #tpu.memory_space<vmem>>, vector<8x64xbf16>
    %c136_53 = arith.constant 136 : index
    %c0_54 = arith.constant 0 : index
    %51 = vector.load %arg11[%c136_53, %c0_54] : memref<248x64xbf16, #tpu.memory_space<vmem>>, vector<8x64xbf16>
    %c144_55 = arith.constant 144 : index
    %c0_56 = arith.constant 0 : index
    %52 = vector.load %arg11[%c144_55, %c0_56] : memref<248x64xbf16, #tpu.memory_space<vmem>>, vector<8x64xbf16>
    %c152_57 = arith.constant 152 : index
    %c0_58 = arith.constant 0 : index
    %53 = vector.load %arg11[%c152_57, %c0_58] : memref<248x64xbf16, #tpu.memory_space<vmem>>, vector<8x64xbf16>
    %c160_59 = arith.constant 160 : index
    %c0_60 = arith.constant 0 : index
    %54 = vector.load %arg11[%c160_59, %c0_60] : memref<248x64xbf16, #tpu.memory_space<vmem>>, vector<8x64xbf16>
    %c168_61 = arith.constant 168 : index
    %c0_62 = arith.constant 0 : index
    %55 = vector.load %arg11[%c168_61, %c0_62] : memref<248x64xbf16, #tpu.memory_space<vmem>>, vector<8x64xbf16>
    %c176 = arith.constant 176 : index
    %c0_63 = arith.constant 0 : index
    %56 = vector.load %arg11[%c176, %c0_63] : memref<248x64xbf16, #tpu.memory_space<vmem>>, vector<8x64xbf16>
    %c184 = arith.constant 184 : index
    %c0_64 = arith.constant 0 : index
    %57 = vector.load %arg11[%c184, %c0_64] : memref<248x64xbf16, #tpu.memory_space<vmem>>, vector<8x64xbf16>
    %c192 = arith.constant 192 : index
    %c0_65 = arith.constant 0 : index
    %58 = vector.load %arg11[%c192, %c0_65] : memref<248x64xbf16, #tpu.memory_space<vmem>>, vector<8x64xbf16>
    %c200 = arith.constant 200 : index
    %c0_66 = arith.constant 0 : index
    %59 = vector.load %arg11[%c200, %c0_66] : memref<248x64xbf16, #tpu.memory_space<vmem>>, vector<8x64xbf16>
    %c208 = arith.constant 208 : index
    %c0_67 = arith.constant 0 : index
    %60 = vector.load %arg11[%c208, %c0_67] : memref<248x64xbf16, #tpu.memory_space<vmem>>, vector<8x64xbf16>
    %c216 = arith.constant 216 : index
    %c0_68 = arith.constant 0 : index
    %61 = vector.load %arg11[%c216, %c0_68] : memref<248x64xbf16, #tpu.memory_space<vmem>>, vector<8x64xbf16>
    %c224 = arith.constant 224 : index
    %c0_69 = arith.constant 0 : index
    %62 = vector.load %arg11[%c224, %c0_69] : memref<248x64xbf16, #tpu.memory_space<vmem>>, vector<8x64xbf16>
    %63 = tpu.concatenate %48, %49, %50, %51, %52, %53, %54, %55, %56, %57, %58, %59, %60, %61, %62 in 1 : vector<8x64xbf16>, vector<8x64xbf16>, vector<8x64xbf16>, vector<8x64xbf16>, vector<8x64xbf16>, vector<8x64xbf16>, vector<8x64xbf16>, vector<8x64xbf16>, vector<8x64xbf16>, vector<8x64xbf16>, vector<8x64xbf16>, vector<8x64xbf16>, vector<8x64xbf16>, vector<8x64xbf16>, vector<8x64xbf16> -> vector<8x960xbf16>
    %64 = tpu.concatenate %31, %47, %63 in 0 : vector<8x960xbf16>, vector<8x960xbf16>, vector<8x960xbf16> -> vector<24x960xbf16>
    %c0_70 = arith.constant 0 : index
    %c0_71 = arith.constant 0 : index
    %65 = vector.load %arg4[%c0_70, %c0_71] : memref<960x128xbf16, #tpu.memory_space<vmem>>, vector<960x128xbf16>
    %cst_72 = arith.constant dense<0.000000e+00> : vector<24x128xf32>
    %66 = tpu.matmul %64, %65, %cst_72 {dimension_numbers = #tpu.dot_dimension_numbers<[1], [0], [0], [1], [0, 0, 1, 1], [], []>} : vector<24x960xbf16>, vector<960x128xbf16>, vector<24x128xf32> -> vector<24x128xf32>
    %c0_73 = arith.constant 0 : index
    %c0_74 = arith.constant 0 : index
    %67 = vector.load %arg5[%c0_73, %c0_74] : memref<1x128xf32, #tpu.memory_space<vmem>>, vector<1x128xf32>
    %68 = vector.broadcast %67 : vector<1x128xf32> to vector<24x128xf32>
    %69 = arith.addf %66, %68 : vector<24x128xf32>
    %70 = vector.extract_strided_slice %69 {offsets = [0, 0], sizes = [24, 64], strides = [1, 1]} : vector<24x128xf32> to vector<24x64xf32>
    %71 = vector.extract_strided_slice %69 {offsets = [0, 64], sizes = [24, 64], strides = [1, 1]} : vector<24x128xf32> to vector<24x64xf32>
    %72 = arith.negf %71 : vector<24x64xf32>
    %73 = math.exp %72 : vector<24x64xf32>
    %cst_75 = arith.constant 1.000000e+00 : f32
    %74 = vector.broadcast %cst_75 : f32 to vector<24x64xf32>
    %75 = arith.addf %74, %73 : vector<24x64xf32>
    %76 = arith.divf %74, %75 : vector<24x64xf32>
    %77 = arith.mulf %70, %76 : vector<24x64xf32>
    %78 = vector.shape_cast %77 : vector<24x64xf32> to vector<3x8x64xf32>
    %cst_76 = arith.constant dense<0.000000e+00> : vector<8x64xf32>
    %79 = vector.multi_reduction <add>, %78, %cst_76 [0] : vector<3x8x64xf32> to vector<8x64xf32>
    %cst_77 = arith.constant 0.333333343 : f32
    %80 = vector.broadcast %cst_77 : f32 to vector<8x64xf32>
    %81 = arith.mulf %79, %80 : vector<8x64xf32>
    %82 = arith.truncf %81 : vector<8x64xf32> to vector<8x64xbf16>
    %c0_78 = arith.constant 0 : index
    %c0_79 = arith.constant 0 : index
    %83 = vector.load %arg6[%c0_78, %c0_79] : memref<64x128xbf16, #tpu.memory_space<vmem>>, vector<64x128xbf16>
    %cst_80 = arith.constant dense<0.000000e+00> : vector<8x128xf32>
    %84 = tpu.matmul %82, %83, %cst_80 {dimension_numbers = #tpu.dot_dimension_numbers<[1], [0], [0], [1], [0, 0, 1, 1], [], []>} : vector<8x64xbf16>, vector<64x128xbf16>, vector<8x128xf32> -> vector<8x128xf32>
    %c0_81 = arith.constant 0 : index
    %c0_82 = arith.constant 0 : index
    %85 = vector.load %arg7[%c0_81, %c0_82] : memref<1x128xf32, #tpu.memory_space<vmem>>, vector<1x128xf32>
    %86 = vector.broadcast %85 : vector<1x128xf32> to vector<8x128xf32>
    %87 = arith.addf %84, %86 : vector<8x128xf32>
    %88 = arith.truncf %87 : vector<8x128xf32> to vector<8x128xbf16>
    %c0_83 = arith.constant 0 : index
    %c0_84 = arith.constant 0 : index
    %89 = vector.load %arg8[%c0_83, %c0_84] : memref<128x128xbf16, #tpu.memory_space<vmem>>, vector<128x128xbf16>
    %cst_85 = arith.constant dense<0.000000e+00> : vector<8x128xf32>
    %90 = tpu.matmul %88, %89, %cst_85 {dimension_numbers = #tpu.dot_dimension_numbers<[1], [0], [0], [1], [0, 0, 1, 1], [], []>} : vector<8x128xbf16>, vector<128x128xbf16>, vector<8x128xf32> -> vector<8x128xf32>
    %c0_86 = arith.constant 0 : index
    %c0_87 = arith.constant 0 : index
    %91 = vector.load %arg9[%c0_86, %c0_87] : memref<1x128xf32, #tpu.memory_space<vmem>>, vector<1x128xf32>
    %92 = vector.broadcast %91 : vector<1x128xf32> to vector<8x128xf32>
    %93 = arith.addf %90, %92 : vector<8x128xf32>
    %c0_88 = arith.constant 0 : index
    %c0_89 = arith.constant 0 : index
    %94 = vector.load %arg10[%c0_88, %c0_89] : memref<8x128xf32, #tpu.memory_space<vmem>>, vector<8x128xf32>
    tpu.vector_store %arg10[%c0_88, %c0_89], %93 {strides = array<i32>} : memref<8x128xf32, #tpu.memory_space<vmem>>, vector<8x128xf32>,
    return
  }
  func.func @transform_0(%arg0: i32) -> (i32, i32) {
    %c0_i32 = arith.constant 0 : i32
    %c0_i32_0 = arith.constant 0 : i32
    return %arg0, %c0_i32 : i32, i32
  }
  func.func @transform_1(%arg0: i32) -> (i32, i32) {
    %c0_i32 = arith.constant 0 : i32
    %c0_i32_0 = arith.constant 0 : i32
    %c0_i32_1 = arith.constant 0 : i32
    return %c0_i32, %c0_i32_0 : i32, i32
  }
  func.func @transform_2(%arg0: i32) -> (i32, i32) {
    %c0_i32 = arith.constant 0 : i32
    %c0_i32_0 = arith.constant 0 : i32
    %c0_i32_1 = arith.constant 0 : i32
    return %c0_i32, %c0_i32_0 : i32, i32
  }
  func.func @transform_3(%arg0: i32) -> (i32, i32) {
    %c0_i32 = arith.constant 0 : i32
    %c0_i32_0 = arith.constant 0 : i32
    %c0_i32_1 = arith.constant 0 : i32
    return %c0_i32, %c0_i32_0 : i32, i32
  }
  func.func @transform_4(%arg0: i32) -> (i32, i32) {
    %c0_i32 = arith.constant 0 : i32
    %c0_i32_0 = arith.constant 0 : i32
    %c0_i32_1 = arith.constant 0 : i32
    return %c0_i32, %c0_i32_0 : i32, i32
  }
  func.func @transform_5(%arg0: i32) -> (i32, i32) {
    %c0_i32 = arith.constant 0 : i32
    %c0_i32_0 = arith.constant 0 : i32
    %c0_i32_1 = arith.constant 0 : i32
    return %c0_i32, %c0_i32_0 : i32, i32
  }
  func.func @transform_6(%arg0: i32) -> (i32, i32) {
    %c0_i32 = arith.constant 0 : i32
    %c0_i32_0 = arith.constant 0 : i32
    %c0_i32_1 = arith.constant 0 : i32
    return %c0_i32, %c0_i32_0 : i32, i32
  }
  func.func @transform_7(%arg0: i32) -> (i32, i32) {
    %c0_i32 = arith.constant 0 : i32
    %c0_i32_0 = arith.constant 0 : i32
    %c0_i32_1 = arith.constant 0 : i32
    return %c0_i32, %c0_i32_0 : i32, i32
  }
  func.func @transform_8(%arg0: i32) -> (i32, i32) {
    %c0_i32 = arith.constant 0 : i32
    %c0_i32_0 = arith.constant 0 : i32
    %c0_i32_1 = arith.constant 0 : i32
    return %c0_i32, %c0_i32_0 : i32, i32
  }
  func.func @transform_9(%arg0: i32) -> (i32, i32) {
    %c0_i32 = arith.constant 0 : i32
    %c0_i32_0 = arith.constant 0 : i32
    return %arg0, %c0_i32 : i32, i32
  }
}

</mosaic_0001>

<llo_original>
// kernel: tpu_custom_call.1
$region0: #{tpu_custom_call.1}
  #allocation0 [shape = 'u32[]', space=smem, size = 0x4, offset = 0x4, fixed_abs, tag = 'smem constant byte address 0x4 - core index']
  #allocation1 [shape = 'u32[72,128]{1,0:T(1,128)}', space=vmem, size = 0x9000, scoped, tag = 'internal scratch']
  #allocation2 [shape = 'bf16[248,64]{1,0:T(8,128)(2,1)}', space=vmem, size = 0xf800, scoped, tag = 'scratch operand']
  %s0 = inlined_call_operand.vmem [shape: bf16[496,960], index: 0, kind: input, shape index: {}]
  %s1 = inlined_call_operand.vmem [shape: bf16[960,128], index: 1, kind: input, shape index: {}]
  %s2 = inlined_call_operand.vmem [shape: f32[1,128], index: 2, kind: input, shape index: {}]
  %s3 = inlined_call_operand.vmem [shape: bf16[960,128], index: 3, kind: input, shape index: {}]
  %s4 = inlined_call_operand.vmem [shape: f32[1,128], index: 4, kind: input, shape index: {}]
  %s5 = inlined_call_operand.vmem [shape: bf16[64,128], index: 5, kind: input, shape index: {}]
  %s6 = inlined_call_operand.vmem [shape: f32[1,128], index: 6, kind: input, shape index: {}]
  %s7 = inlined_call_operand.vmem [shape: bf16[128,128], index: 7, kind: input, shape index: {}]
  %s8 = inlined_call_operand.vmem [shape: f32[1,128], index: 8, kind: input, shape index: {}]
  %s9 = inlined_call_operand.hbm [shape: f32[16,128], index: 9, kind: output, shape index: {}]
  %s10 = sld [smem:[#allocation0]]
  $region69: #{tpu_custom_call.1} parent=0
    _
  %s12 = ssub.s32 1, %s10
  %s13 = scalar_select 0, %s12, %s10
  $region1: #{tpu_custom_call.1} parent=0
    #allocation3 [shape = 'u8[8192]{0}', space=vmem, size = 0x2000, scoped, tag = 'output window, operand 0']
    #allocation4 [shape = 's32[2]{0}', space=sflag, size = 0x8, scoped, tag = 'scoped memory for tpu_custom_call.1']
    %14 = vsyncpa [#allocation4], 0
    %s15 = scalar_lea.sflag [#allocation4], 1
    %16 = vsyncpa %s15, 0
    loop: start=0, step=1, limit=4
    $region2: #{tpu_custom_call.1} parent=1 // loop_pre_header
      _
    $region3: #{tpu_custom_call.1} parent=1 // loop_header
      %s18 = sphi 0, %s22
      %p19 = scmp.ge.s32.totalorder %s18, 4
      %s28 = sphi 0, %s30
      %s31 = sphi 0, %s28
      %s32 = sphi 0, %s31
      %s48 = sphi 0, %s32
      %s52 = sphi 0, %s52
      %s54 = sphi 0, %s52
      %s55 = sphi 0, %s54
      %s69 = sphi 0, %s55
      %s73 = sphi 0, %s73
      %s75 = sphi 0, %s73
      %s76 = sphi 0, %s75
      %s90 = sphi 0, %s76
      %s94 = sphi 0, %s94
      %s96 = sphi 0, %s94
      %s97 = sphi 0, %s96
      %s111 = sphi 0, %s97
      %s115 = sphi 0, %s115
      %s117 = sphi 0, %s115
      %s118 = sphi 0, %s117
      %s132 = sphi 0, %s118
      %s136 = sphi 0, %s136
      %s138 = sphi 0, %s136
      %s139 = sphi 0, %s138
      %s153 = sphi 0, %s139
      %s157 = sphi 0, %s157
      %s159 = sphi 0, %s157
      %s160 = sphi 0, %s159
      %s174 = sphi 0, %s160
      %s178 = sphi 0, %s178
      %s180 = sphi 0, %s178
      %s181 = sphi 0, %s180
      %s195 = sphi 0, %s181
      %s199 = sphi 0, %s199
      %s201 = sphi 0, %s199
      %s202 = sphi 0, %s201
      %s216 = sphi 0, %s202
      %s222 = sphi 0, %s224
      %s225 = sphi 0, %s222
      %s226 = sphi 0, %s225
      %s242 = sphi 0, %s226
    $region4: #{tpu_custom_call.1} parent=1 // loop_header_branch
      %21 = sbr.rel (%p19) target = $region8
    $region5: #{tpu_custom_call.1} parent=1 // loop_body
      %s23 = ssub.s32 %s18, 1
      %s24 = ssub.s32 %s18, 2
      %s25 = sadd.s32 %s18, 1
      %s26 = ssub.s32 %s18, %s25
      %p27 = scmp.eq.s32.totalorder %s26, 0
      %s29 = sadd.s32 %s28, 1
      %s30 = scalar_select %p27, %s28, %s29
      %p33 = pneg %p27
      %p34 = scmp.eq.s32.totalorder %s18, 1
      %p35 = por %p33, %p34
      %p36 = scmp.ne.s32.totalorder %s28, %s31
      %p37 = scmp.eq.s32.totalorder %s18, 0
      %p38 = por %p36, %p37
      %p39 = scmp.ne.s32.totalorder %s28, %s31
      %p40 = scmp.eq.s32.totalorder %s23, 1
      %p41 = por %p39, %p40
      %p42 = scmp.ne.s32.totalorder %s31, %s32
      %p43 = scmp.eq.s32.totalorder %s23, 0
      %p44 = por %p42, %p43
      %p45 = scmp.ne.s32.totalorder %s31, %s32
      %p46 = scmp.eq.s32.totalorder %s24, 1
      %p47 = por %p45, %p46
      %p49 = scmp.ne.s32.totalorder %s32, %s48
      %p50 = scmp.eq.s32.totalorder %s24, 0
      %p51 = por %p49, %p50
      %s53 = sadd.s32 %s52, 1
      %p56 = scmp.eq.s32.totalorder %s18, 1
      %p57 = scmp.ne.s32.totalorder %s52, %s54
      %p58 = scmp.eq.s32.totalorder %s18, 0
      %p59 = por %p57, %p58
      %p60 = scmp.ne.s32.totalorder %s52, %s54
      %p61 = scmp.eq.s32.totalorder %s23, 1
      %p62 = por %p60, %p61
      %p63 = scmp.ne.s32.totalorder %s54, %s55
      %p64 = scmp.eq.s32.totalorder %s23, 0
      %p65 = por %p63, %p64
      %p66 = scmp.ne.s32.totalorder %s54, %s55
      %p67 = scmp.eq.s32.totalorder %s24, 1
      %p68 = por %p66, %p67
      %p70 = scmp.ne.s32.totalorder %s55, %s69
      %p71 = scmp.eq.s32.totalorder %s24, 0
      %p72 = por %p70, %p71
      %s74 = sadd.s32 %s73, 1
      %p77 = scmp.eq.s32.totalorder %s18, 1
      %p78 = scmp.ne.s32.totalorder %s73, %s75
      %p79 = scmp.eq.s32.totalorder %s18, 0
      %p80 = por %p78, %p79
      %p81 = scmp.ne.s32.totalorder %s73, %s75
      %p82 = scmp.eq.s32.totalorder %s23, 1
      %p83 = por %p81, %p82
      %p84 = scmp.ne.s32.totalorder %s75, %s76
      %p85 = scmp.eq.s32.totalorder %s23, 0
      %p86 = por %p84, %p85
      %p87 = scmp.ne.s32.totalorder %s75, %s76
      %p88 = scmp.eq.s32.totalorder %s24, 1
      %p89 = por %p87, %p88
      %p91 = scmp.ne.s32.totalorder %s76, %s90
      %p92 = scmp.eq.s32.totalorder %s24, 0
      %p93 = por %p91, %p92
      %s95 = sadd.s32 %s94, 1
      %p98 = scmp.eq.s32.totalorder %s18, 1
      %p99 = scmp.ne.s32.totalorder %s94, %s96
      %p100 = scmp.eq.s32.totalorder %s18, 0
      %p101 = por %p99, %p100
      %p102 = scmp.ne.s32.totalorder %s94, %s96
      %p103 = scmp.eq.s32.totalorder %s23, 1
      %p104 = por %p102, %p103
      %p105 = scmp.ne.s32.totalorder %s96, %s97
      %p106 = scmp.eq.s32.totalorder %s23, 0
      %p107 = por %p105, %p106
      %p108 = scmp.ne.s32.totalorder %s96, %s97
      %p109 = scmp.eq.s32.totalorder %s24, 1
      %p110 = por %p108, %p109
      %p112 = scmp.ne.s32.totalorder %s97, %s111
      %p113 = scmp.eq.s32.totalorder %s24, 0
      %p114 = por %p112, %p113
      %s116 = sadd.s32 %s115, 1
      %p119 = scmp.eq.s32.totalorder %s18, 1
      %p120 = scmp.ne.s32.totalorder %s115, %s117
      %p121 = scmp.eq.s32.totalorder %s18, 0
      %p122 = por %p120, %p121
      %p123 = scmp.ne.s32.totalorder %s115, %s117
      %p124 = scmp.eq.s32.totalorder %s23, 1
      %p125 = por %p123, %p124
      %p126 = scmp.ne.s32.totalorder %s117, %s118
      %p127 = scmp.eq.s32.totalorder %s23, 0
      %p128 = por %p126, %p127
      %p129 = scmp.ne.s32.totalorder %s117, %s118
      %p130 = scmp.eq.s32.totalorder %s24, 1
      %p131 = por %p129, %p130
      %p133 = scmp.ne.s32.totalorder %s118, %s132
      %p134 = scmp.eq.s32.totalorder %s24, 0
      %p135 = por %p133, %p134
      %s137 = sadd.s32 %s136, 1
      %p140 = scmp.eq.s32.totalorder %s18, 1
      %p141 = scmp.ne.s32.totalorder %s136, %s138
      %p142 = scmp.eq.s32.totalorder %s18, 0
      %p143 = por %p141, %p142
      %p144 = scmp.ne.s32.totalorder %s136, %s138
      %p145 = scmp.eq.s32.totalorder %s23, 1
      %p146 = por %p144, %p145
      %p147 = scmp.ne.s32.totalorder %s138, %s139
      %p148 = scmp.eq.s32.totalorder %s23, 0
      %p149 = por %p147, %p148
      %p150 = scmp.ne.s32.totalorder %s138, %s139
      %p151 = scmp.eq.s32.totalorder %s24, 1
      %p152 = por %p150, %p151
      %p154 = scmp.ne.s32.totalorder %s139, %s153
      %p155 = scmp.eq.s32.totalorder %s24, 0
      %p156 = por %p154, %p155
      %s158 = sadd.s32 %s157, 1
      %p161 = scmp.eq.s32.totalorder %s18, 1
      %p162 = scmp.ne.s32.totalorder %s157, %s159
      %p163 = scmp.eq.s32.totalorder %s18, 0
      %p164 = por %p162, %p163
      %p165 = scmp.ne.s32.totalorder %s157, %s159
      %p166 = scmp.eq.s32.totalorder %s23, 1
      %p167 = por %p165, %p166
      %p168 = scmp.ne.s32.totalorder %s159, %s160
      %p169 = scmp.eq.s32.totalorder %s23, 0
      %p170 = por %p168, %p169
      %p171 = scmp.ne.s32.totalorder %s159, %s160
      %p172 = scmp.eq.s32.totalorder %s24, 1
      %p173 = por %p171, %p172
      %p175 = scmp.ne.s32.totalorder %s160, %s174
      %p176 = scmp.eq.s32.totalorder %s24, 0
      %p177 = por %p175, %p176
      %s179 = sadd.s32 %s178, 1
      %p182 = scmp.eq.s32.totalorder %s18, 1
      %p183 = scmp.ne.s32.totalorder %s178, %s180
      %p184 = scmp.eq.s32.totalorder %s18, 0
      %p185 = por %p183, %p184
      %p186 = scmp.ne.s32.totalorder %s178, %s180
      %p187 = scmp.eq.s32.totalorder %s23, 1
      %p188 = por %p186, %p187
      %p189 = scmp.ne.s32.totalorder %s180, %s181
      %p190 = scmp.eq.s32.totalorder %s23, 0
      %p191 = por %p189, %p190
      %p192 = scmp.ne.s32.totalorder %s180, %s181
      %p193 = scmp.eq.s32.totalorder %s24, 1
      %p194 = por %p192, %p193
      %p196 = scmp.ne.s32.totalorder %s181, %s195
      %p197 = scmp.eq.s32.totalorder %s24, 0
      %p198 = por %p196, %p197
      %s200 = sadd.s32 %s199, 1
      %p203 = scmp.eq.s32.totalorder %s18, 1
      %p204 = scmp.ne.s32.totalorder %s199, %s201
      %p205 = scmp.eq.s32.totalorder %s18, 0
      %p206 = por %p204, %p205
      %p207 = scmp.ne.s32.totalorder %s199, %s201
      %p208 = scmp.eq.s32.totalorder %s23, 1
      %p209 = por %p207, %p208
      %p210 = scmp.ne.s32.totalorder %s201, %s202
      %p211 = scmp.eq.s32.totalorder %s23, 0
      %p212 = por %p210, %p211
      %p213 = scmp.ne.s32.totalorder %s201, %s202
      %p214 = scmp.eq.s32.totalorder %s24, 1
      %p215 = por %p213, %p214
      %p217 = scmp.ne.s32.totalorder %s202, %s216
      %p218 = scmp.eq.s32.totalorder %s24, 0
      %p219 = por %p217, %p218
      %s220 = ssub.s32 %s18, %s25
      %p221 = scmp.eq.s32.totalorder %s220, 0
      %s223 = sadd.s32 %s222, 1
      %s224 = scalar_select %p221, %s222, %s223
      %p227 = pneg %p221
      %p228 = scmp.eq.s32.totalorder %s18, 1
      %p229 = por %p227, %p228
      %p230 = scmp.ne.s32.totalorder %s222, %s225
      %p231 = scmp.eq.s32.totalorder %s18, 0
      %p232 = por %p230, %p231
      %p233 = scmp.ne.s32.totalorder %s222, %s225
      %p234 = scmp.eq.s32.totalorder %s23, 1
      %p235 = por %p233, %p234
      %p236 = scmp.ne.s32.totalorder %s225, %s226
      %p237 = scmp.eq.s32.totalorder %s23, 0
      %p238 = por %p236, %p237
      %p239 = scmp.ne.s32.totalorder %s225, %s226
      %p240 = scmp.eq.s32.totalorder %s24, 1
      %p241 = por %p239, %p240
      %p243 = scmp.ne.s32.totalorder %s226, %s242
      %p244 = scmp.eq.s32.totalorder %s24, 0
      %p245 = por %p243, %p244
      %p246 = scmp.le.s32.totalorder 1, %s18
      %p247 = scmp.lt.s32.totalorder %s18, 3
      %p248 = pnand %p246, %p247
      %p249 = pneg %p248
      // Predicated region
      $region9: #{tpu_custom_call.1} parent=5 // pred_check
        _
      $region10: #{tpu_custom_call.1} parent=5 // pred_check_branch
        %251 = sbr.rel (%p248) target = $region12
      $region11: #{tpu_custom_call.1} parent=5 // pred_region
        %s252 = ssub.s32 %s18, 1
        // Predicated region
        $region13: #{tpu_custom_call.1} parent=11 // pred_check
          %p253 = pneg %p65
        $region14: #{tpu_custom_call.1} parent=11 // pred_check_branch
          %255 = sbr.rel (%p253) target = $region16
        $region15: #{tpu_custom_call.1} parent=11 // pred_region
          _
        $region16: #{tpu_custom_call.1} parent=11 // pred_fallthru
          _
        // Predicated region
        $region17: #{tpu_custom_call.1} parent=11 // pred_check
          %p256 = pneg %p86
        $region18: #{tpu_custom_call.1} parent=11 // pred_check_branch
          %258 = sbr.rel (%p256) target = $region20
        $region19: #{tpu_custom_call.1} parent=11 // pred_region
          _
        $region20: #{tpu_custom_call.1} parent=11 // pred_fallthru
          _
        // Predicated region
        $region21: #{tpu_custom_call.1} parent=11 // pred_check
          %p259 = pneg %p107
        $region22: #{tpu_custom_call.1} parent=11 // pred_check_branch
          %261 = sbr.rel (%p259) target = $region24
        $region23: #{tpu_custom_call.1} parent=11 // pred_region
          _
        $region24: #{tpu_custom_call.1} parent=11 // pred_fallthru
          _
        // Predicated region
        $region25: #{tpu_custom_call.1} parent=11 // pred_check
          %p262 = pneg %p128
        $region26: #{tpu_custom_call.1} parent=11 // pred_check_branch
          %264 = sbr.rel (%p262) target = $region28
        $region27: #{tpu_custom_call.1} parent=11 // pred_region
          _
        $region28: #{tpu_custom_call.1} parent=11 // pred_fallthru
          _
        // Predicated region
        $region29: #{tpu_custom_call.1} parent=11 // pred_check
          %p265 = pneg %p149
        $region30: #{tpu_custom_call.1} parent=11 // pred_check_branch
          %267 = sbr.rel (%p265) target = $region32
        $region31: #{tpu_custom_call.1} parent=11 // pred_region
          _
        $region32: #{tpu_custom_call.1} parent=11 // pred_fallthru
          _
        // Predicated region
        $region33: #{tpu_custom_call.1} parent=11 // pred_check
          %p268 = pneg %p170
        $region34: #{tpu_custom_call.1} parent=11 // pred_check_branch
          %270 = sbr.rel (%p268) target = $region36
        $region35: #{tpu_custom_call.1} parent=11 // pred_region
          _
        $region36: #{tpu_custom_call.1} parent=11 // pred_fallthru
          _
        // Predicated region
        $region37: #{tpu_custom_call.1} parent=11 // pred_check
          %p271 = pneg %p191
        $region38: #{tpu_custom_call.1} parent=11 // pred_check_branch
          %273 = sbr.rel (%p271) target = $region40
        $region39: #{tpu_custom_call.1} parent=11 // pred_region
          _
        $region40: #{tpu_custom_call.1} parent=11 // pred_fallthru
          _
        // Predicated region
        $region41: #{tpu_custom_call.1} parent=11 // pred_check
          %p274 = pneg %p212
        $region42: #{tpu_custom_call.1} parent=11 // pred_check_branch
          %276 = sbr.rel (%p274) target = $region44
        $region43: #{tpu_custom_call.1} parent=11 // pred_region
          _
        $region44: #{tpu_custom_call.1} parent=11 // pred_fallthru
          _
      $region12: #{tpu_custom_call.1} parent=5 // pred_fallthru
        _
      %p277 = scmp.lt.s32.totalorder %s18, 2
      // Predicated region
      $region45: #{tpu_custom_call.1} parent=5 // pred_check
        %p278 = pneg %p277
      $region46: #{tpu_custom_call.1} parent=5 // pred_check_branch
        %280 = sbr.rel (%p278) target = $region48
      $region47: #{tpu_custom_call.1} parent=5 // pred_region
        // Predicated region
        $region49: #{tpu_custom_call.1} parent=47 // pred_check
          %p281 = pneg %p38
        $region50: #{tpu_custom_call.1} parent=47 // pred_check_branch
          %283 = sbr.rel (%p281) target = $region52
        $region51: #{tpu_custom_call.1} parent=47 // pred_region
          %s284 = smul.u32 31, %s18
          %p285 = scmp.lt.s32.totalorder %s284, 61
          %s286 = scalar_select %p285, %s284, 61
          %s287 = smul.addr %s286, 8
          %s288 = smul.addr %s287, 4
          %s289 = scalar_lea.vmem %s0, %s288
          %s290 = smul.u32 31, %s18
        $region52: #{tpu_custom_call.1} parent=47 // pred_fallthru
          _
      $region48: #{tpu_custom_call.1} parent=5 // pred_fallthru
        _
      %p291 = scmp.le.s32.totalorder 1, %s18
      %p292 = scmp.lt.s32.totalorder %s18, 3
      %p293 = pnand %p291, %p292
      %p294 = pneg %p293
      // Predicated region
      $region53: #{tpu_custom_call.1} parent=5 // pred_check
        _
      $region54: #{tpu_custom_call.1} parent=5 // pred_check_branch
        %296 = sbr.rel (%p293) target = $region56
      $region55: #{tpu_custom_call.1} parent=5 // pred_region
        %s297 = ssub.s32 %s18, 1
        %s298 = smul.u32 31, %s23
        %p299 = scmp.lt.s32.totalorder %s298, 61
        %s300 = scalar_select %p299, %s298, 61
        %s301 = smul.addr %s300, 8
        %s302 = smul.addr %s301, 4
        %s303 = scalar_lea.vmem %s0, %s302
        %p304 = pneg %p44
        %p305 = pneg %p41
        %p306 = pneg %p65
        %p307 = pneg %p62
        %p308 = pneg %p86
        %p309 = pneg %p83
        %p310 = pneg %p107
        %p311 = pneg %p104
        %p312 = pneg %p128
        %p313 = pneg %p125
        %p314 = pneg %p149
        %p315 = pneg %p146
        %p316 = pneg %p170
        %p317 = pneg %p167
        %p318 = pneg %p191
        %p319 = pneg %p188
        %p320 = pneg %p212
        %p321 = pneg %p209
        %p322 = pneg %p238
        %p323 = pneg %p235
        %s324 = sand.u32 %s225, 1
        %s325 = scalar_lea.sflag [#allocation4], %s324
        %s326 = sand.u32 %s225, 1
        %s327 = smul.addr %s326, 8
        %s328 = scalar_lea.vmem [#allocation3], %s327
        %s329 = smul.u32 31, %s23
        %p330 = scmp.lt.s32.totalorder %s329, 61
        %s331 = scalar_select %p330, %s329, 61
        %s332 = smul.addr %s331, 8
        %s333 = smul.addr %s332, 4
        %s334 = scalar_lea.vmem %s0, %s333
        %s335 = smul.u32 31, %s23
        %v337 = vld [vmem:[%s334] sm:$0xff]
        %v338 = vld [vmem:[%s334 + $0x8] sm:$0xff]
        %v339 = vld [vmem:[%s334 + $0x10] sm:$0xff]
        %v340 = vld [vmem:[%s334 + $0x18] sm:$0xff]
        %v341 = vld [vmem:[%s334 + $0x20] sm:$0xff]
        %v342 = vld [vmem:[%s334 + $0x28] sm:$0xff]
        %v343 = vld [vmem:[%s334 + $0x30] sm:$0xff]
        %v344 = vld [vmem:[%s334 + $0x38] sm:$0xff]
        %v345 = vld [vmem:[%s334 + $0x40] sm:$0xff]
        %v346 = vld [vmem:[%s334 + $0x48] sm:$0xff]
        %v347 = vld [vmem:[%s334 + $0x50] sm:$0xff]
        %v348 = vld [vmem:[%s334 + $0x58] sm:$0xff]
        %v349 = vld [vmem:[%s334 + $0x60] sm:$0xff]
        %v350 = vld [vmem:[%s334 + $0x68] sm:$0xff]
        %v351 = vld [vmem:[%s334 + $0x70] sm:$0xff]
        %v352 = vld [vmem:[%s334 + $0x78] sm:$0xff]
        %v353 = vld [vmem:[%s334 + $0x80] sm:$0xff]
        %v354 = vld [vmem:[%s334 + $0x88] sm:$0xff]
        %v355 = vld [vmem:[%s334 + $0x90] sm:$0xff]
        %v356 = vld [vmem:[%s334 + $0x98] sm:$0xff]
        %v357 = vld [vmem:[%s334 + $0xa0] sm:$0xff]
        %v358 = vld [vmem:[%s334 + $0xa8] sm:$0xff]
        %v359 = vld [vmem:[%s334 + $0xb0] sm:$0xff]
        %v360 = vld [vmem:[%s334 + $0xb8] sm:$0xff]
        %v361 = vld [vmem:[%s334 + $0xc0] sm:$0xff]
        %v362 = vld [vmem:[%s334 + $0xc8] sm:$0xff]
        %v363 = vld [vmem:[%s334 + $0xd0] sm:$0xff]
        %v364 = vld [vmem:[%s334 + $0xd8] sm:$0xff]
        %v365 = vld [vmem:[%s334 + $0xe0] sm:$0xff]
        %v366 = vld [vmem:[%s334 + $0xe8] sm:$0xff]
        %v367 = vld [vmem:[%s334 + $0xf0] sm:$0xff]
        %v368 = vld [vmem:[%s334 + $0xf8] sm:$0xff]
        %v369 = vld [vmem:[%s334 + $0x100] sm:$0xff]
        %v370 = vld [vmem:[%s334 + $0x108] sm:$0xff]
        %v371 = vld [vmem:[%s334 + $0x110] sm:$0xff]
        %v372 = vld [vmem:[%s334 + $0x118] sm:$0xff]
        %v373 = vld [vmem:[%s334 + $0x120] sm:$0xff]
        %v374 = vld [vmem:[%s334 + $0x128] sm:$0xff]
        %v375 = vld [vmem:[%s334 + $0x130] sm:$0xff]
        %v376 = vld [vmem:[%s334 + $0x138] sm:$0xff]
        %v377 = vld [vmem:[%s334 + $0x140] sm:$0xff]
        %v378 = vld [vmem:[%s334 + $0x148] sm:$0xff]
        %v379 = vld [vmem:[%s334 + $0x150] sm:$0xff]
        %v380 = vld [vmem:[%s334 + $0x158] sm:$0xff]
        %v381 = vld [vmem:[%s334 + $0x160] sm:$0xff]
        %v382 = vld [vmem:[%s334 + $0x168] sm:$0xff]
        %v383 = vld [vmem:[%s334 + $0x170] sm:$0xff]
        %v384 = vld [vmem:[%s334 + $0x178] sm:$0xff]
        %v385 = vld [vmem:[%s334 + $0x180] sm:$0xff]
        %v386 = vld [vmem:[%s334 + $0x188] sm:$0xff]
        %v387 = vld [vmem:[%s334 + $0x190] sm:$0xff]
        %v388 = vld [vmem:[%s334 + $0x198] sm:$0xff]
        %v389 = vld [vmem:[%s334 + $0x1a0] sm:$0xff]
        %v390 = vld [vmem:[%s334 + $0x1a8] sm:$0xff]
        %v391 = vld [vmem:[%s334 + $0x1b0] sm:$0xff]
        %v392 = vld [vmem:[%s334 + $0x1b8] sm:$0xff]
        %v393 = vld [vmem:[%s334 + $0x1c0] sm:$0xff]
        %v394 = vld [vmem:[%s334 + $0x1c8] sm:$0xff]
        %v395 = vld [vmem:[%s334 + $0x1d0] sm:$0xff]
        %v396 = vld [vmem:[%s334 + $0x1d8] sm:$0xff]
        %v397 = vld [vmem:[%s334 + $0x1e0] sm:$0xff]
        %v398 = vld [vmem:[%s334 + $0x1e8] sm:$0xff]
        %v399 = vld [vmem:[%s334 + $0x1f0] sm:$0xff]
        %v400 = vld [vmem:[%s334 + $0x1f8] sm:$0xff]
        %v401 = vld [vmem:[%s334 + $0x200] sm:$0xff]
        %v402 = vld [vmem:[%s334 + $0x208] sm:$0xff]
        %v403 = vld [vmem:[%s334 + $0x210] sm:$0xff]
        %v404 = vld [vmem:[%s334 + $0x218] sm:$0xff]
        %v405 = vld [vmem:[%s334 + $0x220] sm:$0xff]
        %v406 = vld [vmem:[%s334 + $0x228] sm:$0xff]
        %v407 = vld [vmem:[%s334 + $0x230] sm:$0xff]
        %v408 = vld [vmem:[%s334 + $0x238] sm:$0xff]
        %v409 = vld [vmem:[%s334 + $0x240] sm:$0xff]
        %v410 = vld [vmem:[%s334 + $0x248] sm:$0xff]
        %v411 = vld [vmem:[%s334 + $0x250] sm:$0xff]
        %v412 = vld [vmem:[%s334 + $0x258] sm:$0xff]
        %v413 = vld [vmem:[%s334 + $0x260] sm:$0xff]
        %v414 = vld [vmem:[%s334 + $0x268] sm:$0xff]
        %v415 = vld [vmem:[%s334 + $0x270] sm:$0xff]
        %v416 = vld [vmem:[%s334 + $0x278] sm:$0xff]
        %v417 = vld [vmem:[%s334 + $0x280] sm:$0xff]
        %v418 = vld [vmem:[%s334 + $0x288] sm:$0xff]
        %v419 = vld [vmem:[%s334 + $0x290] sm:$0xff]
        %v420 = vld [vmem:[%s334 + $0x298] sm:$0xff]
        %v421 = vld [vmem:[%s334 + $0x2a0] sm:$0xff]
        %v422 = vld [vmem:[%s334 + $0x2a8] sm:$0xff]
        %v423 = vld [vmem:[%s334 + $0x2b0] sm:$0xff]
        %v424 = vld [vmem:[%s334 + $0x2b8] sm:$0xff]
        %v425 = vld [vmem:[%s334 + $0x2c0] sm:$0xff]
        %v426 = vld [vmem:[%s334 + $0x2c8] sm:$0xff]
        %v427 = vld [vmem:[%s334 + $0x2d0] sm:$0xff]
        %v428 = vld [vmem:[%s334 + $0x2d8] sm:$0xff]
        %v429 = vld [vmem:[%s334 + $0x2e0] sm:$0xff]
        %v430 = vld [vmem:[%s334 + $0x2e8] sm:$0xff]
        %v431 = vld [vmem:[%s334 + $0x2f0] sm:$0xff]
        %v432 = vld [vmem:[%s334 + $0x2f8] sm:$0xff]
        %v433 = vld [vmem:[%s334 + $0x300] sm:$0xff]
        %v434 = vld [vmem:[%s334 + $0x308] sm:$0xff]
        %v435 = vld [vmem:[%s334 + $0x310] sm:$0xff]
        %v436 = vld [vmem:[%s334 + $0x318] sm:$0xff]
        %v437 = vld [vmem:[%s334 + $0x320] sm:$0xff]
        %v438 = vld [vmem:[%s334 + $0x328] sm:$0xff]
        %v439 = vld [vmem:[%s334 + $0x330] sm:$0xff]
        %v440 = vld [vmem:[%s334 + $0x338] sm:$0xff]
        %v441 = vld [vmem:[%s334 + $0x340] sm:$0xff]
        %v442 = vld [vmem:[%s334 + $0x348] sm:$0xff]
        %v443 = vld [vmem:[%s334 + $0x350] sm:$0xff]
        %v444 = vld [vmem:[%s334 + $0x358] sm:$0xff]
        %v445 = vld [vmem:[%s334 + $0x360] sm:$0xff]
        %v446 = vld [vmem:[%s334 + $0x368] sm:$0xff]
        %v447 = vld [vmem:[%s334 + $0x370] sm:$0xff]
        %v448 = vld [vmem:[%s334 + $0x378] sm:$0xff]
        %v449 = vld [vmem:[%s334 + $0x380] sm:$0xff]
        %v450 = vld [vmem:[%s334 + $0x388] sm:$0xff]
        %v451 = vld [vmem:[%s334 + $0x390] sm:$0xff]
        %v452 = vld [vmem:[%s334 + $0x398] sm:$0xff]
        %v453 = vld [vmem:[%s334 + $0x3a0] sm:$0xff]
        %v454 = vld [vmem:[%s334 + $0x3a8] sm:$0xff]
        %v455 = vld [vmem:[%s334 + $0x3b0] sm:$0xff]
        %v456 = vld [vmem:[%s334 + $0x3b8] sm:$0xff]
        %v457 = vld [vmem:[%s334 + $0x3c0] sm:$0xff]
        %v458 = vld [vmem:[%s334 + $0x3c8] sm:$0xff]
        %v459 = vld [vmem:[%s334 + $0x3d0] sm:$0xff]
        %v460 = vld [vmem:[%s334 + $0x3d8] sm:$0xff]
        %v461 = vld [vmem:[%s1] sm:$0xf]
        %v462 = vld [vmem:[%s1 + $0x4] sm:$0xf]
        %v463 = vld [vmem:[%s1 + $0x8] sm:$0xf]
        %v464 = vld [vmem:[%s1 + $0xc] sm:$0xf]
        %v465 = vld [vmem:[%s1 + $0x10] sm:$0xf]
        %v466 = vld [vmem:[%s1 + $0x14] sm:$0xf]
        %v467 = vld [vmem:[%s1 + $0x18] sm:$0xf]
        %v468 = vld [vmem:[%s1 + $0x1c] sm:$0xf]
        %v469 = vld [vmem:[%s1 + $0x20] sm:$0xf]
        %v470 = vld [vmem:[%s1 + $0x24] sm:$0xf]
        %v471 = vld [vmem:[%s1 + $0x28] sm:$0xf]
        %v472 = vld [vmem:[%s1 + $0x2c] sm:$0xf]
        %v473 = vld [vmem:[%s1 + $0x30] sm:$0xf]
        %v474 = vld [vmem:[%s1 + $0x34] sm:$0xf]
        %v475 = vld [vmem:[%s1 + $0x38] sm:$0xf]
        %v476 = vld [vmem:[%s1 + $0x3c] sm:$0xf]
        %v477 = vld [vmem:[%s1 + $0x40] sm:$0xf]
        %v478 = vld [vmem:[%s1 + $0x44] sm:$0xf]
        %v479 = vld [vmem:[%s1 + $0x48] sm:$0xf]
        %v480 = vld [vmem:[%s1 + $0x4c] sm:$0xf]
        %v481 = vld [vmem:[%s1 + $0x50] sm:$0xf]
        %v482 = vld [vmem:[%s1 + $0x54] sm:$0xf]
        %v483 = vld [vmem:[%s1 + $0x58] sm:$0xf]
        %v484 = vld [vmem:[%s1 + $0x5c] sm:$0xf]
        %v485 = vld [vmem:[%s1 + $0x60] sm:$0xf]
        %v486 = vld [vmem:[%s1 + $0x64] sm:$0xf]
        %v487 = vld [vmem:[%s1 + $0x68] sm:$0xf]
        %v488 = vld [vmem:[%s1 + $0x6c] sm:$0xf]
        %v489 = vld [vmem:[%s1 + $0x70] sm:$0xf]
        %v490 = vld [vmem:[%s1 + $0x74] sm:$0xf]
        %v491 = vld [vmem:[%s1 + $0x78] sm:$0xf]
        %v492 = vld [vmem:[%s1 + $0x7c] sm:$0xf]
        %v493 = vld [vmem:[%s1 + $0x80] sm:$0xf]
        %v494 = vld [vmem:[%s1 + $0x84] sm:$0xf]
        %v495 = vld [vmem:[%s1 + $0x88] sm:$0xf]
        %v496 = vld [vmem:[%s1 + $0x8c] sm:$0xf]
        %v497 = vld [vmem:[%s1 + $0x90] sm:$0xf]
        %v498 = vld [vmem:[%s1 + $0x94] sm:$0xf]
        %v499 = vld [vmem:[%s1 + $0x98] sm:$0xf]
        %v500 = vld [vmem:[%s1 + $0x9c] sm:$0xf]
        %v501 = vld [vmem:[%s1 + $0xa0] sm:$0xf]
        %v502 = vld [vmem:[%s1 + $0xa4] sm:$0xf]
        %v503 = vld [vmem:[%s1 + $0xa8] sm:$0xf]
        %v504 = vld [vmem:[%s1 + $0xac] sm:$0xf]
        %v505 = vld [vmem:[%s1 + $0xb0] sm:$0xf]
        %v506 = vld [vmem:[%s1 + $0xb4] sm:$0xf]
        %v507 = vld [vmem:[%s1 + $0xb8] sm:$0xf]
        %v508 = vld [vmem:[%s1 + $0xbc] sm:$0xf]
        %v509 = vld [vmem:[%s1 + $0xc0] sm:$0xf]
        %v510 = vld [vmem:[%s1 + $0xc4] sm:$0xf]
        %v511 = vld [vmem:[%s1 + $0xc8] sm:$0xf]
        %v512 = vld [vmem:[%s1 + $0xcc] sm:$0xf]
        %v513 = vld [vmem:[%s1 + $0xd0] sm:$0xf]
        %v514 = vld [vmem:[%s1 + $0xd4] sm:$0xf]
        %v515 = vld [vmem:[%s1 + $0xd8] sm:$0xf]
        %v516 = vld [vmem:[%s1 + $0xdc] sm:$0xf]
        %v517 = vld [vmem:[%s1 + $0xe0] sm:$0xf]
        %v518 = vld [vmem:[%s1 + $0xe4] sm:$0xf]
        %v519 = vld [vmem:[%s1 + $0xe8] sm:$0xf]
        %v520 = vld [vmem:[%s1 + $0xec] sm:$0xf]
        %v521 = vld [vmem:[%s1 + $0xf0] sm:$0xf]
        %v522 = vld [vmem:[%s1 + $0xf4] sm:$0xf]
        %v523 = vld [vmem:[%s1 + $0xf8] sm:$0xf]
        %v524 = vld [vmem:[%s1 + $0xfc] sm:$0xf]
        %v525 = vld [vmem:[%s1 + $0x100] sm:$0xf]
        %v526 = vld [vmem:[%s1 + $0x104] sm:$0xf]
        %v527 = vld [vmem:[%s1 + $0x108] sm:$0xf]
        %v528 = vld [vmem:[%s1 + $0x10c] sm:$0xf]
        %v529 = vld [vmem:[%s1 + $0x110] sm:$0xf]
        %v530 = vld [vmem:[%s1 + $0x114] sm:$0xf]
        %v531 = vld [vmem:[%s1 + $0x118] sm:$0xf]
        %v532 = vld [vmem:[%s1 + $0x11c] sm:$0xf]
        %v533 = vld [vmem:[%s1 + $0x120] sm:$0xf]
        %v534 = vld [vmem:[%s1 + $0x124] sm:$0xf]
        %v535 = vld [vmem:[%s1 + $0x128] sm:$0xf]
        %v536 = vld [vmem:[%s1 + $0x12c] sm:$0xf]
        %v537 = vld [vmem:[%s1 + $0x130] sm:$0xf]
        %v538 = vld [vmem:[%s1 + $0x134] sm:$0xf]
        %v539 = vld [vmem:[%s1 + $0x138] sm:$0xf]
        %v540 = vld [vmem:[%s1 + $0x13c] sm:$0xf]
        %v541 = vld [vmem:[%s1 + $0x140] sm:$0xf]
        %v542 = vld [vmem:[%s1 + $0x144] sm:$0xf]
        %v543 = vld [vmem:[%s1 + $0x148] sm:$0xf]
        %v544 = vld [vmem:[%s1 + $0x14c] sm:$0xf]
        %v545 = vld [vmem:[%s1 + $0x150] sm:$0xf]
        %v546 = vld [vmem:[%s1 + $0x154] sm:$0xf]
        %v547 = vld [vmem:[%s1 + $0x158] sm:$0xf]
        %v548 = vld [vmem:[%s1 + $0x15c] sm:$0xf]
        %v549 = vld [vmem:[%s1 + $0x160] sm:$0xf]
        %v550 = vld [vmem:[%s1 + $0x164] sm:$0xf]
        %v551 = vld [vmem:[%s1 + $0x168] sm:$0xf]
        %v552 = vld [vmem:[%s1 + $0x16c] sm:$0xf]
        %v553 = vld [vmem:[%s1 + $0x170] sm:$0xf]
        %v554 = vld [vmem:[%s1 + $0x174] sm:$0xf]
        %v555 = vld [vmem:[%s1 + $0x178] sm:$0xf]
        %v556 = vld [vmem:[%s1 + $0x17c] sm:$0xf]
        %v557 = vld [vmem:[%s1 + $0x180] sm:$0xf]
        %v558 = vld [vmem:[%s1 + $0x184] sm:$0xf]
        %v559 = vld [vmem:[%s1 + $0x188] sm:$0xf]
        %v560 = vld [vmem:[%s1 + $0x18c] sm:$0xf]
        %v561 = vld [vmem:[%s1 + $0x190] sm:$0xf]
        %v562 = vld [vmem:[%s1 + $0x194] sm:$0xf]
        %v563 = vld [vmem:[%s1 + $0x198] sm:$0xf]
        %v564 = vld [vmem:[%s1 + $0x19c] sm:$0xf]
        %v565 = vld [vmem:[%s1 + $0x1a0] sm:$0xf]
        %v566 = vld [vmem:[%s1 + $0x1a4] sm:$0xf]
        %v567 = vld [vmem:[%s1 + $0x1a8] sm:$0xf]
        %v568 = vld [vmem:[%s1 + $0x1ac] sm:$0xf]
        %v569 = vld [vmem:[%s1 + $0x1b0] sm:$0xf]
        %v570 = vld [vmem:[%s1 + $0x1b4] sm:$0xf]
        %v571 = vld [vmem:[%s1 + $0x1b8] sm:$0xf]
        %v572 = vld [vmem:[%s1 + $0x1bc] sm:$0xf]
        %v573 = vld [vmem:[%s1 + $0x1c0] sm:$0xf]
        %v574 = vld [vmem:[%s1 + $0x1c4] sm:$0xf]
        %v575 = vld [vmem:[%s1 + $0x1c8] sm:$0xf]
        %v576 = vld [vmem:[%s1 + $0x1cc] sm:$0xf]
        %v577 = vld [vmem:[%s1 + $0x1d0] sm:$0xf]
        %v578 = vld [vmem:[%s1 + $0x1d4] sm:$0xf]
        %v579 = vld [vmem:[%s1 + $0x1d8] sm:$0xf]
        %v580 = vld [vmem:[%s1 + $0x1dc] sm:$0xf]
        %v581 = vld [vmem:[%s2] sm:$0x1]
        %v583 = vperm.slane %v581, 0
        %v709 = vunpack.c.l.b16 %v337
        %v710 = vunpack.c.h.b16 %v337
        %v711 = vunpack.c.l.b16 %v338
        %v712 = vunpack.c.h.b16 %v338
        %v713 = vunpack.c.l.b16 %v339
        %v714 = vunpack.c.h.b16 %v339
        %v715 = vunpack.c.l.b16 %v340
        %v716 = vunpack.c.h.b16 %v340
        %v717 = vunpack.c.l.b16 %v341
        %v718 = vunpack.c.h.b16 %v341
        %v719 = vunpack.c.l.b16 %v342
        %v720 = vunpack.c.h.b16 %v342
        %v721 = vunpack.c.l.b16 %v343
        %v722 = vunpack.c.h.b16 %v343
        %v723 = vunpack.c.l.b16 %v344
        %v724 = vunpack.c.h.b16 %v344
        %v725 = vunpack.c.l.b16 %v345
        %v726 = vunpack.c.h.b16 %v345
        %v727 = vunpack.c.l.b16 %v346
        %v728 = vunpack.c.h.b16 %v346
        %v729 = vunpack.c.l.b16 %v347
        %v730 = vunpack.c.h.b16 %v347
        %v731 = vunpack.c.l.b16 %v348
        %v732 = vunpack.c.h.b16 %v348
        %v733 = vunpack.c.l.b16 %v349
        %v734 = vunpack.c.h.b16 %v349
        %v735 = vunpack.c.l.b16 %v350
        %v736 = vunpack.c.h.b16 %v350
        %v737 = vunpack.c.l.b16 %v351
        %v738 = vunpack.c.h.b16 %v351
        %v739 = vunpack.c.l.b16 %v352
        %v740 = vunpack.c.h.b16 %v352
        %v741 = vunpack.c.l.b16 %v353
        %v742 = vunpack.c.h.b16 %v353
        %v743 = vunpack.c.l.b16 %v354
        %v744 = vunpack.c.h.b16 %v354
        %v745 = vunpack.c.l.b16 %v355
        %v746 = vunpack.c.h.b16 %v355
        %v747 = vunpack.c.l.b16 %v356
        %v748 = vunpack.c.h.b16 %v356
        %v749 = vunpack.c.l.b16 %v357
        %v750 = vunpack.c.h.b16 %v357
        %v751 = vunpack.c.l.b16 %v358
        %v752 = vunpack.c.h.b16 %v358
        %v753 = vunpack.c.l.b16 %v359
        %v754 = vunpack.c.h.b16 %v359
        %v755 = vunpack.c.l.b16 %v360
        %v756 = vunpack.c.h.b16 %v360
        %v757 = vunpack.c.l.b16 %v361
        %v758 = vunpack.c.h.b16 %v361
        %v759 = vunpack.c.l.b16 %v362
        %v760 = vunpack.c.h.b16 %v362
        %v761 = vunpack.c.l.b16 %v363
        %v762 = vunpack.c.h.b16 %v363
        %v763 = vunpack.c.l.b16 %v364
        %v764 = vunpack.c.h.b16 %v364
        %v765 = vunpack.c.l.b16 %v365
        %v766 = vunpack.c.h.b16 %v365
        %v767 = vunpack.c.l.b16 %v366
        %v768 = vunpack.c.h.b16 %v366
        %v769 = vunpack.c.l.b16 %v367
        %v770 = vunpack.c.h.b16 %v367
        %v771 = vunpack.c.l.b16 %v368
        %v772 = vunpack.c.h.b16 %v368
        %v773 = vunpack.c.l.b16 %v369
        %v774 = vunpack.c.h.b16 %v369
        %v775 = vunpack.c.l.b16 %v370
        %v776 = vunpack.c.h.b16 %v370
        %v777 = vunpack.c.l.b16 %v371
        %v778 = vunpack.c.h.b16 %v371
        %v779 = vunpack.c.l.b16 %v372
        %v780 = vunpack.c.h.b16 %v372
        %v781 = vunpack.c.l.b16 %v373
        %v782 = vunpack.c.h.b16 %v373
        %v783 = vunpack.c.l.b16 %v374
        %v784 = vunpack.c.h.b16 %v374
        %v785 = vunpack.c.l.b16 %v375
        %v786 = vunpack.c.h.b16 %v375
        %v787 = vunpack.c.l.b16 %v376
        %v788 = vunpack.c.h.b16 %v376
        %v789 = vunpack.c.l.b16 %v377
        %v790 = vunpack.c.h.b16 %v377
        %v791 = vunpack.c.l.b16 %v378
        %v792 = vunpack.c.h.b16 %v378
        %v793 = vunpack.c.l.b16 %v379
        %v794 = vunpack.c.h.b16 %v379
        %v795 = vunpack.c.l.b16 %v380
        %v796 = vunpack.c.h.b16 %v380
        %v797 = vunpack.c.l.b16 %v381
        %v798 = vunpack.c.h.b16 %v381
        %v799 = vunpack.c.l.b16 %v382
        %v800 = vunpack.c.h.b16 %v382
        %v801 = vunpack.c.l.b16 %v383
        %v802 = vunpack.c.h.b16 %v383
        %v803 = vunpack.c.l.b16 %v384
        %v804 = vunpack.c.h.b16 %v384
        %v805 = vunpack.c.l.b16 %v385
        %v806 = vunpack.c.h.b16 %v385
        %v807 = vunpack.c.l.b16 %v386
        %v808 = vunpack.c.h.b16 %v386
        %v809 = vunpack.c.l.b16 %v387
        %v810 = vunpack.c.h.b16 %v387
        %v811 = vunpack.c.l.b16 %v388
        %v812 = vunpack.c.h.b16 %v388
        %v813 = vunpack.c.l.b16 %v389
        %v814 = vunpack.c.h.b16 %v389
        %v815 = vunpack.c.l.b16 %v390
        %v816 = vunpack.c.h.b16 %v390
        %v817 = vunpack.c.l.b16 %v391
        %v818 = vunpack.c.h.b16 %v391
        %v819 = vunpack.c.l.b16 %v392
        %v820 = vunpack.c.h.b16 %v392
        %v821 = vunpack.c.l.b16 %v393
        %v822 = vunpack.c.h.b16 %v393
        %v823 = vunpack.c.l.b16 %v394
        %v824 = vunpack.c.h.b16 %v394
        %v825 = vunpack.c.l.b16 %v395
        %v826 = vunpack.c.h.b16 %v395
        %v827 = vunpack.c.l.b16 %v396
        %v828 = vunpack.c.h.b16 %v396
        %v829 = vunpack.c.l.b16 %v397
        %v830 = vunpack.c.h.b16 %v397
        %v831 = vunpack.c.l.b16 %v398
        %v832 = vunpack.c.h.b16 %v398
        %v833 = vunpack.c.l.b16 %v399
        %v834 = vunpack.c.h.b16 %v399
        %v835 = vunpack.c.l.b16 %v400
        %v836 = vunpack.c.h.b16 %v400
        %v837 = vunpack.c.l.b16 %v401
        %v838 = vunpack.c.h.b16 %v401
        %v839 = vunpack.c.l.b16 %v402
        %v840 = vunpack.c.h.b16 %v402
        %v841 = vunpack.c.l.b16 %v403
        %v842 = vunpack.c.h.b16 %v403
        %v843 = vunpack.c.l.b16 %v404
        %v844 = vunpack.c.h.b16 %v404
        %v845 = vunpack.c.l.b16 %v405
        %v846 = vunpack.c.h.b16 %v405
        %v847 = vunpack.c.l.b16 %v406
        %v848 = vunpack.c.h.b16 %v406
        %v849 = vunpack.c.l.b16 %v407
        %v850 = vunpack.c.h.b16 %v407
        %v851 = vunpack.c.l.b16 %v408
        %v852 = vunpack.c.h.b16 %v408
        %v853 = vunpack.c.l.b16 %v409
        %v854 = vunpack.c.h.b16 %v409
        %v855 = vunpack.c.l.b16 %v410
        %v856 = vunpack.c.h.b16 %v410
        %v857 = vunpack.c.l.b16 %v411
        %v858 = vunpack.c.h.b16 %v411
        %v859 = vunpack.c.l.b16 %v412
        %v860 = vunpack.c.h.b16 %v412
        %v861 = vunpack.c.l.b16 %v413
        %v862 = vunpack.c.h.b16 %v413
        %v863 = vunpack.c.l.b16 %v414
        %v864 = vunpack.c.h.b16 %v414
        %v865 = vunpack.c.l.b16 %v415
        %v866 = vunpack.c.h.b16 %v415
        %v867 = vunpack.c.l.b16 %v416
        %v868 = vunpack.c.h.b16 %v416
        %v869 = vunpack.c.l.b16 %v417
        %v870 = vunpack.c.h.b16 %v417
        %v871 = vunpack.c.l.b16 %v418
        %v872 = vunpack.c.h.b16 %v418
        %v873 = vunpack.c.l.b16 %v419
        %v874 = vunpack.c.h.b16 %v419
        %v875 = vunpack.c.l.b16 %v420
        %v876 = vunpack.c.h.b16 %v420
        %v877 = vunpack.c.l.b16 %v421
        %v878 = vunpack.c.h.b16 %v421
        %v879 = vunpack.c.l.b16 %v422
        %v880 = vunpack.c.h.b16 %v422
        %v881 = vunpack.c.l.b16 %v423
        %v882 = vunpack.c.h.b16 %v423
        %v883 = vunpack.c.l.b16 %v424
        %v884 = vunpack.c.h.b16 %v424
        %v885 = vunpack.c.l.b16 %v425
        %v886 = vunpack.c.h.b16 %v425
        %v887 = vunpack.c.l.b16 %v426
        %v888 = vunpack.c.h.b16 %v426
        %v889 = vunpack.c.l.b16 %v427
        %v890 = vunpack.c.h.b16 %v427
        %v891 = vunpack.c.l.b16 %v428
        %v892 = vunpack.c.h.b16 %v428
        %v893 = vunpack.c.l.b16 %v429
        %v894 = vunpack.c.h.b16 %v429
        %v895 = vunpack.c.l.b16 %v430
        %v896 = vunpack.c.h.b16 %v430
        %v897 = vunpack.c.l.b16 %v431
        %v898 = vunpack.c.h.b16 %v431
        %v899 = vunpack.c.l.b16 %v432
        %v900 = vunpack.c.h.b16 %v432
        %v901 = vunpack.c.l.b16 %v433
        %v902 = vunpack.c.h.b16 %v433
        %v903 = vunpack.c.l.b16 %v434
        %v904 = vunpack.c.h.b16 %v434
        %v905 = vunpack.c.l.b16 %v435
        %v906 = vunpack.c.h.b16 %v435
        %v907 = vunpack.c.l.b16 %v436
        %v908 = vunpack.c.h.b16 %v436
        %v909 = vunpack.c.l.b16 %v437
        %v910 = vunpack.c.h.b16 %v437
        %v911 = vunpack.c.l.b16 %v438
        %v912 = vunpack.c.h.b16 %v438
        %v913 = vunpack.c.l.b16 %v439
        %v914 = vunpack.c.h.b16 %v439
        %v915 = vunpack.c.l.b16 %v440
        %v916 = vunpack.c.h.b16 %v440
        %v917 = vunpack.c.l.b16 %v441
        %v918 = vunpack.c.h.b16 %v441
        %v919 = vunpack.c.l.b16 %v442
        %v920 = vunpack.c.h.b16 %v442
        %v921 = vunpack.c.l.b16 %v443
        %v922 = vunpack.c.h.b16 %v443
        %v923 = vunpack.c.l.b16 %v444
        %v924 = vunpack.c.h.b16 %v444
        %v925 = vunpack.c.l.b16 %v445
        %v926 = vunpack.c.h.b16 %v445
        %v927 = vunpack.c.l.b16 %v446
        %v928 = vunpack.c.h.b16 %v446
        %v929 = vunpack.c.l.b16 %v447
        %v930 = vunpack.c.h.b16 %v447
        %v931 = vunpack.c.l.b16 %v448
        %v932 = vunpack.c.h.b16 %v448
        %v933 = vunpack.c.l.b16 %v449
        %v934 = vunpack.c.h.b16 %v449
        %v935 = vunpack.c.l.b16 %v450
        %v936 = vunpack.c.h.b16 %v450
        %v937 = vunpack.c.l.b16 %v451
        %v938 = vunpack.c.h.b16 %v451
        %v939 = vunpack.c.l.b16 %v452
        %v940 = vunpack.c.h.b16 %v452
        %v941 = vunpack.c.l.b16 %v453
        %v942 = vunpack.c.h.b16 %v453
        %v943 = vunpack.c.l.b16 %v454
        %v944 = vunpack.c.h.b16 %v454
        %v945 = vunpack.c.l.b16 %v455
        %v946 = vunpack.c.h.b16 %v455
        %v947 = vunpack.c.l.b16 %v456
        %v948 = vunpack.c.h.b16 %v456
        %v949 = vunpack.c.l.b16 %v457
        %v950 = vunpack.c.h.b16 %v457
        %v951 = vunpack.c.l.b16 %v458
        %v952 = vunpack.c.h.b16 %v458
        %v953 = vunpack.c.l.b16 %v459
        %v954 = vunpack.c.h.b16 %v459
        %v955 = vunpack.c.l.b16 %v460
        %v956 = vunpack.c.h.b16 %v460
        %v957 = vpack.c.b16 %v717, %v709
        %v958 = vpack.c.b16 %v718, %v710
        %v959 = vpack.c.b16 %v719, %v711
        %v960 = vpack.c.b16 %v720, %v712
        %v961 = vpack.c.b16 %v721, %v713
        %v962 = vpack.c.b16 %v722, %v714
        %v963 = vpack.c.b16 %v723, %v715
        %v964 = vpack.c.b16 %v724, %v716
        %v965 = vpack.c.b16 %v733, %v725
        %v966 = vpack.c.b16 %v734, %v726
        %v967 = vpack.c.b16 %v735, %v727
        %v968 = vpack.c.b16 %v736, %v728
        %v969 = vpack.c.b16 %v737, %v729
        %v970 = vpack.c.b16 %v738, %v730
        %v971 = vpack.c.b16 %v739, %v731
        %v972 = vpack.c.b16 %v740, %v732
        %v973 = vpack.c.b16 %v749, %v741
        %v974 = vpack.c.b16 %v750, %v742
        %v975 = vpack.c.b16 %v751, %v743
        %v976 = vpack.c.b16 %v752, %v744
        %v977 = vpack.c.b16 %v753, %v745
        %v978 = vpack.c.b16 %v754, %v746
        %v979 = vpack.c.b16 %v755, %v747
        %v980 = vpack.c.b16 %v756, %v748
        %v981 = vpack.c.b16 %v765, %v757
        %v982 = vpack.c.b16 %v766, %v758
        %v983 = vpack.c.b16 %v767, %v759
        %v984 = vpack.c.b16 %v768, %v760
        %v985 = vpack.c.b16 %v769, %v761
        %v986 = vpack.c.b16 %v770, %v762
        %v987 = vpack.c.b16 %v771, %v763
        %v988 = vpack.c.b16 %v772, %v764
        %v989 = vpack.c.b16 %v781, %v773
        %v990 = vpack.c.b16 %v782, %v774
        %v991 = vpack.c.b16 %v783, %v775
        %v992 = vpack.c.b16 %v784, %v776
        %v993 = vpack.c.b16 %v785, %v777
        %v994 = vpack.c.b16 %v786, %v778
        %v995 = vpack.c.b16 %v787, %v779
        %v996 = vpack.c.b16 %v788, %v780
        %v997 = vpack.c.b16 %v797, %v789
        %v998 = vpack.c.b16 %v798, %v790
        %v999 = vpack.c.b16 %v799, %v791
        %v1000 = vpack.c.b16 %v800, %v792
        %v1001 = vpack.c.b16 %v801, %v793
        %v1002 = vpack.c.b16 %v802, %v794
        %v1003 = vpack.c.b16 %v803, %v795
        %v1004 = vpack.c.b16 %v804, %v796
        %v1005 = vpack.c.b16 %v813, %v805
        %v1006 = vpack.c.b16 %v814, %v806
        %v1007 = vpack.c.b16 %v815, %v807
        %v1008 = vpack.c.b16 %v816, %v808
        %v1009 = vpack.c.b16 %v817, %v809
        %v1010 = vpack.c.b16 %v818, %v810
        %v1011 = vpack.c.b16 %v819, %v811
        %v1012 = vpack.c.b16 %v820, %v812
        %v1013 = vpack.c.b16 %v829, %v821
        %v1014 = vpack.c.b16 %v830, %v822
        %v1015 = vpack.c.b16 %v831, %v823
        %v1016 = vpack.c.b16 %v832, %v824
        %v1017 = vpack.c.b16 %v833, %v825
        %v1018 = vpack.c.b16 %v834, %v826
        %v1019 = vpack.c.b16 %v835, %v827
        %v1020 = vpack.c.b16 %v836, %v828
        %v1021 = vpack.c.b16 %v845, %v837
        %v1022 = vpack.c.b16 %v846, %v838
        %v1023 = vpack.c.b16 %v847, %v839
        %v1024 = vpack.c.b16 %v848, %v840
        %v1025 = vpack.c.b16 %v849, %v841
        %v1026 = vpack.c.b16 %v850, %v842
        %v1027 = vpack.c.b16 %v851, %v843
        %v1028 = vpack.c.b16 %v852, %v844
        %v1029 = vpack.c.b16 %v861, %v853
        %v1030 = vpack.c.b16 %v862, %v854
        %v1031 = vpack.c.b16 %v863, %v855
        %v1032 = vpack.c.b16 %v864, %v856
        %v1033 = vpack.c.b16 %v865, %v857
        %v1034 = vpack.c.b16 %v866, %v858
        %v1035 = vpack.c.b16 %v867, %v859
        %v1036 = vpack.c.b16 %v868, %v860
        %v1037 = vpack.c.b16 %v877, %v869
        %v1038 = vpack.c.b16 %v878, %v870
        %v1039 = vpack.c.b16 %v879, %v871
        %v1040 = vpack.c.b16 %v880, %v872
        %v1041 = vpack.c.b16 %v881, %v873
        %v1042 = vpack.c.b16 %v882, %v874
        %v1043 = vpack.c.b16 %v883, %v875
        %v1044 = vpack.c.b16 %v884, %v876
        %v1045 = vpack.c.b16 %v893, %v885
        %v1046 = vpack.c.b16 %v894, %v886
        %v1047 = vpack.c.b16 %v895, %v887
        %v1048 = vpack.c.b16 %v896, %v888
        %v1049 = vpack.c.b16 %v897, %v889
        %v1050 = vpack.c.b16 %v898, %v890
        %v1051 = vpack.c.b16 %v899, %v891
        %v1052 = vpack.c.b16 %v900, %v892
        %v1053 = vpack.c.b16 %v909, %v901
        %v1054 = vpack.c.b16 %v910, %v902
        %v1055 = vpack.c.b16 %v911, %v903
        %v1056 = vpack.c.b16 %v912, %v904
        %v1057 = vpack.c.b16 %v913, %v905
        %v1058 = vpack.c.b16 %v914, %v906
        %v1059 = vpack.c.b16 %v915, %v907
        %v1060 = vpack.c.b16 %v916, %v908
        %v1061 = vpack.c.b16 %v925, %v917
        %v1062 = vpack.c.b16 %v926, %v918
        %v1063 = vpack.c.b16 %v927, %v919
        %v1064 = vpack.c.b16 %v928, %v920
        %v1065 = vpack.c.b16 %v929, %v921
        %v1066 = vpack.c.b16 %v930, %v922
        %v1067 = vpack.c.b16 %v931, %v923
        %v1068 = vpack.c.b16 %v932, %v924
        %v1069 = vpack.c.b16 %v941, %v933
        %v1070 = vpack.c.b16 %v942, %v934
        %v1071 = vpack.c.b16 %v943, %v935
        %v1072 = vpack.c.b16 %v944, %v936
        %v1073 = vpack.c.b16 %v945, %v937
        %v1074 = vpack.c.b16 %v946, %v938
        %v1075 = vpack.c.b16 %v947, %v939
        %v1076 = vpack.c.b16 %v948, %v940
        %v1077 = vpack.c.b16 %v949, %v949
        %v1078 = vpack.c.b16 %v950, %v950
        %v1079 = vpack.c.b16 %v951, %v951
        %v1080 = vpack.c.b16 %v952, %v952
        %v1081 = vpack.c.b16 %v953, %v953
        %v1082 = vpack.c.b16 %v954, %v954
        %v1083 = vpack.c.b16 %v955, %v955
        %v1084 = vpack.c.b16 %v956, %v956
        %v1317 = vunpack.c.l.b16 %v461
        %v1318 = vunpack.c.l.b16 %v462
        %v1319 = vunpack.c.l.b16 %v463
        %v1320 = vunpack.c.l.b16 %v464
        %v1321 = vunpack.c.l.b16 %v465
        %v1322 = vunpack.c.l.b16 %v466
        %v1323 = vunpack.c.l.b16 %v467
        %v1324 = vunpack.c.l.b16 %v468
        %v1325 = vunpack.c.l.b16 %v469
        %v1326 = vunpack.c.l.b16 %v470
        %v1327 = vunpack.c.l.b16 %v471
        %v1328 = vunpack.c.l.b16 %v472
        %v1329 = vunpack.c.l.b16 %v473
        %v1330 = vunpack.c.l.b16 %v474
        %v1331 = vunpack.c.l.b16 %v475
        %v1332 = vunpack.c.l.b16 %v476
        %v1333 = vunpack.c.l.b16 %v477
        %v1334 = vunpack.c.l.b16 %v478
        %v1335 = vunpack.c.l.b16 %v479
        %v1336 = vunpack.c.l.b16 %v480
        %v1337 = vunpack.c.l.b16 %v481
        %v1338 = vunpack.c.l.b16 %v482
        %v1339 = vunpack.c.l.b16 %v483
        %v1340 = vunpack.c.l.b16 %v484
        %v1341 = vunpack.c.l.b16 %v485
        %v1342 = vunpack.c.l.b16 %v486
        %v1343 = vunpack.c.l.b16 %v487
        %v1344 = vunpack.c.l.b16 %v488
        %v1345 = vunpack.c.l.b16 %v489
        %v1346 = vunpack.c.l.b16 %v490
        %v1347 = vunpack.c.l.b16 %v491
        %v1348 = vunpack.c.l.b16 %v492
        %v1349 = vunpack.c.l.b16 %v493
        %v1350 = vunpack.c.l.b16 %v494
        %v1351 = vunpack.c.l.b16 %v495
        %v1352 = vunpack.c.l.b16 %v496
        %v1353 = vunpack.c.l.b16 %v497
        %v1354 = vunpack.c.l.b16 %v498
        %v1355 = vunpack.c.l.b16 %v499
        %v1356 = vunpack.c.l.b16 %v500
        %v1357 = vunpack.c.l.b16 %v501
        %v1358 = vunpack.c.l.b16 %v502
        %v1359 = vunpack.c.l.b16 %v503
        %v1360 = vunpack.c.l.b16 %v504
        %v1361 = vunpack.c.l.b16 %v505
        %v1362 = vunpack.c.l.b16 %v506
        %v1363 = vunpack.c.l.b16 %v507
        %v1364 = vunpack.c.l.b16 %v508
        %v1365 = vunpack.c.l.b16 %v509
        %v1366 = vunpack.c.l.b16 %v510
        %v1367 = vunpack.c.l.b16 %v511
        %v1368 = vunpack.c.l.b16 %v512
        %v1369 = vunpack.c.l.b16 %v513
        %v1370 = vunpack.c.l.b16 %v514
        %v1371 = vunpack.c.l.b16 %v515
        %v1372 = vunpack.c.l.b16 %v516
        %v1373 = vunpack.c.l.b16 %v517
        %v1374 = vunpack.c.l.b16 %v518
        %v1375 = vunpack.c.l.b16 %v519
        %v1376 = vunpack.c.l.b16 %v520
        %v1377 = vunpack.c.l.b16 %v521
        %v1378 = vunpack.c.l.b16 %v522
        %v1379 = vunpack.c.l.b16 %v523
        %v1380 = vunpack.c.l.b16 %v524
        %v1381 = vunpack.c.l.b16 %v525
        %v1382 = vunpack.c.l.b16 %v526
        %v1383 = vunpack.c.l.b16 %v527
        %v1384 = vunpack.c.l.b16 %v528
        %v1385 = vunpack.c.l.b16 %v529
        %v1386 = vunpack.c.l.b16 %v530
        %v1387 = vunpack.c.l.b16 %v531
        %v1388 = vunpack.c.l.b16 %v532
        %v1389 = vunpack.c.l.b16 %v533
        %v1390 = vunpack.c.l.b16 %v534
        %v1391 = vunpack.c.l.b16 %v535
        %v1392 = vunpack.c.l.b16 %v536
        %v1393 = vunpack.c.l.b16 %v537
        %v1394 = vunpack.c.l.b16 %v538
        %v1395 = vunpack.c.l.b16 %v539
        %v1396 = vunpack.c.l.b16 %v540
        %v1397 = vunpack.c.l.b16 %v541
        %v1398 = vunpack.c.l.b16 %v542
        %v1399 = vunpack.c.l.b16 %v543
        %v1400 = vunpack.c.l.b16 %v544
        %v1401 = vunpack.c.l.b16 %v545
        %v1402 = vunpack.c.l.b16 %v546
        %v1403 = vunpack.c.l.b16 %v547
        %v1404 = vunpack.c.l.b16 %v548
        %v1405 = vunpack.c.l.b16 %v549
        %v1406 = vunpack.c.l.b16 %v550
        %v1407 = vunpack.c.l.b16 %v551
        %v1408 = vunpack.c.l.b16 %v552
        %v1409 = vunpack.c.l.b16 %v553
        %v1410 = vunpack.c.l.b16 %v554
        %v1411 = vunpack.c.l.b16 %v555
        %v1412 = vunpack.c.l.b16 %v556
        %v1413 = vunpack.c.l.b16 %v557
        %v1414 = vunpack.c.l.b16 %v558
        %v1415 = vunpack.c.l.b16 %v559
        %v1416 = vunpack.c.l.b16 %v560
        %v1417 = vunpack.c.l.b16 %v561
        %v1418 = vunpack.c.l.b16 %v562
        %v1419 = vunpack.c.l.b16 %v563
        %v1420 = vunpack.c.l.b16 %v564
        %v1421 = vunpack.c.l.b16 %v565
        %v1422 = vunpack.c.l.b16 %v566
        %v1423 = vunpack.c.l.b16 %v567
        %v1424 = vunpack.c.l.b16 %v568
        %v1425 = vunpack.c.l.b16 %v569
        %v1426 = vunpack.c.l.b16 %v570
        %v1427 = vunpack.c.l.b16 %v571
        %v1428 = vunpack.c.l.b16 %v572
        %v1429 = vunpack.c.l.b16 %v573
        %v1430 = vunpack.c.l.b16 %v574
        %v1431 = vunpack.c.l.b16 %v575
        %v1432 = vunpack.c.l.b16 %v576
        %v1433 = vunpack.c.l.b16 %v577
        %v1434 = vunpack.c.l.b16 %v578
        %v1435 = vunpack.c.l.b16 %v579
        %v1436 = vunpack.c.l.b16 %v580
        %v1437 = vpack.c.b16 %v1318, %v1317
        %v1438 = vpack.c.b16 %v1320, %v1319
        %v1439 = vpack.c.b16 %v1322, %v1321
        %v1440 = vpack.c.b16 %v1324, %v1323
        %v1441 = vpack.c.b16 %v1326, %v1325
        %v1442 = vpack.c.b16 %v1328, %v1327
        %v1443 = vpack.c.b16 %v1330, %v1329
        %v1444 = vpack.c.b16 %v1332, %v1331
        %v1445 = vpack.c.b16 %v1334, %v1333
        %v1446 = vpack.c.b16 %v1336, %v1335
        %v1447 = vpack.c.b16 %v1338, %v1337
        %v1448 = vpack.c.b16 %v1340, %v1339
        %v1449 = vpack.c.b16 %v1342, %v1341
        %v1450 = vpack.c.b16 %v1344, %v1343
        %v1451 = vpack.c.b16 %v1346, %v1345
        %v1452 = vpack.c.b16 %v1348, %v1347
        %v1453 = vpack.c.b16 %v1350, %v1349
        %v1454 = vpack.c.b16 %v1352, %v1351
        %v1455 = vpack.c.b16 %v1354, %v1353
        %v1456 = vpack.c.b16 %v1356, %v1355
        %v1457 = vpack.c.b16 %v1358, %v1357
        %v1458 = vpack.c.b16 %v1360, %v1359
        %v1459 = vpack.c.b16 %v1362, %v1361
        %v1460 = vpack.c.b16 %v1364, %v1363
        %v1461 = vpack.c.b16 %v1366, %v1365
        %v1462 = vpack.c.b16 %v1368, %v1367
        %v1463 = vpack.c.b16 %v1370, %v1369
        %v1464 = vpack.c.b16 %v1372, %v1371
        %v1465 = vpack.c.b16 %v1374, %v1373
        %v1466 = vpack.c.b16 %v1376, %v1375
        %v1467 = vpack.c.b16 %v1378, %v1377
        %v1468 = vpack.c.b16 %v1380, %v1379
        %v1469 = vpack.c.b16 %v1382, %v1381
        %v1470 = vpack.c.b16 %v1384, %v1383
        %v1471 = vpack.c.b16 %v1386, %v1385
        %v1472 = vpack.c.b16 %v1388, %v1387
        %v1473 = vpack.c.b16 %v1390, %v1389
        %v1474 = vpack.c.b16 %v1392, %v1391
        %v1475 = vpack.c.b16 %v1394, %v1393
        %v1476 = vpack.c.b16 %v1396, %v1395
        %v1477 = vpack.c.b16 %v1398, %v1397
        %v1478 = vpack.c.b16 %v1400, %v1399
        %v1479 = vpack.c.b16 %v1402, %v1401
        %v1480 = vpack.c.b16 %v1404, %v1403
        %v1481 = vpack.c.b16 %v1406, %v1405
        %v1482 = vpack.c.b16 %v1408, %v1407
        %v1483 = vpack.c.b16 %v1410, %v1409
        %v1484 = vpack.c.b16 %v1412, %v1411
        %v1485 = vpack.c.b16 %v1414, %v1413
        %v1486 = vpack.c.b16 %v1416, %v1415
        %v1487 = vpack.c.b16 %v1418, %v1417
        %v1488 = vpack.c.b16 %v1420, %v1419
        %v1489 = vpack.c.b16 %v1422, %v1421
        %v1490 = vpack.c.b16 %v1424, %v1423
        %v1491 = vpack.c.b16 %v1426, %v1425
        %v1492 = vpack.c.b16 %v1428, %v1427
        %v1493 = vpack.c.b16 %v1430, %v1429
        %v1494 = vpack.c.b16 %v1432, %v1431
        %v1495 = vpack.c.b16 %v1434, %v1433
        %v1496 = vpack.c.b16 %v1436, %v1435
        %vm1557 = vcmask 523264
        %v1559 = vsel %vm1557, %v964, 0
        %v1562 = vsel %vm1557, %v972, 0
        %v1565 = vsel %vm1557, %v980, 0
        %v1568 = vsel %vm1557, %v988, 0
        %v1571 = vsel %vm1557, %v996, 0
        %v1574 = vsel %vm1557, %v1004, 0
        %v1577 = vsel %vm1557, %v1012, 0
        %v1580 = vsel %vm1557, %v1020, 0
        %v1583 = vsel %vm1557, %v1028, 0
        %v1586 = vsel %vm1557, %v1036, 0
        %v1589 = vsel %vm1557, %v1044, 0
        %v1592 = vsel %vm1557, %v1052, 0
        %v1595 = vsel %vm1557, %v1060, 0
        %v1598 = vsel %vm1557, %v1068, 0
        %v1601 = vsel %vm1557, %v1076, 0
        %v1604 = vsel %vm1557, %v1084, 0
        %1606 = vmatpush.bf16.msra.mxu0 %v1444
        %1607 = vmatpush.bf16.msra.mxu0 %v1443
        %1608 = vmatpush.bf16.msra.mxu0 %v1442
        %1609 = vmatpush.bf16.msra.mxu0 %v1441
        %1610 = vmatpush.bf16.msra.mxu0 %v1440
        %1611 = vmatpush.bf16.msra.mxu0 %v1439
        %1612 = vmatpush.bf16.msra.mxu0 %v1438
        %1613 = vmatpush.bf16.msra.mxu0 %v1437
        %1614 = vmatmul.bf16.gmra.mxu0 %v957
        %v1615 = vpop.f32.mrf.mxu0
        %v1616 = vadd.f32 %v583, %v1615
        %v1617 = vpop.f32.mrf.mxu0
        %v1618 = vadd.f32 %v583, %v1617
        %1619 = vmatmul.bf16.gmra.mxu0 %v965
        %v1620 = vpop.f32.mrf.mxu0
        %v1621 = vadd.f32 %v583, %v1620
        %v1622 = vpop.f32.mrf.mxu0
        %v1623 = vadd.f32 %v583, %v1622
        %1624 = vmatmul.bf16.gmra.mxu0 %v973
        %v1625 = vpop.f32.mrf.mxu0
        %v1626 = vadd.f32 %v583, %v1625
        %v1627 = vpop.f32.mrf.mxu0
        %v1628 = vadd.f32 %v583, %v1627
        %1629 = vmatmul.bf16.gmra.mxu0 %v981
        %v1630 = vpop.f32.mrf.mxu0
        %v1631 = vadd.f32 %v583, %v1630
        %v1632 = vpop.f32.mrf.mxu0
        %v1633 = vadd.f32 %v583, %v1632
        %1634 = vmatmul.bf16.gmra.mxu0 %v989
        %v1635 = vpop.f32.mrf.mxu0
        %v1636 = vadd.f32 %v583, %v1635
        %v1637 = vpop.f32.mrf.mxu0
        %v1638 = vadd.f32 %v583, %v1637
        %1639 = vmatmul.bf16.gmra.mxu0 %v997
        %v1640 = vpop.f32.mrf.mxu0
        %v1641 = vadd.f32 %v583, %v1640
        %v1642 = vpop.f32.mrf.mxu0
        %v1643 = vadd.f32 %v583, %v1642
        %1644 = vmatmul.bf16.gmra.mxu0 %v1005
        %v1645 = vpop.f32.mrf.mxu0
        %v1646 = vadd.f32 %v583, %v1645
        %v1647 = vpop.f32.mrf.mxu0
        %v1648 = vadd.f32 %v583, %v1647
        %1649 = vmatmul.bf16.gmra.mxu0 %v1013
        %v1650 = vpop.f32.mrf.mxu0
        %v1651 = vadd.f32 %v583, %v1650
        %v1652 = vpop.f32.mrf.mxu0
        %v1653 = vadd.f32 %v583, %v1652
        %1654 = vmatmul.bf16.gmra.mxu0 %v1021
        %v1655 = vpop.f32.mrf.mxu0
        %v1656 = vadd.f32 %v583, %v1655
        %v1657 = vpop.f32.mrf.mxu0
        %v1658 = vadd.f32 %v583, %v1657
        %1659 = vmatmul.bf16.gmra.mxu0 %v1029
        %v1660 = vpop.f32.mrf.mxu0
        %v1661 = vadd.f32 %v583, %v1660
        %v1662 = vpop.f32.mrf.mxu0
        %v1663 = vadd.f32 %v583, %v1662
        %1664 = vmatmul.bf16.gmra.mxu0 %v1037
        %v1665 = vpop.f32.mrf.mxu0
        %v1666 = vadd.f32 %v583, %v1665
        %v1667 = vpop.f32.mrf.mxu0
        %v1668 = vadd.f32 %v583, %v1667
        %1669 = vmatmul.bf16.gmra.mxu0 %v1045
        %v1670 = vpop.f32.mrf.mxu0
        %v1671 = vadd.f32 %v583, %v1670
        %v1672 = vpop.f32.mrf.mxu0
        %v1673 = vadd.f32 %v583, %v1672
        %1674 = vmatmul.bf16.gmra.mxu0 %v1053
        %v1675 = vpop.f32.mrf.mxu0
        %v1676 = vadd.f32 %v583, %v1675
        %v1677 = vpop.f32.mrf.mxu0
        %v1678 = vadd.f32 %v583, %v1677
        %1679 = vmatmul.bf16.gmra.mxu0 %v1061
        %v1680 = vpop.f32.mrf.mxu0
        %v1681 = vadd.f32 %v583, %v1680
        %v1682 = vpop.f32.mrf.mxu0
        %v1683 = vadd.f32 %v583, %v1682
        %1684 = vmatmul.bf16.gmra.mxu0 %v1069
        %v1685 = vpop.f32.mrf.mxu0
        %v1686 = vadd.f32 %v583, %v1685
        %v1687 = vpop.f32.mrf.mxu0
        %v1688 = vadd.f32 %v583, %v1687
        %1689 = vmatmul.bf16.gmra.mxu0 %v1077
        %v1690 = vpop.f32.mrf.mxu0
        %v1691 = vadd.f32 %v583, %v1690
        %v1692 = vpop.f32.mrf.mxu0
        %1693 = vdwg.mxu0
        %1694 = vmatpush.bf16.msra.mxu0 %v1452
        %1695 = vmatpush.bf16.msra.mxu0 %v1451
        %1696 = vmatpush.bf16.msra.mxu0 %v1450
        %1697 = vmatpush.bf16.msra.mxu0 %v1449
        %1698 = vmatpush.bf16.msra.mxu0 %v1448
        %1699 = vmatpush.bf16.msra.mxu0 %v1447
        %1700 = vmatpush.bf16.msra.mxu0 %v1446
        %1701 = vmatpush.bf16.msra.mxu0 %v1445
        %1702 = vmatmul.bf16.gmra.mxu0 %v958
        %v1703 = vpop.f32.mrf.mxu0
        %v1704 = vadd.f32 %v1616, %v1703
        %v1705 = vpop.f32.mrf.mxu0
        %v1706 = vadd.f32 %v1618, %v1705
        %1707 = vmatmul.bf16.gmra.mxu0 %v966
        %v1708 = vpop.f32.mrf.mxu0
        %v1709 = vadd.f32 %v1621, %v1708
        %v1710 = vpop.f32.mrf.mxu0
        %v1711 = vadd.f32 %v1623, %v1710
        %1712 = vmatmul.bf16.gmra.mxu0 %v974
        %v1713 = vpop.f32.mrf.mxu0
        %v1714 = vadd.f32 %v1626, %v1713
        %v1715 = vpop.f32.mrf.mxu0
        %v1716 = vadd.f32 %v1628, %v1715
        %1717 = vmatmul.bf16.gmra.mxu0 %v982
        %v1718 = vpop.f32.mrf.mxu0
        %v1719 = vadd.f32 %v1631, %v1718
        %v1720 = vpop.f32.mrf.mxu0
        %v1721 = vadd.f32 %v1633, %v1720
        %1722 = vmatmul.bf16.gmra.mxu0 %v990
        %v1723 = vpop.f32.mrf.mxu0
        %v1724 = vadd.f32 %v1636, %v1723
        %v1725 = vpop.f32.mrf.mxu0
        %v1726 = vadd.f32 %v1638, %v1725
        %1727 = vmatmul.bf16.gmra.mxu0 %v998
        %v1728 = vpop.f32.mrf.mxu0
        %v1729 = vadd.f32 %v1641, %v1728
        %v1730 = vpop.f32.mrf.mxu0
        %v1731 = vadd.f32 %v1643, %v1730
        %1732 = vmatmul.bf16.gmra.mxu0 %v1006
        %v1733 = vpop.f32.mrf.mxu0
        %v1734 = vadd.f32 %v1646, %v1733
        %v1735 = vpop.f32.mrf.mxu0
        %v1736 = vadd.f32 %v1648, %v1735
        %1737 = vmatmul.bf16.gmra.mxu0 %v1014
        %v1738 = vpop.f32.mrf.mxu0
        %v1739 = vadd.f32 %v1651, %v1738
        %v1740 = vpop.f32.mrf.mxu0
        %v1741 = vadd.f32 %v1653, %v1740
        %1742 = vmatmul.bf16.gmra.mxu0 %v1022
        %v1743 = vpop.f32.mrf.mxu0
        %v1744 = vadd.f32 %v1656, %v1743
        %v1745 = vpop.f32.mrf.mxu0
        %v1746 = vadd.f32 %v1658, %v1745
        %1747 = vmatmul.bf16.gmra.mxu0 %v1030
        %v1748 = vpop.f32.mrf.mxu0
        %v1749 = vadd.f32 %v1661, %v1748
        %v1750 = vpop.f32.mrf.mxu0
        %v1751 = vadd.f32 %v1663, %v1750
        %1752 = vmatmul.bf16.gmra.mxu0 %v1038
        %v1753 = vpop.f32.mrf.mxu0
        %v1754 = vadd.f32 %v1666, %v1753
        %v1755 = vpop.f32.mrf.mxu0
        %v1756 = vadd.f32 %v1668, %v1755
        %1757 = vmatmul.bf16.gmra.mxu0 %v1046
        %v1758 = vpop.f32.mrf.mxu0
        %v1759 = vadd.f32 %v1671, %v1758
        %v1760 = vpop.f32.mrf.mxu0
        %v1761 = vadd.f32 %v1673, %v1760
        %1762 = vmatmul.bf16.gmra.mxu0 %v1054
        %v1763 = vpop.f32.mrf.mxu0
        %v1764 = vadd.f32 %v1676, %v1763
        %v1765 = vpop.f32.mrf.mxu0
        %v1766 = vadd.f32 %v1678, %v1765
        %1767 = vmatmul.bf16.gmra.mxu0 %v1062
        %v1768 = vpop.f32.mrf.mxu0
        %v1769 = vadd.f32 %v1681, %v1768
        %v1770 = vpop.f32.mrf.mxu0
        %v1771 = vadd.f32 %v1683, %v1770
        %1772 = vmatmul.bf16.gmra.mxu0 %v1070
        %v1773 = vpop.f32.mrf.mxu0
        %v1774 = vadd.f32 %v1686, %v1773
        %v1775 = vpop.f32.mrf.mxu0
        %v1776 = vadd.f32 %v1688, %v1775
        %1777 = vmatmul.bf16.gmra.mxu0 %v1078
        %v1778 = vpop.f32.mrf.mxu0
        %v1779 = vadd.f32 %v1691, %v1778
        %v1780 = vpop.f32.mrf.mxu0
        %1781 = vdwg.mxu0
        %1782 = vmatpush.bf16.msra.mxu0 %v1460
        %1783 = vmatpush.bf16.msra.mxu0 %v1459
        %1784 = vmatpush.bf16.msra.mxu0 %v1458
        %1785 = vmatpush.bf16.msra.mxu0 %v1457
        %1786 = vmatpush.bf16.msra.mxu0 %v1456
        %1787 = vmatpush.bf16.msra.mxu0 %v1455
        %1788 = vmatpush.bf16.msra.mxu0 %v1454
        %1789 = vmatpush.bf16.msra.mxu0 %v1453
        %1790 = vmatmul.bf16.gmra.mxu0 %v959
        %v1791 = vpop.f32.mrf.mxu0
        %v1792 = vadd.f32 %v1704, %v1791
        %v1793 = vpop.f32.mrf.mxu0
        %v1794 = vadd.f32 %v1706, %v1793
        %1795 = vmatmul.bf16.gmra.mxu0 %v967
        %v1796 = vpop.f32.mrf.mxu0
        %v1797 = vadd.f32 %v1709, %v1796
        %v1798 = vpop.f32.mrf.mxu0
        %v1799 = vadd.f32 %v1711, %v1798
        %1800 = vmatmul.bf16.gmra.mxu0 %v975
        %v1801 = vpop.f32.mrf.mxu0
        %v1802 = vadd.f32 %v1714, %v1801
        %v1803 = vpop.f32.mrf.mxu0
        %v1804 = vadd.f32 %v1716, %v1803
        %1805 = vmatmul.bf16.gmra.mxu0 %v983
        %v1806 = vpop.f32.mrf.mxu0
        %v1807 = vadd.f32 %v1719, %v1806
        %v1808 = vpop.f32.mrf.mxu0
        %v1809 = vadd.f32 %v1721, %v1808
        %1810 = vmatmul.bf16.gmra.mxu0 %v991
        %v1811 = vpop.f32.mrf.mxu0
        %v1812 = vadd.f32 %v1724, %v1811
        %v1813 = vpop.f32.mrf.mxu0
        %v1814 = vadd.f32 %v1726, %v1813
        %1815 = vmatmul.bf16.gmra.mxu0 %v999
        %v1816 = vpop.f32.mrf.mxu0
        %v1817 = vadd.f32 %v1729, %v1816
        %v1818 = vpop.f32.mrf.mxu0
        %v1819 = vadd.f32 %v1731, %v1818
        %1820 = vmatmul.bf16.gmra.mxu0 %v1007
        %v1821 = vpop.f32.mrf.mxu0
        %v1822 = vadd.f32 %v1734, %v1821
        %v1823 = vpop.f32.mrf.mxu0
        %v1824 = vadd.f32 %v1736, %v1823
        %1825 = vmatmul.bf16.gmra.mxu0 %v1015
        %v1826 = vpop.f32.mrf.mxu0
        %v1827 = vadd.f32 %v1739, %v1826
        %v1828 = vpop.f32.mrf.mxu0
        %v1829 = vadd.f32 %v1741, %v1828
        %1830 = vmatmul.bf16.gmra.mxu0 %v1023
        %v1831 = vpop.f32.mrf.mxu0
        %v1832 = vadd.f32 %v1744, %v1831
        %v1833 = vpop.f32.mrf.mxu0
        %v1834 = vadd.f32 %v1746, %v1833
        %1835 = vmatmul.bf16.gmra.mxu0 %v1031
        %v1836 = vpop.f32.mrf.mxu0
        %v1837 = vadd.f32 %v1749, %v1836
        %v1838 = vpop.f32.mrf.mxu0
        %v1839 = vadd.f32 %v1751, %v1838
        %1840 = vmatmul.bf16.gmra.mxu0 %v1039
        %v1841 = vpop.f32.mrf.mxu0
        %v1842 = vadd.f32 %v1754, %v1841
        %v1843 = vpop.f32.mrf.mxu0
        %v1844 = vadd.f32 %v1756, %v1843
        %1845 = vmatmul.bf16.gmra.mxu0 %v1047
        %v1846 = vpop.f32.mrf.mxu0
        %v1847 = vadd.f32 %v1759, %v1846
        %v1848 = vpop.f32.mrf.mxu0
        %v1849 = vadd.f32 %v1761, %v1848
        %1850 = vmatmul.bf16.gmra.mxu0 %v1055
        %v1851 = vpop.f32.mrf.mxu0
        %v1852 = vadd.f32 %v1764, %v1851
        %v1853 = vpop.f32.mrf.mxu0
        %v1854 = vadd.f32 %v1766, %v1853
        %1855 = vmatmul.bf16.gmra.mxu0 %v1063
        %v1856 = vpop.f32.mrf.mxu0
        %v1857 = vadd.f32 %v1769, %v1856
        %v1858 = vpop.f32.mrf.mxu0
        %v1859 = vadd.f32 %v1771, %v1858
        %1860 = vmatmul.bf16.gmra.mxu0 %v1071
        %v1861 = vpop.f32.mrf.mxu0
        %v1862 = vadd.f32 %v1774, %v1861
        %v1863 = vpop.f32.mrf.mxu0
        %v1864 = vadd.f32 %v1776, %v1863
        %1865 = vmatmul.bf16.gmra.mxu0 %v1079
        %v1866 = vpop.f32.mrf.mxu0
        %v1867 = vadd.f32 %v1779, %v1866
        %v1868 = vpop.f32.mrf.mxu0
        %1869 = vdwg.mxu0
        %1870 = vmatpush.bf16.msra.mxu0 %v1468
        %1871 = vmatpush.bf16.msra.mxu0 %v1467
        %1872 = vmatpush.bf16.msra.mxu0 %v1466
        %1873 = vmatpush.bf16.msra.mxu0 %v1465
        %1874 = vmatpush.bf16.msra.mxu0 %v1464
        %1875 = vmatpush.bf16.msra.mxu0 %v1463
        %1876 = vmatpush.bf16.msra.mxu0 %v1462
        %1877 = vmatpush.bf16.msra.mxu0 %v1461
        %1878 = vmatmul.bf16.gmra.mxu0 %v960
        %v1879 = vpop.f32.mrf.mxu0
        %v1880 = vadd.f32 %v1792, %v1879
        %v1881 = vpop.f32.mrf.mxu0
        %v1882 = vadd.f32 %v1794, %v1881
        %1883 = vmatmul.bf16.gmra.mxu0 %v968
        %v1884 = vpop.f32.mrf.mxu0
        %v1885 = vadd.f32 %v1797, %v1884
        %v1886 = vpop.f32.mrf.mxu0
        %v1887 = vadd.f32 %v1799, %v1886
        %1888 = vmatmul.bf16.gmra.mxu0 %v976
        %v1889 = vpop.f32.mrf.mxu0
        %v1890 = vadd.f32 %v1802, %v1889
        %v1891 = vpop.f32.mrf.mxu0
        %v1892 = vadd.f32 %v1804, %v1891
        %1893 = vmatmul.bf16.gmra.mxu0 %v984
        %v1894 = vpop.f32.mrf.mxu0
        %v1895 = vadd.f32 %v1807, %v1894
        %v1896 = vpop.f32.mrf.mxu0
        %v1897 = vadd.f32 %v1809, %v1896
        %1898 = vmatmul.bf16.gmra.mxu0 %v992
        %v1899 = vpop.f32.mrf.mxu0
        %v1900 = vadd.f32 %v1812, %v1899
        %v1901 = vpop.f32.mrf.mxu0
        %v1902 = vadd.f32 %v1814, %v1901
        %1903 = vmatmul.bf16.gmra.mxu0 %v1000
        %v1904 = vpop.f32.mrf.mxu0
        %v1905 = vadd.f32 %v1817, %v1904
        %v1906 = vpop.f32.mrf.mxu0
        %v1907 = vadd.f32 %v1819, %v1906
        %1908 = vmatmul.bf16.gmra.mxu0 %v1008
        %v1909 = vpop.f32.mrf.mxu0
        %v1910 = vadd.f32 %v1822, %v1909
        %v1911 = vpop.f32.mrf.mxu0
        %v1912 = vadd.f32 %v1824, %v1911
        %1913 = vmatmul.bf16.gmra.mxu0 %v1016
        %v1914 = vpop.f32.mrf.mxu0
        %v1915 = vadd.f32 %v1827, %v1914
        %v1916 = vpop.f32.mrf.mxu0
        %v1917 = vadd.f32 %v1829, %v1916
        %1918 = vmatmul.bf16.gmra.mxu0 %v1024
        %v1919 = vpop.f32.mrf.mxu0
        %v1920 = vadd.f32 %v1832, %v1919
        %v1921 = vpop.f32.mrf.mxu0
        %v1922 = vadd.f32 %v1834, %v1921
        %1923 = vmatmul.bf16.gmra.mxu0 %v1032
        %v1924 = vpop.f32.mrf.mxu0
        %v1925 = vadd.f32 %v1837, %v1924
        %v1926 = vpop.f32.mrf.mxu0
        %v1927 = vadd.f32 %v1839, %v1926
        %1928 = vmatmul.bf16.gmra.mxu0 %v1040
        %v1929 = vpop.f32.mrf.mxu0
        %v1930 = vadd.f32 %v1842, %v1929
        %v1931 = vpop.f32.mrf.mxu0
        %v1932 = vadd.f32 %v1844, %v1931
        %1933 = vmatmul.bf16.gmra.mxu0 %v1048
        %v1934 = vpop.f32.mrf.mxu0
        %v1935 = vadd.f32 %v1847, %v1934
        %v1936 = vpop.f32.mrf.mxu0
        %v1937 = vadd.f32 %v1849, %v1936
        %1938 = vmatmul.bf16.gmra.mxu0 %v1056
        %v1939 = vpop.f32.mrf.mxu0
        %v1940 = vadd.f32 %v1852, %v1939
        %v1941 = vpop.f32.mrf.mxu0
        %v1942 = vadd.f32 %v1854, %v1941
        %1943 = vmatmul.bf16.gmra.mxu0 %v1064
        %v1944 = vpop.f32.mrf.mxu0
        %v1945 = vadd.f32 %v1857, %v1944
        %v1946 = vpop.f32.mrf.mxu0
        %v1947 = vadd.f32 %v1859, %v1946
        %1948 = vmatmul.bf16.gmra.mxu0 %v1072
        %v1949 = vpop.f32.mrf.mxu0
        %v1950 = vadd.f32 %v1862, %v1949
        %v1951 = vpop.f32.mrf.mxu0
        %v1952 = vadd.f32 %v1864, %v1951
        %1953 = vmatmul.bf16.gmra.mxu0 %v1080
        %v1954 = vpop.f32.mrf.mxu0
        %v1955 = vadd.f32 %v1867, %v1954
        %v1956 = vpop.f32.mrf.mxu0
        %1957 = vdwg.mxu0
        %1958 = vmatpush.bf16.msra.mxu0 %v1476
        %1959 = vmatpush.bf16.msra.mxu0 %v1475
        %1960 = vmatpush.bf16.msra.mxu0 %v1474
        %1961 = vmatpush.bf16.msra.mxu0 %v1473
        %1962 = vmatpush.bf16.msra.mxu0 %v1472
        %1963 = vmatpush.bf16.msra.mxu0 %v1471
        %1964 = vmatpush.bf16.msra.mxu0 %v1470
        %1965 = vmatpush.bf16.msra.mxu0 %v1469
        %1966 = vmatmul.bf16.gmra.mxu0 %v961
        %v1967 = vpop.f32.mrf.mxu0
        %v1968 = vadd.f32 %v1880, %v1967
        %v1969 = vpop.f32.mrf.mxu0
        %v1970 = vadd.f32 %v1882, %v1969
        %1971 = vmatmul.bf16.gmra.mxu0 %v969
        %v1972 = vpop.f32.mrf.mxu0
        %v1973 = vadd.f32 %v1885, %v1972
        %v1974 = vpop.f32.mrf.mxu0
        %v1975 = vadd.f32 %v1887, %v1974
        %1976 = vmatmul.bf16.gmra.mxu0 %v977
        %v1977 = vpop.f32.mrf.mxu0
        %v1978 = vadd.f32 %v1890, %v1977
        %v1979 = vpop.f32.mrf.mxu0
        %v1980 = vadd.f32 %v1892, %v1979
        %1981 = vmatmul.bf16.gmra.mxu0 %v985
        %v1982 = vpop.f32.mrf.mxu0
        %v1983 = vadd.f32 %v1895, %v1982
        %v1984 = vpop.f32.mrf.mxu0
        %v1985 = vadd.f32 %v1897, %v1984
        %1986 = vmatmul.bf16.gmra.mxu0 %v993
        %v1987 = vpop.f32.mrf.mxu0
        %v1988 = vadd.f32 %v1900, %v1987
        %v1989 = vpop.f32.mrf.mxu0
        %v1990 = vadd.f32 %v1902, %v1989
        %1991 = vmatmul.bf16.gmra.mxu0 %v1001
        %v1992 = vpop.f32.mrf.mxu0
        %v1993 = vadd.f32 %v1905, %v1992
        %v1994 = vpop.f32.mrf.mxu0
        %v1995 = vadd.f32 %v1907, %v1994
        %1996 = vmatmul.bf16.gmra.mxu0 %v1009
        %v1997 = vpop.f32.mrf.mxu0
        %v1998 = vadd.f32 %v1910, %v1997
        %v1999 = vpop.f32.mrf.mxu0
        %v2000 = vadd.f32 %v1912, %v1999
        %2001 = vmatmul.bf16.gmra.mxu0 %v1017
        %v2002 = vpop.f32.mrf.mxu0
        %v2003 = vadd.f32 %v1915, %v2002
        %v2004 = vpop.f32.mrf.mxu0
        %v2005 = vadd.f32 %v1917, %v2004
        %2006 = vmatmul.bf16.gmra.mxu0 %v1025
        %v2007 = vpop.f32.mrf.mxu0
        %v2008 = vadd.f32 %v1920, %v2007
        %v2009 = vpop.f32.mrf.mxu0
        %v2010 = vadd.f32 %v1922, %v2009
        %2011 = vmatmul.bf16.gmra.mxu0 %v1033
        %v2012 = vpop.f32.mrf.mxu0
        %v2013 = vadd.f32 %v1925, %v2012
        %v2014 = vpop.f32.mrf.mxu0
        %v2015 = vadd.f32 %v1927, %v2014
        %2016 = vmatmul.bf16.gmra.mxu0 %v1041
        %v2017 = vpop.f32.mrf.mxu0
        %v2018 = vadd.f32 %v1930, %v2017
        %v2019 = vpop.f32.mrf.mxu0
        %v2020 = vadd.f32 %v1932, %v2019
        %2021 = vmatmul.bf16.gmra.mxu0 %v1049
        %v2022 = vpop.f32.mrf.mxu0
        %v2023 = vadd.f32 %v1935, %v2022
        %v2024 = vpop.f32.mrf.mxu0
        %v2025 = vadd.f32 %v1937, %v2024
        %2026 = vmatmul.bf16.gmra.mxu0 %v1057
        %v2027 = vpop.f32.mrf.mxu0
        %v2028 = vadd.f32 %v1940, %v2027
        %v2029 = vpop.f32.mrf.mxu0
        %v2030 = vadd.f32 %v1942, %v2029
        %2031 = vmatmul.bf16.gmra.mxu0 %v1065
        %v2032 = vpop.f32.mrf.mxu0
        %v2033 = vadd.f32 %v1945, %v2032
        %v2034 = vpop.f32.mrf.mxu0
        %v2035 = vadd.f32 %v1947, %v2034
        %2036 = vmatmul.bf16.gmra.mxu0 %v1073
        %v2037 = vpop.f32.mrf.mxu0
        %v2038 = vadd.f32 %v1950, %v2037
        %v2039 = vpop.f32.mrf.mxu0
        %v2040 = vadd.f32 %v1952, %v2039
        %2041 = vmatmul.bf16.gmra.mxu0 %v1081
        %v2042 = vpop.f32.mrf.mxu0
        %v2043 = vadd.f32 %v1955, %v2042
        %v2044 = vpop.f32.mrf.mxu0
        %2045 = vdwg.mxu0
        %2046 = vmatpush.bf16.msra.mxu0 %v1484
        %2047 = vmatpush.bf16.msra.mxu0 %v1483
        %2048 = vmatpush.bf16.msra.mxu0 %v1482
        %2049 = vmatpush.bf16.msra.mxu0 %v1481
        %2050 = vmatpush.bf16.msra.mxu0 %v1480
        %2051 = vmatpush.bf16.msra.mxu0 %v1479
        %2052 = vmatpush.bf16.msra.mxu0 %v1478
        %2053 = vmatpush.bf16.msra.mxu0 %v1477
        %2054 = vmatmul.bf16.gmra.mxu0 %v962
        %v2055 = vpop.f32.mrf.mxu0
        %v2056 = vadd.f32 %v1968, %v2055
        %v2057 = vpop.f32.mrf.mxu0
        %v2058 = vadd.f32 %v1970, %v2057
        %2059 = vmatmul.bf16.gmra.mxu0 %v970
        %v2060 = vpop.f32.mrf.mxu0
        %v2061 = vadd.f32 %v1973, %v2060
        %v2062 = vpop.f32.mrf.mxu0
        %v2063 = vadd.f32 %v1975, %v2062
        %2064 = vmatmul.bf16.gmra.mxu0 %v978
        %v2065 = vpop.f32.mrf.mxu0
        %v2066 = vadd.f32 %v1978, %v2065
        %v2067 = vpop.f32.mrf.mxu0
        %v2068 = vadd.f32 %v1980, %v2067
        %2069 = vmatmul.bf16.gmra.mxu0 %v986
        %v2070 = vpop.f32.mrf.mxu0
        %v2071 = vadd.f32 %v1983, %v2070
        %v2072 = vpop.f32.mrf.mxu0
        %v2073 = vadd.f32 %v1985, %v2072
        %2074 = vmatmul.bf16.gmra.mxu0 %v994
        %v2075 = vpop.f32.mrf.mxu0
        %v2076 = vadd.f32 %v1988, %v2075
        %v2077 = vpop.f32.mrf.mxu0
        %v2078 = vadd.f32 %v1990, %v2077
        %2079 = vmatmul.bf16.gmra.mxu0 %v1002
        %v2080 = vpop.f32.mrf.mxu0
        %v2081 = vadd.f32 %v1993, %v2080
        %v2082 = vpop.f32.mrf.mxu0
        %v2083 = vadd.f32 %v1995, %v2082
        %2084 = vmatmul.bf16.gmra.mxu0 %v1010
        %v2085 = vpop.f32.mrf.mxu0
        %v2086 = vadd.f32 %v1998, %v2085
        %v2087 = vpop.f32.mrf.mxu0
        %v2088 = vadd.f32 %v2000, %v2087
        %2089 = vmatmul.bf16.gmra.mxu0 %v1018
        %v2090 = vpop.f32.mrf.mxu0
        %v2091 = vadd.f32 %v2003, %v2090
        %v2092 = vpop.f32.mrf.mxu0
        %v2093 = vadd.f32 %v2005, %v2092
        %2094 = vmatmul.bf16.gmra.mxu0 %v1026
        %v2095 = vpop.f32.mrf.mxu0
        %v2096 = vadd.f32 %v2008, %v2095
        %v2097 = vpop.f32.mrf.mxu0
        %v2098 = vadd.f32 %v2010, %v2097
        %2099 = vmatmul.bf16.gmra.mxu0 %v1034
        %v2100 = vpop.f32.mrf.mxu0
        %v2101 = vadd.f32 %v2013, %v2100
        %v2102 = vpop.f32.mrf.mxu0
        %v2103 = vadd.f32 %v2015, %v2102
        %2104 = vmatmul.bf16.gmra.mxu0 %v1042
        %v2105 = vpop.f32.mrf.mxu0
        %v2106 = vadd.f32 %v2018, %v2105
        %v2107 = vpop.f32.mrf.mxu0
        %v2108 = vadd.f32 %v2020, %v2107
        %2109 = vmatmul.bf16.gmra.mxu0 %v1050
        %v2110 = vpop.f32.mrf.mxu0
        %v2111 = vadd.f32 %v2023, %v2110
        %v2112 = vpop.f32.mrf.mxu0
        %v2113 = vadd.f32 %v2025, %v2112
        %2114 = vmatmul.bf16.gmra.mxu0 %v1058
        %v2115 = vpop.f32.mrf.mxu0
        %v2116 = vadd.f32 %v2028, %v2115
        %v2117 = vpop.f32.mrf.mxu0
        %v2118 = vadd.f32 %v2030, %v2117
        %2119 = vmatmul.bf16.gmra.mxu0 %v1066
        %v2120 = vpop.f32.mrf.mxu0
        %v2121 = vadd.f32 %v2033, %v2120
        %v2122 = vpop.f32.mrf.mxu0
        %v2123 = vadd.f32 %v2035, %v2122
        %2124 = vmatmul.bf16.gmra.mxu0 %v1074
        %v2125 = vpop.f32.mrf.mxu0
        %v2126 = vadd.f32 %v2038, %v2125
        %v2127 = vpop.f32.mrf.mxu0
        %v2128 = vadd.f32 %v2040, %v2127
        %2129 = vmatmul.bf16.gmra.mxu0 %v1082
        %v2130 = vpop.f32.mrf.mxu0
        %v2131 = vadd.f32 %v2043, %v2130
        %v2132 = vpop.f32.mrf.mxu0
        %2133 = vdwg.mxu0
        %2134 = vmatpush.bf16.msra.mxu0 %v1492
        %2135 = vmatpush.bf16.msra.mxu0 %v1491
        %2136 = vmatpush.bf16.msra.mxu0 %v1490
        %2137 = vmatpush.bf16.msra.mxu0 %v1489
        %2138 = vmatpush.bf16.msra.mxu0 %v1488
        %2139 = vmatpush.bf16.msra.mxu0 %v1487
        %2140 = vmatpush.bf16.msra.mxu0 %v1486
        %2141 = vmatpush.bf16.msra.mxu0 %v1485
        %2142 = vmatmul.bf16.gmra.mxu0 %v963
        %v2143 = vpop.f32.mrf.mxu0
        %v2144 = vadd.f32 %v2056, %v2143
        %v2145 = vpop.f32.mrf.mxu0
        %v2146 = vadd.f32 %v2058, %v2145
        %2147 = vmatmul.bf16.gmra.mxu0 %v971
        %v2148 = vpop.f32.mrf.mxu0
        %v2149 = vadd.f32 %v2061, %v2148
        %v2150 = vpop.f32.mrf.mxu0
        %v2151 = vadd.f32 %v2063, %v2150
        %2152 = vmatmul.bf16.gmra.mxu0 %v979
        %v2153 = vpop.f32.mrf.mxu0
        %v2154 = vadd.f32 %v2066, %v2153
        %v2155 = vpop.f32.mrf.mxu0
        %v2156 = vadd.f32 %v2068, %v2155
        %2157 = vmatmul.bf16.gmra.mxu0 %v987
        %v2158 = vpop.f32.mrf.mxu0
        %v2159 = vadd.f32 %v2071, %v2158
        %v2160 = vpop.f32.mrf.mxu0
        %v2161 = vadd.f32 %v2073, %v2160
        %2162 = vmatmul.bf16.gmra.mxu0 %v995
        %v2163 = vpop.f32.mrf.mxu0
        %v2164 = vadd.f32 %v2076, %v2163
        %v2165 = vpop.f32.mrf.mxu0
        %v2166 = vadd.f32 %v2078, %v2165
        %2167 = vmatmul.bf16.gmra.mxu0 %v1003
        %v2168 = vpop.f32.mrf.mxu0
        %v2169 = vadd.f32 %v2081, %v2168
        %v2170 = vpop.f32.mrf.mxu0
        %v2171 = vadd.f32 %v2083, %v2170
        %2172 = vmatmul.bf16.gmra.mxu0 %v1011
        %v2173 = vpop.f32.mrf.mxu0
        %v2174 = vadd.f32 %v2086, %v2173
        %v2175 = vpop.f32.mrf.mxu0
        %v2176 = vadd.f32 %v2088, %v2175
        %2177 = vmatmul.bf16.gmra.mxu0 %v1019
        %v2178 = vpop.f32.mrf.mxu0
        %v2179 = vadd.f32 %v2091, %v2178
        %v2180 = vpop.f32.mrf.mxu0
        %v2181 = vadd.f32 %v2093, %v2180
        %2182 = vmatmul.bf16.gmra.mxu0 %v1027
        %v2183 = vpop.f32.mrf.mxu0
        %v2184 = vadd.f32 %v2096, %v2183
        %v2185 = vpop.f32.mrf.mxu0
        %v2186 = vadd.f32 %v2098, %v2185
        %2187 = vmatmul.bf16.gmra.mxu0 %v1035
        %v2188 = vpop.f32.mrf.mxu0
        %v2189 = vadd.f32 %v2101, %v2188
        %v2190 = vpop.f32.mrf.mxu0
        %v2191 = vadd.f32 %v2103, %v2190
        %2192 = vmatmul.bf16.gmra.mxu0 %v1043
        %v2193 = vpop.f32.mrf.mxu0
        %v2194 = vadd.f32 %v2106, %v2193
        %v2195 = vpop.f32.mrf.mxu0
        %v2196 = vadd.f32 %v2108, %v2195
        %2197 = vmatmul.bf16.gmra.mxu0 %v1051
        %v2198 = vpop.f32.mrf.mxu0
        %v2199 = vadd.f32 %v2111, %v2198
        %v2200 = vpop.f32.mrf.mxu0
        %v2201 = vadd.f32 %v2113, %v2200
        %2202 = vmatmul.bf16.gmra.mxu0 %v1059
        %v2203 = vpop.f32.mrf.mxu0
        %v2204 = vadd.f32 %v2116, %v2203
        %v2205 = vpop.f32.mrf.mxu0
        %v2206 = vadd.f32 %v2118, %v2205
        %2207 = vmatmul.bf16.gmra.mxu0 %v1067
        %v2208 = vpop.f32.mrf.mxu0
        %v2209 = vadd.f32 %v2121, %v2208
        %v2210 = vpop.f32.mrf.mxu0
        %v2211 = vadd.f32 %v2123, %v2210
        %2212 = vmatmul.bf16.gmra.mxu0 %v1075
        %v2213 = vpop.f32.mrf.mxu0
        %v2214 = vadd.f32 %v2126, %v2213
        %v2215 = vpop.f32.mrf.mxu0
        %v2216 = vadd.f32 %v2128, %v2215
        %2217 = vmatmul.bf16.gmra.mxu0 %v1083
        %v2218 = vpop.f32.mrf.mxu0
        %v2219 = vadd.f32 %v2131, %v2218
        %v2220 = vpop.f32.mrf.mxu0
        %2221 = vdwg.mxu0
        %2222 = vmatpush.bf16.msra.mxu0 0
        %2223 = vmatpush.bf16.msra.mxu0 0
        %2224 = vmatpush.bf16.msra.mxu0 0
        %2225 = vmatpush.bf16.msra.mxu0 0
        %2226 = vmatpush.bf16.msra.mxu0 %v1496
        %2227 = vmatpush.bf16.msra.mxu0 %v1495
        %2228 = vmatpush.bf16.msra.mxu0 %v1494
        %2229 = vmatpush.bf16.msra.mxu0 %v1493
        %2230 = vmatmul.bf16.gmra.mxu0 %v1559
        %v2231 = vpop.f32.mrf.mxu0
        %v2232 = vadd.f32 %v2144, %v2231
        %v2233 = vpop.f32.mrf.mxu0
        %v2234 = vadd.f32 %v2146, %v2233
        %2235 = vmatmul.bf16.gmra.mxu0 %v1562
        %v2236 = vpop.f32.mrf.mxu0
        %v2237 = vadd.f32 %v2149, %v2236
        %v2238 = vpop.f32.mrf.mxu0
        %v2239 = vadd.f32 %v2151, %v2238
        %2240 = vmatmul.bf16.gmra.mxu0 %v1565
        %v2241 = vpop.f32.mrf.mxu0
        %v2242 = vadd.f32 %v2154, %v2241
        %v2243 = vpop.f32.mrf.mxu0
        %v2244 = vadd.f32 %v2156, %v2243
        %2245 = vmatmul.bf16.gmra.mxu0 %v1568
        %v2246 = vpop.f32.mrf.mxu0
        %v2247 = vadd.f32 %v2159, %v2246
        %v2248 = vpop.f32.mrf.mxu0
        %v2249 = vadd.f32 %v2161, %v2248
        %2250 = vmatmul.bf16.gmra.mxu0 %v1571
        %v2251 = vpop.f32.mrf.mxu0
        %v2252 = vadd.f32 %v2164, %v2251
        %v2253 = vpop.f32.mrf.mxu0
        %v2254 = vadd.f32 %v2166, %v2253
        %2255 = vmatmul.bf16.gmra.mxu0 %v1574
        %v2256 = vpop.f32.mrf.mxu0
        %v2257 = vadd.f32 %v2169, %v2256
        %v2258 = vpop.f32.mrf.mxu0
        %v2259 = vadd.f32 %v2171, %v2258
        %2260 = vmatmul.bf16.gmra.mxu0 %v1577
        %v2261 = vpop.f32.mrf.mxu0
        %v2262 = vadd.f32 %v2174, %v2261
        %v2263 = vpop.f32.mrf.mxu0
        %v2264 = vadd.f32 %v2176, %v2263
        %2265 = vmatmul.bf16.gmra.mxu0 %v1580
        %v2266 = vpop.f32.mrf.mxu0
        %v2267 = vadd.f32 %v2179, %v2266
        %v2268 = vpop.f32.mrf.mxu0
        %v2269 = vadd.f32 %v2181, %v2268
        %2270 = vmatmul.bf16.gmra.mxu0 %v1583
        %v2271 = vpop.f32.mrf.mxu0
        %v2272 = vadd.f32 %v2184, %v2271
        %v2273 = vpop.f32.mrf.mxu0
        %v2274 = vadd.f32 %v2186, %v2273
        %2275 = vmatmul.bf16.gmra.mxu0 %v1586
        %v2276 = vpop.f32.mrf.mxu0
        %v2277 = vadd.f32 %v2189, %v2276
        %v2278 = vpop.f32.mrf.mxu0
        %v2279 = vadd.f32 %v2191, %v2278
        %2280 = vmatmul.bf16.gmra.mxu0 %v1589
        %v2281 = vpop.f32.mrf.mxu0
        %v2282 = vadd.f32 %v2194, %v2281
        %v2283 = vpop.f32.mrf.mxu0
        %v2284 = vadd.f32 %v2196, %v2283
        %2285 = vmatmul.bf16.gmra.mxu0 %v1592
        %v2286 = vpop.f32.mrf.mxu0
        %v2287 = vadd.f32 %v2199, %v2286
        %v2288 = vpop.f32.mrf.mxu0
        %v2289 = vadd.f32 %v2201, %v2288
        %2290 = vmatmul.bf16.gmra.mxu0 %v1595
        %v2291 = vpop.f32.mrf.mxu0
        %v2292 = vadd.f32 %v2204, %v2291
        %v2293 = vpop.f32.mrf.mxu0
        %v2294 = vadd.f32 %v2206, %v2293
        %2295 = vmatmul.bf16.gmra.mxu0 %v1598
        %v2296 = vpop.f32.mrf.mxu0
        %v2297 = vadd.f32 %v2209, %v2296
        %v2298 = vpop.f32.mrf.mxu0
        %v2299 = vadd.f32 %v2211, %v2298
        %2300 = vmatmul.bf16.gmra.mxu0 %v1601
        %v2301 = vpop.f32.mrf.mxu0
        %v2302 = vadd.f32 %v2214, %v2301
        %v2303 = vpop.f32.mrf.mxu0
        %v2304 = vadd.f32 %v2216, %v2303
        %2305 = vmatmul.bf16.gmra.mxu0 %v1604
        %v2306 = vpop.f32.mrf.mxu0
        %v2307 = vadd.f32 %v2219, %v2306
        %v2308 = vpop.f32.mrf.mxu0
        %2309 = vdwg.mxu0
        %v2310 = vxor.u32 %v2232, 2147483648
        %v2311 = vxor.u32 %v2234, 2147483648
        %v2312 = vxor.u32 %v2237, 2147483648
        %v2313 = vxor.u32 %v2239, 2147483648
        %v2314 = vxor.u32 %v2242, 2147483648
        %v2315 = vxor.u32 %v2244, 2147483648
        %v2316 = vxor.u32 %v2247, 2147483648
        %v2317 = vxor.u32 %v2249, 2147483648
        %v2318 = vxor.u32 %v2252, 2147483648
        %v2319 = vxor.u32 %v2254, 2147483648
        %v2320 = vxor.u32 %v2257, 2147483648
        %v2321 = vxor.u32 %v2259, 2147483648
        %v2322 = vxor.u32 %v2262, 2147483648
        %v2323 = vxor.u32 %v2264, 2147483648
        %v2324 = vxor.u32 %v2267, 2147483648
        %v2325 = vxor.u32 %v2269, 2147483648
        %v2326 = vxor.u32 %v2272, 2147483648
        %v2327 = vxor.u32 %v2274, 2147483648
        %v2328 = vxor.u32 %v2277, 2147483648
        %v2329 = vxor.u32 %v2279, 2147483648
        %v2330 = vxor.u32 %v2282, 2147483648
        %v2331 = vxor.u32 %v2284, 2147483648
        %v2332 = vxor.u32 %v2287, 2147483648
        %v2333 = vxor.u32 %v2289, 2147483648
        %v2334 = vxor.u32 %v2292, 2147483648
        %v2335 = vxor.u32 %v2294, 2147483648
        %v2336 = vxor.u32 %v2297, 2147483648
        %v2337 = vxor.u32 %v2299, 2147483648
        %v2338 = vxor.u32 %v2302, 2147483648
        %v2339 = vxor.u32 %v2304, 2147483648
        %v2340 = vxor.u32 %v2307, 2147483648
        %v2341 = vmul.f32 %v2310, 1.442695
        %v2342 = vpow.pop %v2341
        %v2343 = vmul.f32 %v2311, 1.442695
        %v2344 = vpow.pop %v2343
        %v2345 = vmul.f32 %v2312, 1.442695
        %v2346 = vpow.pop %v2345
        %v2347 = vmul.f32 %v2313, 1.442695
        %v2348 = vpow.pop %v2347
        %v2349 = vmul.f32 %v2314, 1.442695
        %v2350 = vpow.pop %v2349
        %v2351 = vmul.f32 %v2315, 1.442695
        %v2352 = vpow.pop %v2351
        %v2353 = vmul.f32 %v2316, 1.442695
        %v2354 = vpow.pop %v2353
        %v2355 = vmul.f32 %v2317, 1.442695
        %v2356 = vpow.pop %v2355
        %v2357 = vmul.f32 %v2318, 1.442695
        %v2358 = vpow.pop %v2357
        %v2359 = vmul.f32 %v2319, 1.442695
        %v2360 = vpow.pop %v2359
        %v2361 = vmul.f32 %v2320, 1.442695
        %v2362 = vpow.pop %v2361
        %v2363 = vmul.f32 %v2321, 1.442695
        %v2364 = vpow.pop %v2363
        %v2365 = vmul.f32 %v2322, 1.442695
        %v2366 = vpow.pop %v2365
        %v2367 = vmul.f32 %v2323, 1.442695
        %v2368 = vpow.pop %v2367
        %v2369 = vmul.f32 %v2324, 1.442695
        %v2370 = vpow.pop %v2369
        %v2371 = vmul.f32 %v2325, 1.442695
        %v2372 = vpow.pop %v2371
        %v2373 = vmul.f32 %v2326, 1.442695
        %v2374 = vpow.pop %v2373
        %v2375 = vmul.f32 %v2327, 1.442695
        %v2376 = vpow.pop %v2375
        %v2377 = vmul.f32 %v2328, 1.442695
        %v2378 = vpow.pop %v2377
        %v2379 = vmul.f32 %v2329, 1.442695
        %v2380 = vpow.pop %v2379
        %v2381 = vmul.f32 %v2330, 1.442695
        %v2382 = vpow.pop %v2381
        %v2383 = vmul.f32 %v2331, 1.442695
        %v2384 = vpow.pop %v2383
        %v2385 = vmul.f32 %v2332, 1.442695
        %v2386 = vpow.pop %v2385
        %v2387 = vmul.f32 %v2333, 1.442695
        %v2388 = vpow.pop %v2387
        %v2389 = vmul.f32 %v2334, 1.442695
        %v2390 = vpow.pop %v2389
        %v2391 = vmul.f32 %v2335, 1.442695
        %v2392 = vpow.pop %v2391
        %v2393 = vmul.f32 %v2336, 1.442695
        %v2394 = vpow.pop %v2393
        %v2395 = vmul.f32 %v2337, 1.442695
        %v2396 = vpow.pop %v2395
        %v2397 = vmul.f32 %v2338, 1.442695
        %v2398 = vpow.pop %v2397
        %v2399 = vmul.f32 %v2339, 1.442695
        %v2400 = vpow.pop %v2399
        %v2401 = vmul.f32 %v2340, 1.442695
        %v2402 = vpow.pop %v2401
        %v2403 = vadd.f32 %v2342, 1.0
        %v2404 = vadd.f32 %v2344, 1.0
        %v2405 = vadd.f32 %v2346, 1.0
        %v2406 = vadd.f32 %v2348, 1.0
        %v2407 = vadd.f32 %v2350, 1.0
        %v2408 = vadd.f32 %v2352, 1.0
        %v2409 = vadd.f32 %v2354, 1.0
        %v2410 = vadd.f32 %v2356, 1.0
        %v2411 = vadd.f32 %v2358, 1.0
        %v2412 = vadd.f32 %v2360, 1.0
        %v2413 = vadd.f32 %v2362, 1.0
        %v2414 = vadd.f32 %v2364, 1.0
        %v2415 = vadd.f32 %v2366, 1.0
        %v2416 = vadd.f32 %v2368, 1.0
        %v2417 = vadd.f32 %v2370, 1.0
        %v2418 = vadd.f32 %v2372, 1.0
        %v2419 = vadd.f32 %v2374, 1.0
        %v2420 = vadd.f32 %v2376, 1.0
        %v2421 = vadd.f32 %v2378, 1.0
        %v2422 = vadd.f32 %v2380, 1.0
        %v2423 = vadd.f32 %v2382, 1.0
        %v2424 = vadd.f32 %v2384, 1.0
        %v2425 = vadd.f32 %v2386, 1.0
        %v2426 = vadd.f32 %v2388, 1.0
        %v2427 = vadd.f32 %v2390, 1.0
        %v2428 = vadd.f32 %v2392, 1.0
        %v2429 = vadd.f32 %v2394, 1.0
        %v2430 = vadd.f32 %v2396, 1.0
        %v2431 = vadd.f32 %v2398, 1.0
        %v2432 = vadd.f32 %v2400, 1.0
        %v2433 = vadd.f32 %v2402, 1.0
        %v2434 = vrcp.pop %v2403
        %v2435 = vmul.f32 %v2403, %v2434
        %v2436 = vsub.f32 1.0, %v2435
        %v2437 = vmul.f32 %v2434, %v2436
        %v2438 = vadd.f32 %v2434, %v2437
        %vm2439 = vweird.f32 %v2403
        %vm2440 = vweird.f32 %v2434
        %vm2441 = vmor %vm2439, %vm2440
        %v2442 = vsel %vm2441, %v2434, %v2438
        %v2443 = vand.u32 2147483647, %v2403
        %vm2444 = vcmp.eq.f32.partialorder %v2443, 8.507059e+37
        %v2445 = vand.u32 %v2403, 2147483648
        %v2446 = vor.u32 1.1754944e-38, %v2445
        %v2447 = vsel %vm2444, %v2446, %v2442
        %v2448 = vmul.f32 1.0, %v2447
        %v2449 = vrcp.pop %v2404
        %v2450 = vmul.f32 %v2404, %v2449
        %v2451 = vsub.f32 1.0, %v2450
        %v2452 = vmul.f32 %v2449, %v2451
        %v2453 = vadd.f32 %v2449, %v2452
        %vm2454 = vweird.f32 %v2404
        %vm2455 = vweird.f32 %v2449
        %vm2456 = vmor %vm2454, %vm2455
        %v2457 = vsel %vm2456, %v2449, %v2453
        %v2458 = vand.u32 2147483647, %v2404
        %vm2459 = vcmp.eq.f32.partialorder %v2458, 8.507059e+37
        %v2460 = vand.u32 %v2404, 2147483648
        %v2461 = vor.u32 1.1754944e-38, %v2460
        %v2462 = vsel %vm2459, %v2461, %v2457
        %v2463 = vmul.f32 1.0, %v2462
        %v2464 = vrcp.pop %v2405
        %v2465 = vmul.f32 %v2405, %v2464
        %v2466 = vsub.f32 1.0, %v2465
        %v2467 = vmul.f32 %v2464, %v2466
        %v2468 = vadd.f32 %v2464, %v2467
        %vm2469 = vweird.f32 %v2405
        %vm2470 = vweird.f32 %v2464
        %vm2471 = vmor %vm2469, %vm2470
        %v2472 = vsel %vm2471, %v2464, %v2468
        %v2473 = vand.u32 2147483647, %v2405
        %vm2474 = vcmp.eq.f32.partialorder %v2473, 8.507059e+37
        %v2475 = vand.u32 %v2405, 2147483648
        %v2476 = vor.u32 1.1754944e-38, %v2475
        %v2477 = vsel %vm2474, %v2476, %v2472
        %v2478 = vmul.f32 1.0, %v2477
        %v2479 = vrcp.pop %v2406
        %v2480 = vmul.f32 %v2406, %v2479
        %v2481 = vsub.f32 1.0, %v2480
        %v2482 = vmul.f32 %v2479, %v2481
        %v2483 = vadd.f32 %v2479, %v2482
        %vm2484 = vweird.f32 %v2406
        %vm2485 = vweird.f32 %v2479
        %vm2486 = vmor %vm2484, %vm2485
        %v2487 = vsel %vm2486, %v2479, %v2483
        %v2488 = vand.u32 2147483647, %v2406
        %vm2489 = vcmp.eq.f32.partialorder %v2488, 8.507059e+37
        %v2490 = vand.u32 %v2406, 2147483648
        %v2491 = vor.u32 1.1754944e-38, %v2490
        %v2492 = vsel %vm2489, %v2491, %v2487
        %v2493 = vmul.f32 1.0, %v2492
        %v2494 = vrcp.pop %v2407
        %v2495 = vmul.f32 %v2407, %v2494
        %v2496 = vsub.f32 1.0, %v2495
        %v2497 = vmul.f32 %v2494, %v2496
        %v2498 = vadd.f32 %v2494, %v2497
        %vm2499 = vweird.f32 %v2407
        %vm2500 = vweird.f32 %v2494
        %vm2501 = vmor %vm2499, %vm2500
        %v2502 = vsel %vm2501, %v2494, %v2498
        %v2503 = vand.u32 2147483647, %v2407
        %vm2504 = vcmp.eq.f32.partialorder %v2503, 8.507059e+37
        %v2505 = vand.u32 %v2407, 2147483648
        %v2506 = vor.u32 1.1754944e-38, %v2505
        %v2507 = vsel %vm2504, %v2506, %v2502
        %v2508 = vmul.f32 1.0, %v2507
        %v2509 = vrcp.pop %v2408
        %v2510 = vmul.f32 %v2408, %v2509
        %v2511 = vsub.f32 1.0, %v2510
        %v2512 = vmul.f32 %v2509, %v2511
        %v2513 = vadd.f32 %v2509, %v2512
        %vm2514 = vweird.f32 %v2408
        %vm2515 = vweird.f32 %v2509
        %vm2516 = vmor %vm2514, %vm2515
        %v2517 = vsel %vm2516, %v2509, %v2513
        %v2518 = vand.u32 2147483647, %v2408
        %vm2519 = vcmp.eq.f32.partialorder %v2518, 8.507059e+37
        %v2520 = vand.u32 %v2408, 2147483648
        %v2521 = vor.u32 1.1754944e-38, %v2520
        %v2522 = vsel %vm2519, %v2521, %v2517
        %v2523 = vmul.f32 1.0, %v2522
        %v2524 = vrcp.pop %v2409
        %v2525 = vmul.f32 %v2409, %v2524
        %v2526 = vsub.f32 1.0, %v2525
        %v2527 = vmul.f32 %v2524, %v2526
        %v2528 = vadd.f32 %v2524, %v2527
        %vm2529 = vweird.f32 %v2409
        %vm2530 = vweird.f32 %v2524
        %vm2531 = vmor %vm2529, %vm2530
        %v2532 = vsel %vm2531, %v2524, %v2528
        %v2533 = vand.u32 2147483647, %v2409
        %vm2534 = vcmp.eq.f32.partialorder %v2533, 8.507059e+37
        %v2535 = vand.u32 %v2409, 2147483648
        %v2536 = vor.u32 1.1754944e-38, %v2535
        %v2537 = vsel %vm2534, %v2536, %v2532
        %v2538 = vmul.f32 1.0, %v2537
        %v2539 = vrcp.pop %v2410
        %v2540 = vmul.f32 %v2410, %v2539
        %v2541 = vsub.f32 1.0, %v2540
        %v2542 = vmul.f32 %v2539, %v2541
        %v2543 = vadd.f32 %v2539, %v2542
        %vm2544 = vweird.f32 %v2410
        %vm2545 = vweird.f32 %v2539
        %vm2546 = vmor %vm2544, %vm2545
        %v2547 = vsel %vm2546, %v2539, %v2543
        %v2548 = vand.u32 2147483647, %v2410
        %vm2549 = vcmp.eq.f32.partialorder %v2548, 8.507059e+37
        %v2550 = vand.u32 %v2410, 2147483648
        %v2551 = vor.u32 1.1754944e-38, %v2550
        %v2552 = vsel %vm2549, %v2551, %v2547
        %v2553 = vmul.f32 1.0, %v2552
        %v2554 = vrcp.pop %v2411
        %v2555 = vmul.f32 %v2411, %v2554
        %v2556 = vsub.f32 1.0, %v2555
        %v2557 = vmul.f32 %v2554, %v2556
        %v2558 = vadd.f32 %v2554, %v2557
        %vm2559 = vweird.f32 %v2411
        %vm2560 = vweird.f32 %v2554
        %vm2561 = vmor %vm2559, %vm2560
        %v2562 = vsel %vm2561, %v2554, %v2558
        %v2563 = vand.u32 2147483647, %v2411
        %vm2564 = vcmp.eq.f32.partialorder %v2563, 8.507059e+37
        %v2565 = vand.u32 %v2411, 2147483648
        %v2566 = vor.u32 1.1754944e-38, %v2565
        %v2567 = vsel %vm2564, %v2566, %v2562
        %v2568 = vmul.f32 1.0, %v2567
        %v2569 = vrcp.pop %v2412
        %v2570 = vmul.f32 %v2412, %v2569
        %v2571 = vsub.f32 1.0, %v2570
        %v2572 = vmul.f32 %v2569, %v2571
        %v2573 = vadd.f32 %v2569, %v2572
        %vm2574 = vweird.f32 %v2412
        %vm2575 = vweird.f32 %v2569
        %vm2576 = vmor %vm2574, %vm2575
        %v2577 = vsel %vm2576, %v2569, %v2573
        %v2578 = vand.u32 2147483647, %v2412
        %vm2579 = vcmp.eq.f32.partialorder %v2578, 8.507059e+37
        %v2580 = vand.u32 %v2412, 2147483648
        %v2581 = vor.u32 1.1754944e-38, %v2580
        %v2582 = vsel %vm2579, %v2581, %v2577
        %v2583 = vmul.f32 1.0, %v2582
        %v2584 = vrcp.pop %v2413
        %v2585 = vmul.f32 %v2413, %v2584
        %v2586 = vsub.f32 1.0, %v2585
        %v2587 = vmul.f32 %v2584, %v2586
        %v2588 = vadd.f32 %v2584, %v2587
        %vm2589 = vweird.f32 %v2413
        %vm2590 = vweird.f32 %v2584
        %vm2591 = vmor %vm2589, %vm2590
        %v2592 = vsel %vm2591, %v2584, %v2588
        %v2593 = vand.u32 2147483647, %v2413
        %vm2594 = vcmp.eq.f32.partialorder %v2593, 8.507059e+37
        %v2595 = vand.u32 %v2413, 2147483648
        %v2596 = vor.u32 1.1754944e-38, %v2595
        %v2597 = vsel %vm2594, %v2596, %v2592
        %v2598 = vmul.f32 1.0, %v2597
        %v2599 = vrcp.pop %v2414
        %v2600 = vmul.f32 %v2414, %v2599
        %v2601 = vsub.f32 1.0, %v2600
        %v2602 = vmul.f32 %v2599, %v2601
        %v2603 = vadd.f32 %v2599, %v2602
        %vm2604 = vweird.f32 %v2414
        %vm2605 = vweird.f32 %v2599
        %vm2606 = vmor %vm2604, %vm2605
        %v2607 = vsel %vm2606, %v2599, %v2603
        %v2608 = vand.u32 2147483647, %v2414
        %vm2609 = vcmp.eq.f32.partialorder %v2608, 8.507059e+37
        %v2610 = vand.u32 %v2414, 2147483648
        %v2611 = vor.u32 1.1754944e-38, %v2610
        %v2612 = vsel %vm2609, %v2611, %v2607
        %v2613 = vmul.f32 1.0, %v2612
        %v2614 = vrcp.pop %v2415
        %v2615 = vmul.f32 %v2415, %v2614
        %v2616 = vsub.f32 1.0, %v2615
        %v2617 = vmul.f32 %v2614, %v2616
        %v2618 = vadd.f32 %v2614, %v2617
        %vm2619 = vweird.f32 %v2415
        %vm2620 = vweird.f32 %v2614
        %vm2621 = vmor %vm2619, %vm2620
        %v2622 = vsel %vm2621, %v2614, %v2618
        %v2623 = vand.u32 2147483647, %v2415
        %vm2624 = vcmp.eq.f32.partialorder %v2623, 8.507059e+37
        %v2625 = vand.u32 %v2415, 2147483648
        %v2626 = vor.u32 1.1754944e-38, %v2625
        %v2627 = vsel %vm2624, %v2626, %v2622
        %v2628 = vmul.f32 1.0, %v2627
        %v2629 = vrcp.pop %v2416
        %v2630 = vmul.f32 %v2416, %v2629
        %v2631 = vsub.f32 1.0, %v2630
        %v2632 = vmul.f32 %v2629, %v2631
        %v2633 = vadd.f32 %v2629, %v2632
        %vm2634 = vweird.f32 %v2416
        %vm2635 = vweird.f32 %v2629
        %vm2636 = vmor %vm2634, %vm2635
        %v2637 = vsel %vm2636, %v2629, %v2633
        %v2638 = vand.u32 2147483647, %v2416
        %vm2639 = vcmp.eq.f32.partialorder %v2638, 8.507059e+37
        %v2640 = vand.u32 %v2416, 2147483648
        %v2641 = vor.u32 1.1754944e-38, %v2640
        %v2642 = vsel %vm2639, %v2641, %v2637
        %v2643 = vmul.f32 1.0, %v2642
        %v2644 = vrcp.pop %v2417
        %v2645 = vmul.f32 %v2417, %v2644
        %v2646 = vsub.f32 1.0, %v2645
        %v2647 = vmul.f32 %v2644, %v2646
        %v2648 = vadd.f32 %v2644, %v2647
        %vm2649 = vweird.f32 %v2417
        %vm2650 = vweird.f32 %v2644
        %vm2651 = vmor %vm2649, %vm2650
        %v2652 = vsel %vm2651, %v2644, %v2648
        %v2653 = vand.u32 2147483647, %v2417
        %vm2654 = vcmp.eq.f32.partialorder %v2653, 8.507059e+37
        %v2655 = vand.u32 %v2417, 2147483648
        %v2656 = vor.u32 1.1754944e-38, %v2655
        %v2657 = vsel %vm2654, %v2656, %v2652
        %v2658 = vmul.f32 1.0, %v2657
        %v2659 = vrcp.pop %v2418
        %v2660 = vmul.f32 %v2418, %v2659
        %v2661 = vsub.f32 1.0, %v2660
        %v2662 = vmul.f32 %v2659, %v2661
        %v2663 = vadd.f32 %v2659, %v2662
        %vm2664 = vweird.f32 %v2418
        %vm2665 = vweird.f32 %v2659
        %vm2666 = vmor %vm2664, %vm2665
        %v2667 = vsel %vm2666, %v2659, %v2663
        %v2668 = vand.u32 2147483647, %v2418
        %vm2669 = vcmp.eq.f32.partialorder %v2668, 8.507059e+37
        %v2670 = vand.u32 %v2418, 2147483648
        %v2671 = vor.u32 1.1754944e-38, %v2670
        %v2672 = vsel %vm2669, %v2671, %v2667
        %v2673 = vmul.f32 1.0, %v2672
        %v2674 = vrcp.pop %v2419
        %v2675 = vmul.f32 %v2419, %v2674
        %v2676 = vsub.f32 1.0, %v2675
        %v2677 = vmul.f32 %v2674, %v2676
        %v2678 = vadd.f32 %v2674, %v2677
        %vm2679 = vweird.f32 %v2419
        %vm2680 = vweird.f32 %v2674
        %vm2681 = vmor %vm2679, %vm2680
        %v2682 = vsel %vm2681, %v2674, %v2678
        %v2683 = vand.u32 2147483647, %v2419
        %vm2684 = vcmp.eq.f32.partialorder %v2683, 8.507059e+37
        %v2685 = vand.u32 %v2419, 2147483648
        %v2686 = vor.u32 1.1754944e-38, %v2685
        %v2687 = vsel %vm2684, %v2686, %v2682
        %v2688 = vmul.f32 1.0, %v2687
        %v2689 = vrcp.pop %v2420
        %v2690 = vmul.f32 %v2420, %v2689
        %v2691 = vsub.f32 1.0, %v2690
        %v2692 = vmul.f32 %v2689, %v2691
        %v2693 = vadd.f32 %v2689, %v2692
        %vm2694 = vweird.f32 %v2420
        %vm2695 = vweird.f32 %v2689
        %vm2696 = vmor %vm2694, %vm2695
        %v2697 = vsel %vm2696, %v2689, %v2693
        %v2698 = vand.u32 2147483647, %v2420
        %vm2699 = vcmp.eq.f32.partialorder %v2698, 8.507059e+37
        %v2700 = vand.u32 %v2420, 2147483648
        %v2701 = vor.u32 1.1754944e-38, %v2700
        %v2702 = vsel %vm2699, %v2701, %v2697
        %v2703 = vmul.f32 1.0, %v2702
        %v2704 = vrcp.pop %v2421
        %v2705 = vmul.f32 %v2421, %v2704
        %v2706 = vsub.f32 1.0, %v2705
        %v2707 = vmul.f32 %v2704, %v2706
        %v2708 = vadd.f32 %v2704, %v2707
        %vm2709 = vweird.f32 %v2421
        %vm2710 = vweird.f32 %v2704
        %vm2711 = vmor %vm2709, %vm2710
        %v2712 = vsel %vm2711, %v2704, %v2708
        %v2713 = vand.u32 2147483647, %v2421
        %vm2714 = vcmp.eq.f32.partialorder %v2713, 8.507059e+37
        %v2715 = vand.u32 %v2421, 2147483648
        %v2716 = vor.u32 1.1754944e-38, %v2715
        %v2717 = vsel %vm2714, %v2716, %v2712
        %v2718 = vmul.f32 1.0, %v2717
        %v2719 = vrcp.pop %v2422
        %v2720 = vmul.f32 %v2422, %v2719
        %v2721 = vsub.f32 1.0, %v2720
        %v2722 = vmul.f32 %v2719, %v2721
        %v2723 = vadd.f32 %v2719, %v2722
        %vm2724 = vweird.f32 %v2422
        %vm2725 = vweird.f32 %v2719
        %vm2726 = vmor %vm2724, %vm2725
        %v2727 = vsel %vm2726, %v2719, %v2723
        %v2728 = vand.u32 2147483647, %v2422
        %vm2729 = vcmp.eq.f32.partialorder %v2728, 8.507059e+37
        %v2730 = vand.u32 %v2422, 2147483648
        %v2731 = vor.u32 1.1754944e-38, %v2730
        %v2732 = vsel %vm2729, %v2731, %v2727
        %v2733 = vmul.f32 1.0, %v2732
        %v2734 = vrcp.pop %v2423
        %v2735 = vmul.f32 %v2423, %v2734
        %v2736 = vsub.f32 1.0, %v2735
        %v2737 = vmul.f32 %v2734, %v2736
        %v2738 = vadd.f32 %v2734, %v2737
        %vm2739 = vweird.f32 %v2423
        %vm2740 = vweird.f32 %v2734
        %vm2741 = vmor %vm2739, %vm2740
        %v2742 = vsel %vm2741, %v2734, %v2738
        %v2743 = vand.u32 2147483647, %v2423
        %vm2744 = vcmp.eq.f32.partialorder %v2743, 8.507059e+37
        %v2745 = vand.u32 %v2423, 2147483648
        %v2746 = vor.u32 1.1754944e-38, %v2745
        %v2747 = vsel %vm2744, %v2746, %v2742
        %v2748 = vmul.f32 1.0, %v2747
        %v2749 = vrcp.pop %v2424
        %v2750 = vmul.f32 %v2424, %v2749
        %v2751 = vsub.f32 1.0, %v2750
        %v2752 = vmul.f32 %v2749, %v2751
        %v2753 = vadd.f32 %v2749, %v2752
        %vm2754 = vweird.f32 %v2424
        %vm2755 = vweird.f32 %v2749
        %vm2756 = vmor %vm2754, %vm2755
        %v2757 = vsel %vm2756, %v2749, %v2753
        %v2758 = vand.u32 2147483647, %v2424
        %vm2759 = vcmp.eq.f32.partialorder %v2758, 8.507059e+37
        %v2760 = vand.u32 %v2424, 2147483648
        %v2761 = vor.u32 1.1754944e-38, %v2760
        %v2762 = vsel %vm2759, %v2761, %v2757
        %v2763 = vmul.f32 1.0, %v2762
        %v2764 = vrcp.pop %v2425
        %v2765 = vmul.f32 %v2425, %v2764
        %v2766 = vsub.f32 1.0, %v2765
        %v2767 = vmul.f32 %v2764, %v2766
        %v2768 = vadd.f32 %v2764, %v2767
        %vm2769 = vweird.f32 %v2425
        %vm2770 = vweird.f32 %v2764
        %vm2771 = vmor %vm2769, %vm2770
        %v2772 = vsel %vm2771, %v2764, %v2768
        %v2773 = vand.u32 2147483647, %v2425
        %vm2774 = vcmp.eq.f32.partialorder %v2773, 8.507059e+37
        %v2775 = vand.u32 %v2425, 2147483648
        %v2776 = vor.u32 1.1754944e-38, %v2775
        %v2777 = vsel %vm2774, %v2776, %v2772
        %v2778 = vmul.f32 1.0, %v2777
        %v2779 = vrcp.pop %v2426
        %v2780 = vmul.f32 %v2426, %v2779
        %v2781 = vsub.f32 1.0, %v2780
        %v2782 = vmul.f32 %v2779, %v2781
        %v2783 = vadd.f32 %v2779, %v2782
        %vm2784 = vweird.f32 %v2426
        %vm2785 = vweird.f32 %v2779
        %vm2786 = vmor %vm2784, %vm2785
        %v2787 = vsel %vm2786, %v2779, %v2783
        %v2788 = vand.u32 2147483647, %v2426
        %vm2789 = vcmp.eq.f32.partialorder %v2788, 8.507059e+37
        %v2790 = vand.u32 %v2426, 2147483648
        %v2791 = vor.u32 1.1754944e-38, %v2790
        %v2792 = vsel %vm2789, %v2791, %v2787
        %v2793 = vmul.f32 1.0, %v2792
        %v2794 = vrcp.pop %v2427
        %v2795 = vmul.f32 %v2427, %v2794
        %v2796 = vsub.f32 1.0, %v2795
        %v2797 = vmul.f32 %v2794, %v2796
        %v2798 = vadd.f32 %v2794, %v2797
        %vm2799 = vweird.f32 %v2427
        %vm2800 = vweird.f32 %v2794
        %vm2801 = vmor %vm2799, %vm2800
        %v2802 = vsel %vm2801, %v2794, %v2798
        %v2803 = vand.u32 2147483647, %v2427
        %vm2804 = vcmp.eq.f32.partialorder %v2803, 8.507059e+37
        %v2805 = vand.u32 %v2427, 2147483648
        %v2806 = vor.u32 1.1754944e-38, %v2805
        %v2807 = vsel %vm2804, %v2806, %v2802
        %v2808 = vmul.f32 1.0, %v2807
        %v2809 = vrcp.pop %v2428
        %v2810 = vmul.f32 %v2428, %v2809
        %v2811 = vsub.f32 1.0, %v2810
        %v2812 = vmul.f32 %v2809, %v2811
        %v2813 = vadd.f32 %v2809, %v2812
        %vm2814 = vweird.f32 %v2428
        %vm2815 = vweird.f32 %v2809
        %vm2816 = vmor %vm2814, %vm2815
        %v2817 = vsel %vm2816, %v2809, %v2813
        %v2818 = vand.u32 2147483647, %v2428
        %vm2819 = vcmp.eq.f32.partialorder %v2818, 8.507059e+37
        %v2820 = vand.u32 %v2428, 2147483648
        %v2821 = vor.u32 1.1754944e-38, %v2820
        %v2822 = vsel %vm2819, %v2821, %v2817
        %v2823 = vmul.f32 1.0, %v2822
        %v2824 = vrcp.pop %v2429
        %v2825 = vmul.f32 %v2429, %v2824
        %v2826 = vsub.f32 1.0, %v2825
        %v2827 = vmul.f32 %v2824, %v2826
        %v2828 = vadd.f32 %v2824, %v2827
        %vm2829 = vweird.f32 %v2429
        %vm2830 = vweird.f32 %v2824
        %vm2831 = vmor %vm2829, %vm2830
        %v2832 = vsel %vm2831, %v2824, %v2828
        %v2833 = vand.u32 2147483647, %v2429
        %vm2834 = vcmp.eq.f32.partialorder %v2833, 8.507059e+37
        %v2835 = vand.u32 %v2429, 2147483648
        %v2836 = vor.u32 1.1754944e-38, %v2835
        %v2837 = vsel %vm2834, %v2836, %v2832
        %v2838 = vmul.f32 1.0, %v2837
        %v2839 = vrcp.pop %v2430
        %v2840 = vmul.f32 %v2430, %v2839
        %v2841 = vsub.f32 1.0, %v2840
        %v2842 = vmul.f32 %v2839, %v2841
        %v2843 = vadd.f32 %v2839, %v2842
        %vm2844 = vweird.f32 %v2430
        %vm2845 = vweird.f32 %v2839
        %vm2846 = vmor %vm2844, %vm2845
        %v2847 = vsel %vm2846, %v2839, %v2843
        %v2848 = vand.u32 2147483647, %v2430
        %vm2849 = vcmp.eq.f32.partialorder %v2848, 8.507059e+37
        %v2850 = vand.u32 %v2430, 2147483648
        %v2851 = vor.u32 1.1754944e-38, %v2850
        %v2852 = vsel %vm2849, %v2851, %v2847
        %v2853 = vmul.f32 1.0, %v2852
        %v2854 = vrcp.pop %v2431
        %v2855 = vmul.f32 %v2431, %v2854
        %v2856 = vsub.f32 1.0, %v2855
        %v2857 = vmul.f32 %v2854, %v2856
        %v2858 = vadd.f32 %v2854, %v2857
        %vm2859 = vweird.f32 %v2431
        %vm2860 = vweird.f32 %v2854
        %vm2861 = vmor %vm2859, %vm2860
        %v2862 = vsel %vm2861, %v2854, %v2858
        %v2863 = vand.u32 2147483647, %v2431
        %vm2864 = vcmp.eq.f32.partialorder %v2863, 8.507059e+37
        %v2865 = vand.u32 %v2431, 2147483648
        %v2866 = vor.u32 1.1754944e-38, %v2865
        %v2867 = vsel %vm2864, %v2866, %v2862
        %v2868 = vmul.f32 1.0, %v2867
        %v2869 = vrcp.pop %v2432
        %v2870 = vmul.f32 %v2432, %v2869
        %v2871 = vsub.f32 1.0, %v2870
        %v2872 = vmul.f32 %v2869, %v2871
        %v2873 = vadd.f32 %v2869, %v2872
        %vm2874 = vweird.f32 %v2432
        %vm2875 = vweird.f32 %v2869
        %vm2876 = vmor %vm2874, %vm2875
        %v2877 = vsel %vm2876, %v2869, %v2873
        %v2878 = vand.u32 2147483647, %v2432
        %vm2879 = vcmp.eq.f32.partialorder %v2878, 8.507059e+37
        %v2880 = vand.u32 %v2432, 2147483648
        %v2881 = vor.u32 1.1754944e-38, %v2880
        %v2882 = vsel %vm2879, %v2881, %v2877
        %v2883 = vmul.f32 1.0, %v2882
        %v2884 = vrcp.pop %v2433
        %v2885 = vmul.f32 %v2433, %v2884
        %v2886 = vsub.f32 1.0, %v2885
        %v2887 = vmul.f32 %v2884, %v2886
        %v2888 = vadd.f32 %v2884, %v2887
        %vm2889 = vweird.f32 %v2433
        %vm2890 = vweird.f32 %v2884
        %vm2891 = vmor %vm2889, %vm2890
        %v2892 = vsel %vm2891, %v2884, %v2888
        %v2893 = vand.u32 2147483647, %v2433
        %vm2894 = vcmp.eq.f32.partialorder %v2893, 8.507059e+37
        %v2895 = vand.u32 %v2433, 2147483648
        %v2896 = vor.u32 1.1754944e-38, %v2895
        %v2897 = vsel %vm2894, %v2896, %v2892
        %v2898 = vmul.f32 1.0, %v2897
        %2930 = vrot.lane.b32.xlu0 %v2448, 64
        %v2931 = vpop.permute.xlu0 %2930
        %2932 = vrot.lane.b32.xlu0 %v2463, 64
        %v2933 = vpop.permute.xlu0 %2932
        %2934 = vrot.lane.b32.xlu0 %v2478, 64
        %v2935 = vpop.permute.xlu0 %2934
        %2936 = vrot.lane.b32.xlu0 %v2493, 64
        %v2937 = vpop.permute.xlu0 %2936
        %2938 = vrot.lane.b32.xlu0 %v2508, 64
        %v2939 = vpop.permute.xlu0 %2938
        %2940 = vrot.lane.b32.xlu0 %v2523, 64
        %v2941 = vpop.permute.xlu0 %2940
        %2942 = vrot.lane.b32.xlu0 %v2538, 64
        %v2943 = vpop.permute.xlu0 %2942
        %2944 = vrot.lane.b32.xlu0 %v2553, 64
        %v2945 = vpop.permute.xlu0 %2944
        %2946 = vrot.lane.b32.xlu0 %v2568, 64
        %v2947 = vpop.permute.xlu0 %2946
        %2948 = vrot.lane.b32.xlu0 %v2583, 64
        %v2949 = vpop.permute.xlu0 %2948
        %2950 = vrot.lane.b32.xlu0 %v2598, 64
        %v2951 = vpop.permute.xlu0 %2950
        %2952 = vrot.lane.b32.xlu0 %v2613, 64
        %v2953 = vpop.permute.xlu0 %2952
        %2954 = vrot.lane.b32.xlu0 %v2628, 64
        %v2955 = vpop.permute.xlu0 %2954
        %2956 = vrot.lane.b32.xlu0 %v2643, 64
        %v2957 = vpop.permute.xlu0 %2956
        %2958 = vrot.lane.b32.xlu0 %v2658, 64
        %v2959 = vpop.permute.xlu0 %2958
        %2960 = vrot.lane.b32.xlu0 %v2673, 64
        %v2961 = vpop.permute.xlu0 %2960
        %2962 = vrot.lane.b32.xlu0 %v2688, 64
        %v2963 = vpop.permute.xlu0 %2962
        %2964 = vrot.lane.b32.xlu0 %v2703, 64
        %v2965 = vpop.permute.xlu0 %2964
        %2966 = vrot.lane.b32.xlu0 %v2718, 64
        %v2967 = vpop.permute.xlu0 %2966
        %2968 = vrot.lane.b32.xlu0 %v2733, 64
        %v2969 = vpop.permute.xlu0 %2968
        %2970 = vrot.lane.b32.xlu0 %v2748, 64
        %v2971 = vpop.permute.xlu0 %2970
        %2972 = vrot.lane.b32.xlu0 %v2763, 64
        %v2973 = vpop.permute.xlu0 %2972
        %2974 = vrot.lane.b32.xlu0 %v2778, 64
        %v2975 = vpop.permute.xlu0 %2974
        %2976 = vrot.lane.b32.xlu0 %v2793, 64
        %v2977 = vpop.permute.xlu0 %2976
        %2978 = vrot.lane.b32.xlu0 %v2808, 64
        %v2979 = vpop.permute.xlu0 %2978
        %2980 = vrot.lane.b32.xlu0 %v2823, 64
        %v2981 = vpop.permute.xlu0 %2980
        %2982 = vrot.lane.b32.xlu0 %v2838, 64
        %v2983 = vpop.permute.xlu0 %2982
        %2984 = vrot.lane.b32.xlu0 %v2853, 64
        %v2985 = vpop.permute.xlu0 %2984
        %2986 = vrot.lane.b32.xlu0 %v2868, 64
        %v2987 = vpop.permute.xlu0 %2986
        %2988 = vrot.lane.b32.xlu0 %v2883, 64
        %v2989 = vpop.permute.xlu0 %2988
        %2990 = vrot.lane.b32.xlu0 %v2898, 64
        %v2991 = vpop.permute.xlu0 %2990
        %v3023 = vmul.f32 %v2232, %v2931
        %v3024 = vmul.f32 %v2234, %v2933
        %v3025 = vmul.f32 %v2237, %v2935
        %v3026 = vmul.f32 %v2239, %v2937
        %v3027 = vmul.f32 %v2242, %v2939
        %v3028 = vmul.f32 %v2244, %v2941
        %v3029 = vmul.f32 %v2247, %v2943
        %v3030 = vmul.f32 %v2249, %v2945
        %v3031 = vmul.f32 %v2252, %v2947
        %v3032 = vmul.f32 %v2254, %v2949
        %v3033 = vmul.f32 %v2257, %v2951
        %v3034 = vmul.f32 %v2259, %v2953
        %v3035 = vmul.f32 %v2262, %v2955
        %v3036 = vmul.f32 %v2264, %v2957
        %v3037 = vmul.f32 %v2267, %v2959
        %v3038 = vmul.f32 %v2269, %v2961
        %v3039 = vmul.f32 %v2272, %v2963
        %v3040 = vmul.f32 %v2274, %v2965
        %v3041 = vmul.f32 %v2277, %v2967
        %v3042 = vmul.f32 %v2279, %v2969
        %v3043 = vmul.f32 %v2282, %v2971
        %v3044 = vmul.f32 %v2284, %v2973
        %v3045 = vmul.f32 %v2287, %v2975
        %v3046 = vmul.f32 %v2289, %v2977
        %v3047 = vmul.f32 %v2292, %v2979
        %v3048 = vmul.f32 %v2294, %v2981
        %v3049 = vmul.f32 %v2297, %v2983
        %v3050 = vmul.f32 %v2299, %v2985
        %v3051 = vmul.f32 %v2302, %v2987
        %v3052 = vmul.f32 %v2304, %v2989
        %v3053 = vmul.f32 %v2307, %v2991
        %v3054 = vpack.c.bf16 %v3023, %v3023
        %v3055 = vpack.c.bf16 %v3024, %v3024
        %v3056 = vpack.c.bf16 %v3025, %v3025
        %v3057 = vpack.c.bf16 %v3026, %v3026
        %v3058 = vpack.c.bf16 %v3027, %v3027
        %v3059 = vpack.c.bf16 %v3028, %v3028
        %v3060 = vpack.c.bf16 %v3029, %v3029
        %v3061 = vpack.c.bf16 %v3030, %v3030
        %v3062 = vpack.c.bf16 %v3031, %v3031
        %v3063 = vpack.c.bf16 %v3032, %v3032
        %v3064 = vpack.c.bf16 %v3033, %v3033
        %v3065 = vpack.c.bf16 %v3034, %v3034
        %v3066 = vpack.c.bf16 %v3035, %v3035
        %v3067 = vpack.c.bf16 %v3036, %v3036
        %v3068 = vpack.c.bf16 %v3037, %v3037
        %v3069 = vpack.c.bf16 %v3038, %v3038
        %v3070 = vpack.c.bf16 %v3039, %v3039
        %v3071 = vpack.c.bf16 %v3040, %v3040
        %v3072 = vpack.c.bf16 %v3041, %v3041
        %v3073 = vpack.c.bf16 %v3042, %v3042
        %v3074 = vpack.c.bf16 %v3043, %v3043
        %v3075 = vpack.c.bf16 %v3044, %v3044
        %v3076 = vpack.c.bf16 %v3045, %v3045
        %v3077 = vpack.c.bf16 %v3046, %v3046
        %v3078 = vpack.c.bf16 %v3047, %v3047
        %v3079 = vpack.c.bf16 %v3048, %v3048
        %v3080 = vpack.c.bf16 %v3049, %v3049
        %v3081 = vpack.c.bf16 %v3050, %v3050
        %v3082 = vpack.c.bf16 %v3051, %v3051
        %v3083 = vpack.c.bf16 %v3052, %v3052
        %v3084 = vpack.c.bf16 %v3053, %v3053
        %vm3085 = vcmask 519168
        %3086 = vst.msk [vmem:[#allocation2] sm:$0xf] %vm3085, %v3054
        %3087 = vst.msk [vmem:[#allocation2 + $0x4] sm:$0xf] %vm3085, %v3055
        %3088 = vst.msk [vmem:[#allocation2 + $0x8] sm:$0xf] %vm3085, %v3056
        %3089 = vst.msk [vmem:[#allocation2 + $0xc] sm:$0xf] %vm3085, %v3057
        %3090 = vst.msk [vmem:[#allocation2 + $0x10] sm:$0xf] %vm3085, %v3058
        %3091 = vst.msk [vmem:[#allocation2 + $0x14] sm:$0xf] %vm3085, %v3059
        %3092 = vst.msk [vmem:[#allocation2 + $0x18] sm:$0xf] %vm3085, %v3060
        %3093 = vst.msk [vmem:[#allocation2 + $0x1c] sm:$0xf] %vm3085, %v3061
        %3094 = vst.msk [vmem:[#allocation2 + $0x20] sm:$0xf] %vm3085, %v3062
        %3095 = vst.msk [vmem:[#allocation2 + $0x24] sm:$0xf] %vm3085, %v3063
        %3096 = vst.msk [vmem:[#allocation2 + $0x28] sm:$0xf] %vm3085, %v3064
        %3097 = vst.msk [vmem:[#allocation2 + $0x2c] sm:$0xf] %vm3085, %v3065
        %3098 = vst.msk [vmem:[#allocation2 + $0x30] sm:$0xf] %vm3085, %v3066
        %3099 = vst.msk [vmem:[#allocation2 + $0x34] sm:$0xf] %vm3085, %v3067
        %3100 = vst.msk [vmem:[#allocation2 + $0x38] sm:$0xf] %vm3085, %v3068
        %3101 = vst.msk [vmem:[#allocation2 + $0x3c] sm:$0xf] %vm3085, %v3069
        %3102 = vst.msk [vmem:[#allocation2 + $0x40] sm:$0xf] %vm3085, %v3070
        %3103 = vst.msk [vmem:[#allocation2 + $0x44] sm:$0xf] %vm3085, %v3071
        %3104 = vst.msk [vmem:[#allocation2 + $0x48] sm:$0xf] %vm3085, %v3072
        %3105 = vst.msk [vmem:[#allocation2 + $0x4c] sm:$0xf] %vm3085, %v3073
        %3106 = vst.msk [vmem:[#allocation2 + $0x50] sm:$0xf] %vm3085, %v3074
        %3107 = vst.msk [vmem:[#allocation2 + $0x54] sm:$0xf] %vm3085, %v3075
        %3108 = vst.msk [vmem:[#allocation2 + $0x58] sm:$0xf] %vm3085, %v3076
        %3109 = vst.msk [vmem:[#allocation2 + $0x5c] sm:$0xf] %vm3085, %v3077
        %3110 = vst.msk [vmem:[#allocation2 + $0x60] sm:$0xf] %vm3085, %v3078
        %3111 = vst.msk [vmem:[#allocation2 + $0x64] sm:$0xf] %vm3085, %v3079
        %3112 = vst.msk [vmem:[#allocation2 + $0x68] sm:$0xf] %vm3085, %v3080
        %3113 = vst.msk [vmem:[#allocation2 + $0x6c] sm:$0xf] %vm3085, %v3081
        %3114 = vst.msk [vmem:[#allocation2 + $0x70] sm:$0xf] %vm3085, %v3082
        %3115 = vst.msk [vmem:[#allocation2 + $0x74] sm:$0xf] %vm3085, %v3083
        %3116 = vst.msk [vmem:[#allocation2 + $0x78] sm:$0xf] %vm3085, %v3084
        %v3117 = vld [vmem:[#allocation2] sm:$0xf]
        %v3118 = vld [vmem:[#allocation2 + $0x4] sm:$0xf]
        %v3119 = vld [vmem:[#allocation2 + $0x8] sm:$0xf]
        %v3120 = vld [vmem:[#allocation2 + $0xc] sm:$0xf]
        %v3121 = vld [vmem:[#allocation2 + $0x10] sm:$0xf]
        %v3122 = vld [vmem:[#allocation2 + $0x14] sm:$0xf]
        %v3123 = vld [vmem:[#allocation2 + $0x18] sm:$0xf]
        %v3124 = vld [vmem:[#allocation2 + $0x1c] sm:$0xf]
        %v3125 = vld [vmem:[#allocation2 + $0x20] sm:$0xf]
        %v3126 = vld [vmem:[#allocation2 + $0x24] sm:$0xf]
        %v3127 = vld [vmem:[#allocation2 + $0x28] sm:$0xf]
        %v3128 = vld [vmem:[#allocation2 + $0x2c] sm:$0xf]
        %v3129 = vld [vmem:[#allocation2 + $0x30] sm:$0xf]
        %v3130 = vld [vmem:[#allocation2 + $0x34] sm:$0xf]
        %v3131 = vld [vmem:[#allocation2 + $0x38] sm:$0xf]
        %v3133 = vunpack.c.l.b16 %v3118
        %v3134 = vpack.c.b16 %v3133, %v3133
        %3135 = vrot.lane.b32.xlu0 %v3134, 64
        %v3136 = vpop.permute.xlu0 %3135
        %v3138 = vunpack.c.l.b16 %v3120
        %v3139 = vpack.c.b16 %v3138, %v3138
        %3140 = vrot.lane.b32.xlu0 %v3139, 64
        %v3141 = vpop.permute.xlu0 %3140
        %v3143 = vunpack.c.l.b16 %v3122
        %v3144 = vpack.c.b16 %v3143, %v3143
        %3145 = vrot.lane.b32.xlu0 %v3144, 64
        %v3146 = vpop.permute.xlu0 %3145
        %v3148 = vunpack.c.l.b16 %v3124
        %v3149 = vpack.c.b16 %v3148, %v3148
        %3150 = vrot.lane.b32.xlu0 %v3149, 64
        %v3151 = vpop.permute.xlu0 %3150
        %v3153 = vunpack.c.l.b16 %v3126
        %v3154 = vpack.c.b16 %v3153, %v3153
        %3155 = vrot.lane.b32.xlu0 %v3154, 64
        %v3156 = vpop.permute.xlu0 %3155
        %v3158 = vunpack.c.l.b16 %v3128
        %v3159 = vpack.c.b16 %v3158, %v3158
        %3160 = vrot.lane.b32.xlu0 %v3159, 64
        %v3161 = vpop.permute.xlu0 %3160
        %v3163 = vunpack.c.l.b16 %v3130
        %v3164 = vpack.c.b16 %v3163, %v3163
        %3165 = vrot.lane.b32.xlu0 %v3164, 64
        %v3166 = vpop.permute.xlu0 %3165
        %v3169 = vsel %vm1557, %v3117, %v3136
        %v3172 = vsel %vm1557, %v3119, %v3141
        %v3175 = vsel %vm1557, %v3121, %v3146
        %v3178 = vsel %vm1557, %v3123, %v3151
        %v3181 = vsel %vm1557, %v3125, %v3156
        %v3184 = vsel %vm1557, %v3127, %v3161
        %v3187 = vsel %vm1557, %v3129, %v3166
        %v3188 = vld [vmem:[#allocation2 + $0x3c] sm:$0xf]
        %v3189 = vld [vmem:[#allocation2 + $0x40] sm:$0xf]
        %v3190 = vld [vmem:[#allocation2 + $0x44] sm:$0xf]
        %v3191 = vld [vmem:[#allocation2 + $0x48] sm:$0xf]
        %v3192 = vld [vmem:[#allocation2 + $0x4c] sm:$0xf]
        %v3193 = vld [vmem:[#allocation2 + $0x50] sm:$0xf]
        %v3194 = vld [vmem:[#allocation2 + $0x54] sm:$0xf]
        %v3196 = vunpack.c.l.b16 %v3125
        %v3197 = vpack.c.b16 %v3196, %v3196
        %3198 = vrot.lane.b32.xlu0 %v3197, 64
        %v3199 = vpop.permute.xlu0 %3198
        %v3201 = vunpack.c.l.b16 %v3127
        %v3202 = vpack.c.b16 %v3201, %v3201
        %3203 = vrot.lane.b32.xlu0 %v3202, 64
        %v3204 = vpop.permute.xlu0 %3203
        %v3206 = vunpack.c.l.b16 %v3129
        %v3207 = vpack.c.b16 %v3206, %v3206
        %3208 = vrot.lane.b32.xlu0 %v3207, 64
        %v3209 = vpop.permute.xlu0 %3208
        %v3211 = vunpack.c.l.b16 %v3131
        %v3212 = vpack.c.b16 %v3211, %v3211
        %3213 = vrot.lane.b32.xlu0 %v3212, 64
        %v3214 = vpop.permute.xlu0 %3213
        %v3216 = vunpack.c.l.b16 %v3189
        %v3217 = vpack.c.b16 %v3216, %v3216
        %3218 = vrot.lane.b32.xlu0 %v3217, 64
        %v3219 = vpop.permute.xlu0 %3218
        %v3221 = vunpack.c.l.b16 %v3191
        %v3222 = vpack.c.b16 %v3221, %v3221
        %3223 = vrot.lane.b32.xlu0 %v3222, 64
        %v3224 = vpop.permute.xlu0 %3223
        %v3226 = vunpack.c.l.b16 %v3193
        %v3227 = vpack.c.b16 %v3226, %v3226
        %3228 = vrot.lane.b32.xlu0 %v3227, 64
        %v3229 = vpop.permute.xlu0 %3228
        %v3232 = vsel %vm1557, %v3124, %v3199
        %v3235 = vsel %vm1557, %v3126, %v3204
        %v3238 = vsel %vm1557, %v3128, %v3209
        %v3241 = vsel %vm1557, %v3130, %v3214
        %v3244 = vsel %vm1557, %v3188, %v3219
        %v3247 = vsel %vm1557, %v3190, %v3224
        %v3250 = vsel %vm1557, %v3192, %v3229
        %v3251 = vld [vmem:[#allocation2 + $0x58] sm:$0xf]
        %v3252 = vld [vmem:[#allocation2 + $0x5c] sm:$0xf]
        %v3253 = vld [vmem:[#allocation2 + $0x60] sm:$0xf]
        %v3254 = vld [vmem:[#allocation2 + $0x64] sm:$0xf]
        %v3255 = vld [vmem:[#allocation2 + $0x68] sm:$0xf]
        %v3256 = vld [vmem:[#allocation2 + $0x6c] sm:$0xf]
        %v3257 = vld [vmem:[#allocation2 + $0x70] sm:$0xf]
        %v3259 = vunpack.c.l.b16 %v3188
        %v3260 = vpack.c.b16 %v3259, %v3259
        %3261 = vrot.lane.b32.xlu0 %v3260, 64
        %v3262 = vpop.permute.xlu0 %3261
        %v3264 = vunpack.c.l.b16 %v3190
        %v3265 = vpack.c.b16 %v3264, %v3264
        %3266 = vrot.lane.b32.xlu0 %v3265, 64
        %v3267 = vpop.permute.xlu0 %3266
        %v3269 = vunpack.c.l.b16 %v3192
        %v3270 = vpack.c.b16 %v3269, %v3269
        %3271 = vrot.lane.b32.xlu0 %v3270, 64
        %v3272 = vpop.permute.xlu0 %3271
        %v3274 = vunpack.c.l.b16 %v3194
        %v3275 = vpack.c.b16 %v3274, %v3274
        %3276 = vrot.lane.b32.xlu0 %v3275, 64
        %v3277 = vpop.permute.xlu0 %3276
        %v3279 = vunpack.c.l.b16 %v3252
        %v3280 = vpack.c.b16 %v3279, %v3279
        %3281 = vrot.lane.b32.xlu0 %v3280, 64
        %v3282 = vpop.permute.xlu0 %3281
        %v3284 = vunpack.c.l.b16 %v3254
        %v3285 = vpack.c.b16 %v3284, %v3284
        %3286 = vrot.lane.b32.xlu0 %v3285, 64
        %v3287 = vpop.permute.xlu0 %3286
        %v3289 = vunpack.c.l.b16 %v3256
        %v3290 = vpack.c.b16 %v3289, %v3289
        %3291 = vrot.lane.b32.xlu0 %v3290, 64
        %v3292 = vpop.permute.xlu0 %3291
        %v3295 = vsel %vm1557, %v3131, %v3262
        %v3299 = vsel %vm1557, %v3189, %v3267
        %v3303 = vsel %vm1557, %v3191, %v3272
        %v3307 = vsel %vm1557, %v3193, %v3277
        %v3311 = vsel %vm1557, %v3251, %v3282
        %v3315 = vsel %vm1557, %v3253, %v3287
        %v3319 = vsel %vm1557, %v3255, %v3292
        %v3328 = vrot.slane %v3232, 4
        %v3329 = vrot.slane %v3235, 4
        %v3330 = vrot.slane %v3238, 4
        %v3331 = vrot.slane %v3241, 4
        %v3332 = vrot.slane %v3244, 4
        %v3333 = vrot.slane %v3247, 4
        %v3334 = vrot.slane %v3250, 4
        %v3335 = vrot.slane %v3194, 4
        %vm3336 = vcmask 1043456
        %v3338 = vsel %vm3336, %v3169, %v3328
        %v3341 = vsel %vm3336, %v3172, %v3329
        %v3344 = vsel %vm3336, %v3175, %v3330
        %v3347 = vsel %vm3336, %v3178, %v3331
        %v3350 = vsel %vm3336, %v3181, %v3332
        %v3353 = vsel %vm3336, %v3184, %v3333
        %v3356 = vsel %vm3336, %v3187, %v3334
        %v3359 = vsel %vm3336, %v3131, %v3335
        %v3360 = vld [vmem:[%s3] sm:$0xf]
        %v3361 = vld [vmem:[%s3 + $0x4] sm:$0xf]
        %v3362 = vld [vmem:[%s3 + $0x8] sm:$0xf]
        %v3363 = vld [vmem:[%s3 + $0xc] sm:$0xf]
        %v3364 = vld [vmem:[%s3 + $0x10] sm:$0xf]
        %v3365 = vld [vmem:[%s3 + $0x14] sm:$0xf]
        %v3366 = vld [vmem:[%s3 + $0x18] sm:$0xf]
        %v3367 = vld [vmem:[%s3 + $0x1c] sm:$0xf]
        %v3368 = vld [vmem:[%s3 + $0x20] sm:$0xf]
        %v3369 = vld [vmem:[%s3 + $0x24] sm:$0xf]
        %v3370 = vld [vmem:[%s3 + $0x28] sm:$0xf]
        %v3371 = vld [vmem:[%s3 + $0x2c] sm:$0xf]
        %v3372 = vld [vmem:[%s3 + $0x30] sm:$0xf]
        %v3373 = vld [vmem:[%s3 + $0x34] sm:$0xf]
        %v3374 = vld [vmem:[%s3 + $0x38] sm:$0xf]
        %v3375 = vld [vmem:[%s3 + $0x3c] sm:$0xf]
        %v3376 = vld [vmem:[%s3 + $0x40] sm:$0xf]
        %v3377 = vld [vmem:[%s3 + $0x44] sm:$0xf]
        %v3378 = vld [vmem:[%s3 + $0x48] sm:$0xf]
        %v3379 = vld [vmem:[%s3 + $0x4c] sm:$0xf]
        %v3380 = vld [vmem:[%s3 + $0x50] sm:$0xf]
        %v3381 = vld [vmem:[%s3 + $0x54] sm:$0xf]
        %v3382 = vld [vmem:[%s3 + $0x58] sm:$0xf]
        %v3383 = vld [vmem:[%s3 + $0x5c] sm:$0xf]
        %v3384 = vld [vmem:[%s3 + $0x60] sm:$0xf]
        %v3385 = vld [vmem:[%s3 + $0x64] sm:$0xf]
        %v3386 = vld [vmem:[%s3 + $0x68] sm:$0xf]
        %v3387 = vld [vmem:[%s3 + $0x6c] sm:$0xf]
        %v3388 = vld [vmem:[%s3 + $0x70] sm:$0xf]
        %v3389 = vld [vmem:[%s3 + $0x74] sm:$0xf]
        %v3390 = vld [vmem:[%s3 + $0x78] sm:$0xf]
        %v3391 = vld [vmem:[%s3 + $0x7c] sm:$0xf]
        %v3392 = vld [vmem:[%s3 + $0x80] sm:$0xf]
        %v3393 = vld [vmem:[%s3 + $0x84] sm:$0xf]
        %v3394 = vld [vmem:[%s3 + $0x88] sm:$0xf]
        %v3395 = vld [vmem:[%s3 + $0x8c] sm:$0xf]
        %v3396 = vld [vmem:[%s3 + $0x90] sm:$0xf]
        %v3397 = vld [vmem:[%s3 + $0x94] sm:$0xf]
        %v3398 = vld [vmem:[%s3 + $0x98] sm:$0xf]
        %v3399 = vld [vmem:[%s3 + $0x9c] sm:$0xf]
        %v3400 = vld [vmem:[%s3 + $0xa0] sm:$0xf]
        %v3401 = vld [vmem:[%s3 + $0xa4] sm:$0xf]
        %v3402 = vld [vmem:[%s3 + $0xa8] sm:$0xf]
        %v3403 = vld [vmem:[%s3 + $0xac] sm:$0xf]
        %v3404 = vld [vmem:[%s3 + $0xb0] sm:$0xf]
        %v3405 = vld [vmem:[%s3 + $0xb4] sm:$0xf]
        %v3406 = vld [vmem:[%s3 + $0xb8] sm:$0xf]
        %v3407 = vld [vmem:[%s3 + $0xbc] sm:$0xf]
        %v3408 = vld [vmem:[%s3 + $0xc0] sm:$0xf]
        %v3409 = vld [vmem:[%s3 + $0xc4] sm:$0xf]
        %v3410 = vld [vmem:[%s3 + $0xc8] sm:$0xf]
        %v3411 = vld [vmem:[%s3 + $0xcc] sm:$0xf]
        %v3412 = vld [vmem:[%s3 + $0xd0] sm:$0xf]
        %v3413 = vld [vmem:[%s3 + $0xd4] sm:$0xf]
        %v3414 = vld [vmem:[%s3 + $0xd8] sm:$0xf]
        %v3415 = vld [vmem:[%s3 + $0xdc] sm:$0xf]
        %v3416 = vld [vmem:[%s3 + $0xe0] sm:$0xf]
        %v3417 = vld [vmem:[%s3 + $0xe4] sm:$0xf]
        %v3418 = vld [vmem:[%s3 + $0xe8] sm:$0xf]
        %v3419 = vld [vmem:[%s3 + $0xec] sm:$0xf]
        %v3420 = vld [vmem:[%s3 + $0xf0] sm:$0xf]
        %v3421 = vld [vmem:[%s3 + $0xf4] sm:$0xf]
        %v3422 = vld [vmem:[%s3 + $0xf8] sm:$0xf]
        %v3423 = vld [vmem:[%s3 + $0xfc] sm:$0xf]
        %v3424 = vld [vmem:[%s3 + $0x100] sm:$0xf]
        %v3425 = vld [vmem:[%s3 + $0x104] sm:$0xf]
        %v3426 = vld [vmem:[%s3 + $0x108] sm:$0xf]
        %v3427 = vld [vmem:[%s3 + $0x10c] sm:$0xf]
        %v3428 = vld [vmem:[%s3 + $0x110] sm:$0xf]
        %v3429 = vld [vmem:[%s3 + $0x114] sm:$0xf]
        %v3430 = vld [vmem:[%s3 + $0x118] sm:$0xf]
        %v3431 = vld [vmem:[%s3 + $0x11c] sm:$0xf]
        %v3432 = vld [vmem:[%s3 + $0x120] sm:$0xf]
        %v3433 = vld [vmem:[%s3 + $0x124] sm:$0xf]
        %v3434 = vld [vmem:[%s3 + $0x128] sm:$0xf]
        %v3435 = vld [vmem:[%s3 + $0x12c] sm:$0xf]
        %v3436 = vld [vmem:[%s3 + $0x130] sm:$0xf]
        %v3437 = vld [vmem:[%s3 + $0x134] sm:$0xf]
        %v3438 = vld [vmem:[%s3 + $0x138] sm:$0xf]
        %v3439 = vld [vmem:[%s3 + $0x13c] sm:$0xf]
        %v3440 = vld [vmem:[%s3 + $0x140] sm:$0xf]
        %v3441 = vld [vmem:[%s3 + $0x144] sm:$0xf]
        %v3442 = vld [vmem:[%s3 + $0x148] sm:$0xf]
        %v3443 = vld [vmem:[%s3 + $0x14c] sm:$0xf]
        %v3444 = vld [vmem:[%s3 + $0x150] sm:$0xf]
        %v3445 = vld [vmem:[%s3 + $0x154] sm:$0xf]
        %v3446 = vld [vmem:[%s3 + $0x158] sm:$0xf]
        %v3447 = vld [vmem:[%s3 + $0x15c] sm:$0xf]
        %v3448 = vld [vmem:[%s3 + $0x160] sm:$0xf]
        %v3449 = vld [vmem:[%s3 + $0x164] sm:$0xf]
        %v3450 = vld [vmem:[%s3 + $0x168] sm:$0xf]
        %v3451 = vld [vmem:[%s3 + $0x16c] sm:$0xf]
        %v3452 = vld [vmem:[%s3 + $0x170] sm:$0xf]
        %v3453 = vld [vmem:[%s3 + $0x174] sm:$0xf]
        %v3454 = vld [vmem:[%s3 + $0x178] sm:$0xf]
        %v3455 = vld [vmem:[%s3 + $0x17c] sm:$0xf]
        %v3456 = vld [vmem:[%s3 + $0x180] sm:$0xf]
        %v3457 = vld [vmem:[%s3 + $0x184] sm:$0xf]
        %v3458 = vld [vmem:[%s3 + $0x188] sm:$0xf]
        %v3459 = vld [vmem:[%s3 + $0x18c] sm:$0xf]
        %v3460 = vld [vmem:[%s3 + $0x190] sm:$0xf]
        %v3461 = vld [vmem:[%s3 + $0x194] sm:$0xf]
        %v3462 = vld [vmem:[%s3 + $0x198] sm:$0xf]
        %v3463 = vld [vmem:[%s3 + $0x19c] sm:$0xf]
        %v3464 = vld [vmem:[%s3 + $0x1a0] sm:$0xf]
        %v3465 = vld [vmem:[%s3 + $0x1a4] sm:$0xf]
        %v3466 = vld [vmem:[%s3 + $0x1a8] sm:$0xf]
        %v3467 = vld [vmem:[%s3 + $0x1ac] sm:$0xf]
        %v3468 = vld [vmem:[%s3 + $0x1b0] sm:$0xf]
        %v3469 = vld [vmem:[%s3 + $0x1b4] sm:$0xf]
        %v3470 = vld [vmem:[%s3 + $0x1b8] sm:$0xf]
        %v3471 = vld [vmem:[%s3 + $0x1bc] sm:$0xf]
        %v3472 = vld [vmem:[%s3 + $0x1c0] sm:$0xf]
        %v3473 = vld [vmem:[%s3 + $0x1c4] sm:$0xf]
        %v3474 = vld [vmem:[%s3 + $0x1c8] sm:$0xf]
        %v3475 = vld [vmem:[%s3 + $0x1cc] sm:$0xf]
        %v3476 = vld [vmem:[%s3 + $0x1d0] sm:$0xf]
        %v3477 = vld [vmem:[%s3 + $0x1d4] sm:$0xf]
        %v3478 = vld [vmem:[%s3 + $0x1d8] sm:$0xf]
        %v3479 = vld [vmem:[%s3 + $0x1dc] sm:$0xf]
        %v3480 = vld [vmem:[%s4] sm:$0x1]
        %v3482 = vperm.slane %v3480, 0
        %v3604 = vunpack.c.l.b16 %v3360
        %v3605 = vunpack.c.l.b16 %v3361
        %v3606 = vunpack.c.l.b16 %v3362
        %v3607 = vunpack.c.l.b16 %v3363
        %v3608 = vunpack.c.l.b16 %v3364
        %v3609 = vunpack.c.l.b16 %v3365
        %v3610 = vunpack.c.l.b16 %v3366
        %v3611 = vunpack.c.l.b16 %v3367
        %v3612 = vunpack.c.l.b16 %v3368
        %v3613 = vunpack.c.l.b16 %v3369
        %v3614 = vunpack.c.l.b16 %v3370
        %v3615 = vunpack.c.l.b16 %v3371
        %v3616 = vunpack.c.l.b16 %v3372
        %v3617 = vunpack.c.l.b16 %v3373
        %v3618 = vunpack.c.l.b16 %v3374
        %v3619 = vunpack.c.l.b16 %v3375
        %v3620 = vunpack.c.l.b16 %v3376
        %v3621 = vunpack.c.l.b16 %v3377
        %v3622 = vunpack.c.l.b16 %v3378
        %v3623 = vunpack.c.l.b16 %v3379
        %v3624 = vunpack.c.l.b16 %v3380
        %v3625 = vunpack.c.l.b16 %v3381
        %v3626 = vunpack.c.l.b16 %v3382
        %v3627 = vunpack.c.l.b16 %v3383
        %v3628 = vunpack.c.l.b16 %v3384
        %v3629 = vunpack.c.l.b16 %v3385
        %v3630 = vunpack.c.l.b16 %v3386
        %v3631 = vunpack.c.l.b16 %v3387
        %v3632 = vunpack.c.l.b16 %v3388
        %v3633 = vunpack.c.l.b16 %v3389
        %v3634 = vunpack.c.l.b16 %v3390
        %v3635 = vunpack.c.l.b16 %v3391
        %v3636 = vunpack.c.l.b16 %v3392
        %v3637 = vunpack.c.l.b16 %v3393
        %v3638 = vunpack.c.l.b16 %v3394
        %v3639 = vunpack.c.l.b16 %v3395
        %v3640 = vunpack.c.l.b16 %v3396
        %v3641 = vunpack.c.l.b16 %v3397
        %v3642 = vunpack.c.l.b16 %v3398
        %v3643 = vunpack.c.l.b16 %v3399
        %v3644 = vunpack.c.l.b16 %v3400
        %v3645 = vunpack.c.l.b16 %v3401
        %v3646 = vunpack.c.l.b16 %v3402
        %v3647 = vunpack.c.l.b16 %v3403
        %v3648 = vunpack.c.l.b16 %v3404
        %v3649 = vunpack.c.l.b16 %v3405
        %v3650 = vunpack.c.l.b16 %v3406
        %v3651 = vunpack.c.l.b16 %v3407
        %v3652 = vunpack.c.l.b16 %v3408
        %v3653 = vunpack.c.l.b16 %v3409
        %v3654 = vunpack.c.l.b16 %v3410
        %v3655 = vunpack.c.l.b16 %v3411
        %v3656 = vunpack.c.l.b16 %v3412
        %v3657 = vunpack.c.l.b16 %v3413
        %v3658 = vunpack.c.l.b16 %v3414
        %v3659 = vunpack.c.l.b16 %v3415
        %v3660 = vunpack.c.l.b16 %v3416
        %v3661 = vunpack.c.l.b16 %v3417
        %v3662 = vunpack.c.l.b16 %v3418
        %v3663 = vunpack.c.l.b16 %v3419
        %v3664 = vunpack.c.l.b16 %v3420
        %v3665 = vunpack.c.l.b16 %v3421
        %v3666 = vunpack.c.l.b16 %v3422
        %v3667 = vunpack.c.l.b16 %v3423
        %v3668 = vunpack.c.l.b16 %v3424
        %v3669 = vunpack.c.l.b16 %v3425
        %v3670 = vunpack.c.l.b16 %v3426
        %v3671 = vunpack.c.l.b16 %v3427
        %v3672 = vunpack.c.l.b16 %v3428
        %v3673 = vunpack.c.l.b16 %v3429
        %v3674 = vunpack.c.l.b16 %v3430
        %v3675 = vunpack.c.l.b16 %v3431
        %v3676 = vunpack.c.l.b16 %v3432
        %v3677 = vunpack.c.l.b16 %v3433
        %v3678 = vunpack.c.l.b16 %v3434
        %v3679 = vunpack.c.l.b16 %v3435
        %v3680 = vunpack.c.l.b16 %v3436
        %v3681 = vunpack.c.l.b16 %v3437
        %v3682 = vunpack.c.l.b16 %v3438
        %v3683 = vunpack.c.l.b16 %v3439
        %v3684 = vunpack.c.l.b16 %v3440
        %v3685 = vunpack.c.l.b16 %v3441
        %v3686 = vunpack.c.l.b16 %v3442
        %v3687 = vunpack.c.l.b16 %v3443
        %v3688 = vunpack.c.l.b16 %v3444
        %v3689 = vunpack.c.l.b16 %v3445
        %v3690 = vunpack.c.l.b16 %v3446
        %v3691 = vunpack.c.l.b16 %v3447
        %v3692 = vunpack.c.l.b16 %v3448
        %v3693 = vunpack.c.l.b16 %v3449
        %v3694 = vunpack.c.l.b16 %v3450
        %v3695 = vunpack.c.l.b16 %v3451
        %v3696 = vunpack.c.l.b16 %v3452
        %v3697 = vunpack.c.l.b16 %v3453
        %v3698 = vunpack.c.l.b16 %v3454
        %v3699 = vunpack.c.l.b16 %v3455
        %v3700 = vunpack.c.l.b16 %v3456
        %v3701 = vunpack.c.l.b16 %v3457
        %v3702 = vunpack.c.l.b16 %v3458
        %v3703 = vunpack.c.l.b16 %v3459
        %v3704 = vunpack.c.l.b16 %v3460
        %v3705 = vunpack.c.l.b16 %v3461
        %v3706 = vunpack.c.l.b16 %v3462
        %v3707 = vunpack.c.l.b16 %v3463
        %v3708 = vunpack.c.l.b16 %v3464
        %v3709 = vunpack.c.l.b16 %v3465
        %v3710 = vunpack.c.l.b16 %v3466
        %v3711 = vunpack.c.l.b16 %v3467
        %v3712 = vunpack.c.l.b16 %v3468
        %v3713 = vunpack.c.l.b16 %v3469
        %v3714 = vunpack.c.l.b16 %v3470
        %v3715 = vunpack.c.l.b16 %v3471
        %v3716 = vunpack.c.l.b16 %v3472
        %v3717 = vunpack.c.l.b16 %v3473
        %v3718 = vunpack.c.l.b16 %v3474
        %v3719 = vunpack.c.l.b16 %v3475
        %v3720 = vunpack.c.l.b16 %v3476
        %v3721 = vunpack.c.l.b16 %v3477
        %v3722 = vunpack.c.l.b16 %v3478
        %v3723 = vunpack.c.l.b16 %v3479
        %v3724 = vpack.c.b16 %v3605, %v3604
        %v3725 = vpack.c.b16 %v3607, %v3606
        %v3726 = vpack.c.b16 %v3609, %v3608
        %v3727 = vpack.c.b16 %v3611, %v3610
        %v3728 = vpack.c.b16 %v3613, %v3612
        %v3729 = vpack.c.b16 %v3615, %v3614
        %v3730 = vpack.c.b16 %v3617, %v3616
        %v3731 = vpack.c.b16 %v3619, %v3618
        %v3732 = vpack.c.b16 %v3621, %v3620
        %v3733 = vpack.c.b16 %v3623, %v3622
        %v3734 = vpack.c.b16 %v3625, %v3624
        %v3735 = vpack.c.b16 %v3627, %v3626
        %v3736 = vpack.c.b16 %v3629, %v3628
        %v3737 = vpack.c.b16 %v3631, %v3630
        %v3738 = vpack.c.b16 %v3633, %v3632
        %v3739 = vpack.c.b16 %v3635, %v3634
        %v3740 = vpack.c.b16 %v3637, %v3636
        %v3741 = vpack.c.b16 %v3639, %v3638
        %v3742 = vpack.c.b16 %v3641, %v3640
        %v3743 = vpack.c.b16 %v3643, %v3642
        %v3744 = vpack.c.b16 %v3645, %v3644
        %v3745 = vpack.c.b16 %v3647, %v3646
        %v3746 = vpack.c.b16 %v3649, %v3648
        %v3747 = vpack.c.b16 %v3651, %v3650
        %v3748 = vpack.c.b16 %v3653, %v3652
        %v3749 = vpack.c.b16 %v3655, %v3654
        %v3750 = vpack.c.b16 %v3657, %v3656
        %v3751 = vpack.c.b16 %v3659, %v3658
        %v3752 = vpack.c.b16 %v3661, %v3660
        %v3753 = vpack.c.b16 %v3663, %v3662
        %v3754 = vpack.c.b16 %v3665, %v3664
        %v3755 = vpack.c.b16 %v3667, %v3666
        %v3756 = vpack.c.b16 %v3669, %v3668
        %v3757 = vpack.c.b16 %v3671, %v3670
        %v3758 = vpack.c.b16 %v3673, %v3672
        %v3759 = vpack.c.b16 %v3675, %v3674
        %v3760 = vpack.c.b16 %v3677, %v3676
        %v3761 = vpack.c.b16 %v3679, %v3678
        %v3762 = vpack.c.b16 %v3681, %v3680
        %v3763 = vpack.c.b16 %v3683, %v3682
        %v3764 = vpack.c.b16 %v3685, %v3684
        %v3765 = vpack.c.b16 %v3687, %v3686
        %v3766 = vpack.c.b16 %v3689, %v3688
        %v3767 = vpack.c.b16 %v3691, %v3690
        %v3768 = vpack.c.b16 %v3693, %v3692
        %v3769 = vpack.c.b16 %v3695, %v3694
        %v3770 = vpack.c.b16 %v3697, %v3696
        %v3771 = vpack.c.b16 %v3699, %v3698
        %v3772 = vpack.c.b16 %v3701, %v3700
        %v3773 = vpack.c.b16 %v3703, %v3702
        %v3774 = vpack.c.b16 %v3705, %v3704
        %v3775 = vpack.c.b16 %v3707, %v3706
        %v3776 = vpack.c.b16 %v3709, %v3708
        %v3777 = vpack.c.b16 %v3711, %v3710
        %v3778 = vpack.c.b16 %v3713, %v3712
        %v3779 = vpack.c.b16 %v3715, %v3714
        %v3780 = vpack.c.b16 %v3717, %v3716
        %v3781 = vpack.c.b16 %v3719, %v3718
        %v3782 = vpack.c.b16 %v3721, %v3720
        %v3783 = vpack.c.b16 %v3723, %v3722
        %v3844 = vsel %vm1557, %v3359, 0
        %v3847 = vsel %vm1557, %v3257, 0
        %3849 = vmatpush.bf16.msra.mxu0 %v3731
        %3850 = vmatpush.bf16.msra.mxu0 %v3730
        %3851 = vmatpush.bf16.msra.mxu0 %v3729
        %3852 = vmatpush.bf16.msra.mxu0 %v3728
        %3853 = vmatpush.bf16.msra.mxu0 %v3727
        %3854 = vmatpush.bf16.msra.mxu0 %v3726
        %3855 = vmatpush.bf16.msra.mxu0 %v3725
        %3856 = vmatpush.bf16.msra.mxu0 %v3724
        %3857 = vmatmul.bf16.gmra.mxu0 %v3338
        %v3858 = vpop.f32.mrf.mxu0
        %v3859 = vadd.f32 %v3482, %v3858
        %v3860 = vpop.f32.mrf.mxu0
        %v3861 = vadd.f32 %v3482, %v3860
        %3862 = vmatmul.bf16.gmra.mxu0 %v3295
        %v3863 = vpop.f32.mrf.mxu0
        %v3864 = vadd.f32 %v3482, %v3863
        %v3865 = vpop.f32.mrf.mxu0
        %3866 = vdwg.mxu0
        %3867 = vmatpush.bf16.msra.mxu0 %v3739
        %3868 = vmatpush.bf16.msra.mxu0 %v3738
        %3869 = vmatpush.bf16.msra.mxu0 %v3737
        %3870 = vmatpush.bf16.msra.mxu0 %v3736
        %3871 = vmatpush.bf16.msra.mxu0 %v3735
        %3872 = vmatpush.bf16.msra.mxu0 %v3734
        %3873 = vmatpush.bf16.msra.mxu0 %v3733
        %3874 = vmatpush.bf16.msra.mxu0 %v3732
        %3875 = vmatmul.bf16.gmra.mxu0 %v3341
        %v3876 = vpop.f32.mrf.mxu0
        %v3877 = vadd.f32 %v3859, %v3876
        %v3878 = vpop.f32.mrf.mxu0
        %v3879 = vadd.f32 %v3861, %v3878
        %3880 = vmatmul.bf16.gmra.mxu0 %v3299
        %v3881 = vpop.f32.mrf.mxu0
        %v3882 = vadd.f32 %v3864, %v3881
        %v3883 = vpop.f32.mrf.mxu0
        %3884 = vdwg.mxu0
        %3885 = vmatpush.bf16.msra.mxu0 %v3747
        %3886 = vmatpush.bf16.msra.mxu0 %v3746
        %3887 = vmatpush.bf16.msra.mxu0 %v3745
        %3888 = vmatpush.bf16.msra.mxu0 %v3744
        %3889 = vmatpush.bf16.msra.mxu0 %v3743
        %3890 = vmatpush.bf16.msra.mxu0 %v3742
        %3891 = vmatpush.bf16.msra.mxu0 %v3741
        %3892 = vmatpush.bf16.msra.mxu0 %v3740
        %3893 = vmatmul.bf16.gmra.mxu0 %v3344
        %v3894 = vpop.f32.mrf.mxu0
        %v3895 = vadd.f32 %v3877, %v3894
        %v3896 = vpop.f32.mrf.mxu0
        %v3897 = vadd.f32 %v3879, %v3896
        %3898 = vmatmul.bf16.gmra.mxu0 %v3303
        %v3899 = vpop.f32.mrf.mxu0
        %v3900 = vadd.f32 %v3882, %v3899
        %v3901 = vpop.f32.mrf.mxu0
        %3902 = vdwg.mxu0
        %3903 = vmatpush.bf16.msra.mxu0 %v3755
        %3904 = vmatpush.bf16.msra.mxu0 %v3754
        %3905 = vmatpush.bf16.msra.mxu0 %v3753
        %3906 = vmatpush.bf16.msra.mxu0 %v3752
        %3907 = vmatpush.bf16.msra.mxu0 %v3751
        %3908 = vmatpush.bf16.msra.mxu0 %v3750
        %3909 = vmatpush.bf16.msra.mxu0 %v3749
        %3910 = vmatpush.bf16.msra.mxu0 %v3748
        %3911 = vmatmul.bf16.gmra.mxu0 %v3347
        %v3912 = vpop.f32.mrf.mxu0
        %v3913 = vadd.f32 %v3895, %v3912
        %v3914 = vpop.f32.mrf.mxu0
        %v3915 = vadd.f32 %v3897, %v3914
        %3916 = vmatmul.bf16.gmra.mxu0 %v3307
        %v3917 = vpop.f32.mrf.mxu0
        %v3918 = vadd.f32 %v3900, %v3917
        %v3919 = vpop.f32.mrf.mxu0
        %3920 = vdwg.mxu0
        %3921 = vmatpush.bf16.msra.mxu0 %v3763
        %3922 = vmatpush.bf16.msra.mxu0 %v3762
        %3923 = vmatpush.bf16.msra.mxu0 %v3761
        %3924 = vmatpush.bf16.msra.mxu0 %v3760
        %3925 = vmatpush.bf16.msra.mxu0 %v3759
        %3926 = vmatpush.bf16.msra.mxu0 %v3758
        %3927 = vmatpush.bf16.msra.mxu0 %v3757
        %3928 = vmatpush.bf16.msra.mxu0 %v3756
        %3929 = vmatmul.bf16.gmra.mxu0 %v3350
        %v3930 = vpop.f32.mrf.mxu0
        %v3931 = vadd.f32 %v3913, %v3930
        %v3932 = vpop.f32.mrf.mxu0
        %v3933 = vadd.f32 %v3915, %v3932
        %3934 = vmatmul.bf16.gmra.mxu0 %v3311
        %v3935 = vpop.f32.mrf.mxu0
        %v3936 = vadd.f32 %v3918, %v3935
        %v3937 = vpop.f32.mrf.mxu0
        %3938 = vdwg.mxu0
        %3939 = vmatpush.bf16.msra.mxu0 %v3771
        %3940 = vmatpush.bf16.msra.mxu0 %v3770
        %3941 = vmatpush.bf16.msra.mxu0 %v3769
        %3942 = vmatpush.bf16.msra.mxu0 %v3768
        %3943 = vmatpush.bf16.msra.mxu0 %v3767
        %3944 = vmatpush.bf16.msra.mxu0 %v3766
        %3945 = vmatpush.bf16.msra.mxu0 %v3765
        %3946 = vmatpush.bf16.msra.mxu0 %v3764
        %3947 = vmatmul.bf16.gmra.mxu0 %v3353
        %v3948 = vpop.f32.mrf.mxu0
        %v3949 = vadd.f32 %v3931, %v3948
        %v3950 = vpop.f32.mrf.mxu0
        %v3951 = vadd.f32 %v3933, %v3950
        %3952 = vmatmul.bf16.gmra.mxu0 %v3315
        %v3953 = vpop.f32.mrf.mxu0
        %v3954 = vadd.f32 %v3936, %v3953
        %v3955 = vpop.f32.mrf.mxu0
        %3956 = vdwg.mxu0
        %3957 = vmatpush.bf16.msra.mxu0 %v3779
        %3958 = vmatpush.bf16.msra.mxu0 %v3778
        %3959 = vmatpush.bf16.msra.mxu0 %v3777
        %3960 = vmatpush.bf16.msra.mxu0 %v3776
        %3961 = vmatpush.bf16.msra.mxu0 %v3775
        %3962 = vmatpush.bf16.msra.mxu0 %v3774
        %3963 = vmatpush.bf16.msra.mxu0 %v3773
        %3964 = vmatpush.bf16.msra.mxu0 %v3772
        %3965 = vmatmul.bf16.gmra.mxu0 %v3356
        %v3966 = vpop.f32.mrf.mxu0
        %v3967 = vadd.f32 %v3949, %v3966
        %v3968 = vpop.f32.mrf.mxu0
        %v3969 = vadd.f32 %v3951, %v3968
        %3970 = vmatmul.bf16.gmra.mxu0 %v3319
        %v3971 = vpop.f32.mrf.mxu0
        %v3972 = vadd.f32 %v3954, %v3971
        %v3973 = vpop.f32.mrf.mxu0
        %3974 = vdwg.mxu0
        %3975 = vmatpush.bf16.msra.mxu0 0
        %3976 = vmatpush.bf16.msra.mxu0 0
        %3977 = vmatpush.bf16.msra.mxu0 0
        %3978 = vmatpush.bf16.msra.mxu0 0
        %3979 = vmatpush.bf16.msra.mxu0 %v3783
        %3980 = vmatpush.bf16.msra.mxu0 %v3782
        %3981 = vmatpush.bf16.msra.mxu0 %v3781
        %3982 = vmatpush.bf16.msra.mxu0 %v3780
        %3983 = vmatmul.bf16.gmra.mxu0 %v3844
        %v3984 = vpop.f32.mrf.mxu0
        %v3985 = vadd.f32 %v3967, %v3984
        %v3986 = vpop.f32.mrf.mxu0
        %v3987 = vadd.f32 %v3969, %v3986
        %3988 = vmatmul.bf16.gmra.mxu0 %v3847
        %v3989 = vpop.f32.mrf.mxu0
        %v3990 = vadd.f32 %v3972, %v3989
        %v3991 = vpop.f32.mrf.mxu0
        %3992 = vdwg.mxu0
        %v3993 = vxor.u32 %v3985, 2147483648
        %v3994 = vxor.u32 %v3987, 2147483648
        %v3995 = vxor.u32 %v3990, 2147483648
        %v3996 = vmul.f32 %v3993, 1.442695
        %v3997 = vpow.pop %v3996
        %v3998 = vmul.f32 %v3994, 1.442695
        %v3999 = vpow.pop %v3998
        %v4000 = vmul.f32 %v3995, 1.442695
        %v4001 = vpow.pop %v4000
        %v4002 = vadd.f32 %v3997, 1.0
        %v4003 = vadd.f32 %v3999, 1.0
        %v4004 = vadd.f32 %v4001, 1.0
        %v4005 = vrcp.pop %v4002
        %v4006 = vmul.f32 %v4002, %v4005
        %v4007 = vsub.f32 1.0, %v4006
        %v4008 = vmul.f32 %v4005, %v4007
        %v4009 = vadd.f32 %v4005, %v4008
        %vm4010 = vweird.f32 %v4002
        %vm4011 = vweird.f32 %v4005
        %vm4012 = vmor %vm4010, %vm4011
        %v4013 = vsel %vm4012, %v4005, %v4009
        %v4014 = vand.u32 2147483647, %v4002
        %vm4015 = vcmp.eq.f32.partialorder %v4014, 8.507059e+37
        %v4016 = vand.u32 %v4002, 2147483648
        %v4017 = vor.u32 1.1754944e-38, %v4016
        %v4018 = vsel %vm4015, %v4017, %v4013
        %v4019 = vmul.f32 1.0, %v4018
        %v4020 = vrcp.pop %v4003
        %v4021 = vmul.f32 %v4003, %v4020
        %v4022 = vsub.f32 1.0, %v4021
        %v4023 = vmul.f32 %v4020, %v4022
        %v4024 = vadd.f32 %v4020, %v4023
        %vm4025 = vweird.f32 %v4003
        %vm4026 = vweird.f32 %v4020
        %vm4027 = vmor %vm4025, %vm4026
        %v4028 = vsel %vm4027, %v4020, %v4024
        %v4029 = vand.u32 2147483647, %v4003
        %vm4030 = vcmp.eq.f32.partialorder %v4029, 8.507059e+37
        %v4031 = vand.u32 %v4003, 2147483648
        %v4032 = vor.u32 1.1754944e-38, %v4031
        %v4033 = vsel %vm4030, %v4032, %v4028
        %v4034 = vmul.f32 1.0, %v4033
        %v4035 = vrcp.pop %v4004
        %v4036 = vmul.f32 %v4004, %v4035
        %v4037 = vsub.f32 1.0, %v4036
        %v4038 = vmul.f32 %v4035, %v4037
        %v4039 = vadd.f32 %v4035, %v4038
        %vm4040 = vweird.f32 %v4004
        %vm4041 = vweird.f32 %v4035
        %vm4042 = vmor %vm4040, %vm4041
        %v4043 = vsel %vm4042, %v4035, %v4039
        %v4044 = vand.u32 2147483647, %v4004
        %vm4045 = vcmp.eq.f32.partialorder %v4044, 8.507059e+37
        %v4046 = vand.u32 %v4004, 2147483648
        %v4047 = vor.u32 1.1754944e-38, %v4046
        %v4048 = vsel %vm4045, %v4047, %v4043
        %v4049 = vmul.f32 1.0, %v4048
        %4053 = vrot.lane.b32.xlu0 %v4019, 64
        %v4054 = vpop.permute.xlu0 %4053
        %4055 = vrot.lane.b32.xlu0 %v4034, 64
        %v4056 = vpop.permute.xlu0 %4055
        %4057 = vrot.lane.b32.xlu0 %v4049, 64
        %v4058 = vpop.permute.xlu0 %4057
        %v4062 = vmul.f32 %v3985, %v4054
        %v4063 = vmul.f32 %v3987, %v4056
        %v4064 = vmul.f32 %v3990, %v4058
        %v4065 = vsel %vm1557, %v4062, 0.0
        %v4066 = vsel %vm1557, %v4063, 0.0
        %v4067 = vadd.f32 %v4065, %v4066
        %v4068 = vsel %vm1557, %v4064, 0.0
        %v4069 = vadd.f32 %v4067, %v4068
        %v4070 = vmul.f32 %v4069, 0.33333334
        %v4071 = vpack.c.bf16 %v4070, %v4070
        %v4072 = vld [vmem:[%s5] sm:$0xf]
        %v4073 = vld [vmem:[%s5 + $0x4] sm:$0xf]
        %v4074 = vld [vmem:[%s5 + $0x8] sm:$0xf]
        %v4075 = vld [vmem:[%s5 + $0xc] sm:$0xf]
        %v4076 = vld [vmem:[%s5 + $0x10] sm:$0xf]
        %v4077 = vld [vmem:[%s5 + $0x14] sm:$0xf]
        %v4078 = vld [vmem:[%s5 + $0x18] sm:$0xf]
        %v4079 = vld [vmem:[%s5 + $0x1c] sm:$0xf]
        %v4080 = vld [vmem:[%s6] sm:$0x1]
        %v4082 = vperm.slane %v4080, 0
        %v4092 = vunpack.c.l.b16 %v4072
        %v4093 = vunpack.c.l.b16 %v4073
        %v4094 = vunpack.c.l.b16 %v4074
        %v4095 = vunpack.c.l.b16 %v4075
        %v4096 = vunpack.c.l.b16 %v4076
        %v4097 = vunpack.c.l.b16 %v4077
        %v4098 = vunpack.c.l.b16 %v4078
        %v4099 = vunpack.c.l.b16 %v4079
        %v4100 = vpack.c.b16 %v4093, %v4092
        %v4101 = vpack.c.b16 %v4095, %v4094
        %v4102 = vpack.c.b16 %v4097, %v4096
        %v4103 = vpack.c.b16 %v4099, %v4098
        %v4109 = vsel %vm1557, %v4071, 0
        %4111 = vmatpush.bf16.msra.mxu0 0
        %4112 = vmatpush.bf16.msra.mxu0 0
        %4113 = vmatpush.bf16.msra.mxu0 0
        %4114 = vmatpush.bf16.msra.mxu0 0
        %4115 = vmatpush.bf16.msra.mxu0 %v4103
        %4116 = vmatpush.bf16.msra.mxu0 %v4102
        %4117 = vmatpush.bf16.msra.mxu0 %v4101
        %4118 = vmatpush.bf16.msra.mxu0 %v4100
        %4119 = vmatmul.bf16.gmra.mxu0 %v4109
        %v4120 = vpop.f32.mrf.mxu0
        %v4121 = vadd.f32 %v4082, %v4120
        %v4122 = vpop.f32.mrf.mxu0
        %4123 = vdwg.mxu0
        %v4124 = vpack.c.bf16 %v4121, %v4121
        %v4125 = vld [vmem:[%s7] sm:$0xf]
        %v4126 = vld [vmem:[%s7 + $0x4] sm:$0xf]
        %v4127 = vld [vmem:[%s7 + $0x8] sm:$0xf]
        %v4128 = vld [vmem:[%s7 + $0xc] sm:$0xf]
        %v4129 = vld [vmem:[%s7 + $0x10] sm:$0xf]
        %v4130 = vld [vmem:[%s7 + $0x14] sm:$0xf]
        %v4131 = vld [vmem:[%s7 + $0x18] sm:$0xf]
        %v4132 = vld [vmem:[%s7 + $0x1c] sm:$0xf]
        %v4133 = vld [vmem:[%s7 + $0x20] sm:$0xf]
        %v4134 = vld [vmem:[%s7 + $0x24] sm:$0xf]
        %v4135 = vld [vmem:[%s7 + $0x28] sm:$0xf]
        %v4136 = vld [vmem:[%s7 + $0x2c] sm:$0xf]
        %v4137 = vld [vmem:[%s7 + $0x30] sm:$0xf]
        %v4138 = vld [vmem:[%s7 + $0x34] sm:$0xf]
        %v4139 = vld [vmem:[%s7 + $0x38] sm:$0xf]
        %v4140 = vld [vmem:[%s7 + $0x3c] sm:$0xf]
        %v4141 = vld [vmem:[%s8] sm:$0x1]
        %v4143 = vperm.slane %v4141, 0
        %v4161 = vunpack.c.l.b16 %v4125
        %v4162 = vunpack.c.l.b16 %v4126
        %v4163 = vunpack.c.l.b16 %v4127
        %v4164 = vunpack.c.l.b16 %v4128
        %v4165 = vunpack.c.l.b16 %v4129
        %v4166 = vunpack.c.l.b16 %v4130
        %v4167 = vunpack.c.l.b16 %v4131
        %v4168 = vunpack.c.l.b16 %v4132
        %v4169 = vunpack.c.l.b16 %v4133
        %v4170 = vunpack.c.l.b16 %v4134
        %v4171 = vunpack.c.l.b16 %v4135
        %v4172 = vunpack.c.l.b16 %v4136
        %v4173 = vunpack.c.l.b16 %v4137
        %v4174 = vunpack.c.l.b16 %v4138
        %v4175 = vunpack.c.l.b16 %v4139
        %v4176 = vunpack.c.l.b16 %v4140
        %v4177 = vpack.c.b16 %v4162, %v4161
        %v4178 = vpack.c.b16 %v4164, %v4163
        %v4179 = vpack.c.b16 %v4166, %v4165
        %v4180 = vpack.c.b16 %v4168, %v4167
        %v4181 = vpack.c.b16 %v4170, %v4169
        %v4182 = vpack.c.b16 %v4172, %v4171
        %v4183 = vpack.c.b16 %v4174, %v4173
        %v4184 = vpack.c.b16 %v4176, %v4175
        %4193 = vmatpush.bf16.msra.mxu0 %v4184
        %4194 = vmatpush.bf16.msra.mxu0 %v4183
        %4195 = vmatpush.bf16.msra.mxu0 %v4182
        %4196 = vmatpush.bf16.msra.mxu0 %v4181
        %4197 = vmatpush.bf16.msra.mxu0 %v4180
        %4198 = vmatpush.bf16.msra.mxu0 %v4179
        %4199 = vmatpush.bf16.msra.mxu0 %v4178
        %4200 = vmatpush.bf16.msra.mxu0 %v4177
        %4201 = vmatmul.bf16.gmra.mxu0 %v4124
        %v4202 = vpop.f32.mrf.mxu0
        %v4203 = vadd.f32 %v4143, %v4202
        %v4204 = vpop.f32.mrf.mxu0
        %4205 = vdwg.mxu0
        %4206 = vst [vmem:[%s328] sm:$0xff] %v4203
        %s4207 = sand.u32 %s225, 1
        %s4208 = scalar_lea.sflag [#allocation4], %s4207
        %s4209 = sand.u32 %s225, 1
        %s4210 = smul.addr %s4209, 8
        %s4211 = scalar_lea.vmem [#allocation3], %s4210
        // Predicated region
        $region57: #{tpu_custom_call.1} parent=55 // pred_check
          %p4212 = pneg %p235
        $region58: #{tpu_custom_call.1} parent=55 // pred_check_branch
          %4214 = sbr.rel (%p4212) target = $region60
        $region59: #{tpu_custom_call.1} parent=55 // pred_region
          %4216 = vsyncadd %s4208, 0
          %s4217 = smul.addr %s23, 8
          %s4218 = scalar_lea.hbm %s9, %s4217
          %s4220 = sshll.u32 %s4211, 4
          %s4221 = int_to_ptr.vmem [resolvable:$true] %s4220
          %s4222 = sshll.u32 %s4218, 4
          %s4223 = int_to_ptr.hbm [resolvable:$true] %s4222
          %4225 = dma.vmem_to_hbm [thread:$0]  %s4221, 128, %s4223, %s4208
        $region60: #{tpu_custom_call.1} parent=55 // pred_fallthru
          _
      $region56: #{tpu_custom_call.1} parent=5 // pred_fallthru
        _
      %p4226 = scmp.le.s32.totalorder 2, %s18
      // Predicated region
      $region61: #{tpu_custom_call.1} parent=5 // pred_check
        %p4227 = pneg %p4226
      $region62: #{tpu_custom_call.1} parent=5 // pred_check_branch
        %4229 = sbr.rel (%p4227) target = $region64
      $region63: #{tpu_custom_call.1} parent=5 // pred_region
        %s4230 = ssub.s32 %s18, 2
        // Predicated region
        $region65: #{tpu_custom_call.1} parent=63 // pred_check
          %p4231 = pneg %p241
        $region66: #{tpu_custom_call.1} parent=63 // pred_check_branch
          %4233 = sbr.rel (%p4231) target = $region68
        $region67: #{tpu_custom_call.1} parent=63 // pred_region
          %s4234 = sand.u32 %s226, 1
          %s4235 = scalar_lea.sflag [#allocation4], %s4234
          %s4236 = sand.u32 %s226, 1
          %s4237 = smul.addr %s4236, 8
          %s4238 = scalar_lea.vmem [#allocation3], %s4237
          %4240 = dma.done %s4235, 128
        $region68: #{tpu_custom_call.1} parent=63 // pred_fallthru
          _
      $region64: #{tpu_custom_call.1} parent=5 // pred_fallthru
        _
    $region6: #{tpu_custom_call.1} parent=1 // loop_footer
      %s22 = sadd.s32 1, %s18
    $region7: #{tpu_custom_call.1} parent=1 // loop_footer_branch
      %17 = sbr.rel target = $region3
    $region8: #{tpu_custom_call.1} parent=1 // loop_exit
      _
    %4241 = vsyncpa [#allocation4], 1
    %s4242 = scalar_lea.sflag [#allocation4], 1
    %4243 = vsyncpa %s4242, 1

</llo_original>
